<compile_context>
chip_gen: v6e
topology: v6e:2x2x1
jax: 0.10.0
libtpu: 0.0.40
codegen_flags: <defaults>
</compile_context>

<pallas_src>
import functools

import jax
import jax.numpy as jnp
from jax.experimental import pallas as pl
from jax.experimental.pallas import tpu as pltpu

# tanh-approx GELU (EUP) per the perf review; set False for exact-erf (nn.GELU default) numerics.
GELU_APPROXIMATE = True


def _layernorm(x, gamma, beta, eps=1e-5):
    mu = jnp.mean(x, axis=-1, keepdims=True)
    var = jnp.mean((x - mu) * (x - mu), axis=-1, keepdims=True)
    return (x - mu) * jax.lax.rsqrt(var + eps) * gamma + beta


def encoder_block_kernel(x_ref, pos_ref,
                         ln1_g_ref, ln1_b_ref, wqkv_ref, wproj_ref, bproj_ref,
                         ln2_g_ref, ln2_b_ref, wfc1_ref, bfc1_ref, wfc2_ref, bfc2_ref,
                         o_ref, *, num_heads, seq_len):
    # grid = (batch_blocks, depth); o_ref (the residual stream) is resident across depth.
    d = pl.program_id(1)

    @pl.when(d == 0)
    def _():
        o_ref[...] = x_ref[...]        # seed the resident activation with the encoder input

    rows, C = o_ref.shape              # rows = Bt * seq_len
    Bt = rows // seq_len
    hd = C // num_heads
    bf16 = jnp.bfloat16

    # pos is re-added every block, matching the reference module's forward.
    x = o_ref[...] + pos_ref[...]                          # (rows, C) f32

    # ---------------- attention branch (pre-norm) ----------------
    xn = _layernorm(x, ln1_g_ref[0], ln1_b_ref[0])         # f32 stats
    # One big QKV matmul amortizes the (C, 3C) weight over the whole batch block.
    # 1/sqrt(head_dim) is pre-folded into the q columns of wqkv (see wrapper).
    qkv = jnp.dot(xn.astype(bf16), wqkv_ref[0],
                  preferred_element_type=jnp.float32)      # (rows, 3C) f32

    av_blocks = []
    for b in range(Bt):                                    # Bt is small (<=4): static loop
        r0 = b * seq_len
        q = qkv[r0:r0 + seq_len, 0 * C:1 * C].astype(bf16)
        k = qkv[r0:r0 + seq_len, 1 * C:2 * C].astype(bf16)
        v = qkv[r0:r0 + seq_len, 2 * C:3 * C].astype(bf16)
        # Head-major stacks (H, N, hd): lane slices stacked along a new leading axis.
        qh = jnp.stack([q[:, h * hd:(h + 1) * hd] for h in range(num_heads)], axis=0)
        kh = jnp.stack([k[:, h * hd:(h + 1) * hd] for h in range(num_heads)], axis=0)
        vh = jnp.stack([v[:, h * hd:(h + 1) * hd] for h in range(num_heads)], axis=0)
        # Batched-over-heads q @ k^T and p @ v on the MXU (no per-head matmul loop).
        s = jnp.einsum('hnd,hmd->hnm', qh, kh,
                       preferred_element_type=jnp.float32)          # (H, N, N) f32
        s = s - jnp.max(s, axis=-1, keepdims=True)
        e = jnp.exp(s)                                              # EUP
        p = e * pl.reciprocal(jnp.sum(e, axis=-1, keepdims=True), approx=True)
        oh = jnp.einsum('hnm,hmd->hnd', p.astype(bf16), vh,
                        preferred_element_type=jnp.float32)         # (H, N, hd) f32
        oh = oh.astype(bf16)                                        # concat in bf16
        av_blocks.append(jnp.concatenate([oh[h] for h in range(num_heads)], axis=-1))
    av = jnp.concatenate(av_blocks, axis=0)                         # (rows, C) bf16

    attn_out = jnp.dot(av, wproj_ref[0],
                       preferred_element_type=jnp.float32) + bproj_ref[0]
    x = x + attn_out                                                # residual 1 (f32)

    # ---------------- MLP branch (pre-norm) ----------------
    xn2 = _layernorm(x, ln2_g_ref[0], ln2_b_ref[0])
    h1 = jnp.dot(xn2.astype(bf16), wfc1_ref[0],
                 preferred_element_type=jnp.float32) + bfc1_ref[0]
    h1 = jax.nn.gelu(h1, approximate=GELU_APPROXIMATE)              # f32 elementwise (v5e-safe)
    mlp_out = jnp.dot(h1.astype(bf16), wfc2_ref[0],                 # bf16 operand (perf fix)
                      preferred_element_type=jnp.float32) + bfc2_ref[0]

    o_ref[...] = x + mlp_out                                        # residual 2 (resident)


def _layer_spec(arr):
    """BlockSpec selecting the per-layer slice of a depth-stacked parameter."""
    zeros = (0,) * (arr.ndim - 1)
    return pl.BlockSpec((1,) + arr.shape[1:], lambda b, d: (d,) + zeros)


def _vmem_limit_bytes(Bt, N, C, H, num_heads):
    # Generation-aware cap (v7x has only 64 MiB per TC).
    try:
        cap = int(0.85 * pltpu.get_tpu_info().vmem_capacity_bytes)
    except Exception:
        cap = 96 * 2 ** 20
    w = 2 * 2 * (3 * C * C + C * C + 2 * C * H)        # double-buffered bf16 matmul weights
    small = 2 * 4 * (6 * C + H)                        # LN params + biases (f32, double-buffered)
    act = 4 * (Bt * N * (6 * C + H)                    # resident x/pos, xn, qkv, residuals, h1
               + 2 * num_heads * N * N                 # score + prob tiles, one sample at a time
               + 4 * N * C)                            # head-major q/k/v stacks + head outputs
    need = int(1.5 * (w + small + act))
    return min(cap, max(32 * 2 ** 20, need))


def transformer_encoder(x, pos, params, num_heads, batch_block=None):
    """forward: x = block(x + pos) for every block, all blocks in one pallas_call."""
    B, N, C = x.shape
    depth = params["wqkv"].shape[0]
    H = params["wfc1"].shape[-1]
    assert C % num_heads == 0, "embed dim must be divisible by num_heads"
    assert N % 8 == 0, "pad the token dim to a multiple of 8 before calling the kernel"
    hd = C // num_heads
    scale = hd ** (-0.5)

    # Batch blocking: amortize each layer's weight DMA over Bt batch elements.
    if batch_block is None:
        batch_block = 1
        for cand in (4, 3, 2):
            if B % cand == 0:
                batch_block = cand
                break
    Bt = batch_block
    assert B % Bt == 0

    # Fold 1/sqrt(head_dim) into the q columns of wqkv once (outside the kernel).
    p = dict(params)
    wqkv = params["wqkv"].astype(jnp.float32)
    p["wqkv"] = wqkv.at[:, :, :C].multiply(scale).astype(jnp.bfloat16)

    # Flatten activations to (B*N, C): lane-dense 2-D matmuls, no in-kernel reshapes.
    x2 = x.reshape(B * N, C)
    pos2 = jnp.broadcast_to(pos, (B, N, C)).reshape(B * N, C)

    act_spec = pl.BlockSpec((Bt * N, C), lambda b, d: (b, 0))
    order = ["ln1_g", "ln1_b", "wqkv", "wproj", "bproj",
             "ln2_g", "ln2_b", "wfc1", "bfc1", "wfc2", "bfc2"]
    in_specs = [act_spec, act_spec] + [_layer_spec(p[k]) for k in order]

    kern = functools.partial(encoder_block_kernel, num_heads=num_heads, seq_len=N)

    out2 = pl.pallas_call(
        kern,
        out_shape=jax.ShapeDtypeStruct((B * N, C), jnp.float32),
        grid=(B // Bt, depth),                 # depth innermost: layer d+1 weights prefetch
        in_specs=in_specs,                     # while layer d computes
        out_specs=act_spec,                    # resident activation accumulator over depth
        compiler_params=pltpu.CompilerParams(
            dimension_semantics=("parallel", "arbitrary"),
            vmem_limit_bytes=_vmem_limit_bytes(Bt, N, C, H, num_heads),
        ),
    )(x2, pos2, *[p[k] for k in order])
    return out2.reshape(B, N, C)


# ---------------- parameter init (deterministic, synthetic) ----------------
def init_params(key, depth, dim, num_heads, mlp_ratio=4.0):
    hidden = int(dim * mlp_ratio)
    ks = jax.random.split(key, 10)

    def w(k, shape):   # matmul weights stored bf16 (halves HBM/VMEM traffic)
        return (0.02 * jax.random.normal(k, (depth,) + shape, jnp.float32)).astype(jnp.bfloat16)

    def small(k, shape, s=0.1):   # LN params / biases in f32
        return s * jax.random.normal(k, (depth,) + shape, jnp.float32)

    return {
        "ln1_g": 1.0 + small(ks[0], (1, dim)),
        "ln1_b": small(ks[1], (1, dim)),
        "wqkv": w(ks[2], (dim, 3 * dim)),      # nn.Linear(dim, 3*dim, bias=False), stored (in, out)
        "wproj": w(ks[3], (dim, dim)),         # nn.Linear(dim, dim)
        "bproj": small(ks[4], (1, dim), 0.02),
        "ln2_g": 1.0 + small(ks[5], (1, dim)),
        "ln2_b": small(ks[6], (1, dim)),
        "wfc1": w(ks[7], (dim, hidden)),       # Mlp: Linear -> gelu -> Linear
        "bfc1": small(ks[8], (1, hidden), 0.02),
        "wfc2": w(ks[9], (hidden, dim)),
        "bfc2": jnp.zeros((depth, 1, dim), jnp.float32),
    }


# ---------------- pure-JAX f32 reference for validation ----------------
def reference_block(x, pos, p, num_heads):
    B, N, C = x.shape
    hd = C // num_heads
    scale = hd ** (-0.5)
    f32 = lambda a: a.astype(jnp.float32)
    x = x + pos
    xn = _layernorm(x, p["ln1_g"], p["ln1_b"])
    qkv = xn @ f32(p["wqkv"])                                    # (B, N, 3C)
    qkv = qkv.reshape(B, N, 3, num_heads, hd).transpose(2, 0, 3, 1, 4)
    q, k, v = qkv[0], qkv[1], qkv[2]                             # (B, h, N, hd)
    attn = jax.nn.softmax(jnp.einsum("bhnd,bhmd->bhnm", q, k) * scale, axis=-1)
    av = jnp.einsum("bhnm,bhmd->bhnd", attn, v)
    av = av.transpose(0, 2, 1, 3).reshape(B, N, C)
    x = x + (av @ f32(p["wproj"]) + p["bproj"])
    xn2 = _layernorm(x, p["ln2_g"], p["ln2_b"])
    h = jax.nn.gelu(xn2 @ f32(p["wfc1"]) + p["bfc1"], approximate=GELU_APPROXIMATE)
    x = x + (h @ f32(p["wfc2"]) + p["bfc2"])
    return x


def reference_encoder(x, pos, params, num_heads):
    depth = params["wqkv"].shape[0]
    for d in range(depth):
        p = {k: v[d] for k, v in params.items()}
        x = reference_block(x, pos, p, num_heads)
    return x


if __name__ == "__main__":
    # Small synthetic config: embed_dim=128 (lane-aligned), depth=2, heads=4 (hd=32),
    # mlp hidden=512, N=16, B=2 -> one batch block of Bt=2 per depth sweep.
    B, N, C = 2, 16, 128
    depth, num_heads = 2, 4

    key = jax.random.PRNGKey(0)
    kx, kp, kw = jax.random.split(key, 3)
    x = jax.random.normal(kx, (B, N, C), jnp.float32)
    pos = jax.random.normal(kp, (B, N, C), jnp.float32)
    params = init_params(kw, depth, C, num_heads)

    run = jax.jit(transformer_encoder, static_argnames=("num_heads", "batch_block"))
    out = jax.block_until_ready(run(x, pos, params, num_heads=num_heads))

    ref = reference_encoder(x, pos, params, num_heads)   # f32 matmuls, exact softmax
    assert out.shape == (B, N, C)
    max_err = float(jnp.max(jnp.abs(out - ref)))
    # tolerance covers bf16 matmul operands + EUP approx reciprocal in the kernel
    assert jnp.allclose(out, ref, atol=3e-2, rtol=3e-2), \
        f"mismatch vs reference (max abs err {max_err})"

    print("KERNEL_OK")
</pallas_src>

<mosaic_0001>
module attributes {stable_mosaic.version = 11 : i64} {
  func.func @encoder_block_kernel(%arg0: i32, %arg1: i32, %arg2: memref<32x128xf32, #tpu.memory_space<vmem>>, %arg3: memref<32x128xf32, #tpu.memory_space<vmem>>, %arg4: memref<1x1x128xf32, #tpu.memory_space<vmem>>, %arg5: memref<1x1x128xf32, #tpu.memory_space<vmem>>, %arg6: memref<1x128x384xbf16, #tpu.memory_space<vmem>>, %arg7: memref<1x128x128xbf16, #tpu.memory_space<vmem>>, %arg8: memref<1x1x128xf32, #tpu.memory_space<vmem>>, %arg9: memref<1x1x128xf32, #tpu.memory_space<vmem>>, %arg10: memref<1x1x128xf32, #tpu.memory_space<vmem>>, %arg11: memref<1x128x512xbf16, #tpu.memory_space<vmem>>, %arg12: memref<1x1x512xf32, #tpu.memory_space<vmem>>, %arg13: memref<1x512x128xbf16, #tpu.memory_space<vmem>>, %arg14: memref<1x1x128xf32, #tpu.memory_space<vmem>>, %arg15: memref<32x128xf32, #tpu.memory_space<vmem>>) attributes {dimension_semantics = [#tpu.dimension_semantics<parallel>, #tpu.dimension_semantics<arbitrary>], iteration_bounds = array<i64: 1, 2>, scalar_prefetch = 0 : i64, scratch_operands = 0 : i64, tpu.core_type = #tpu.core_type<tc>, window_params = [{transform_indices = @transform_0, window_bounds = array<i64: 32, 128>}, {transform_indices = @transform_1, window_bounds = array<i64: 32, 128>}, {transform_indices = @transform_2, window_bounds = array<i64: 1, 1, 128>}, {transform_indices = @transform_3, window_bounds = array<i64: 1, 1, 128>}, {transform_indices = @transform_4, window_bounds = array<i64: 1, 128, 384>}, {transform_indices = @transform_5, window_bounds = array<i64: 1, 128, 128>}, {transform_indices = @transform_6, window_bounds = array<i64: 1, 1, 128>}, {transform_indices = @transform_7, window_bounds = array<i64: 1, 1, 128>}, {transform_indices = @transform_8, window_bounds = array<i64: 1, 1, 128>}, {transform_indices = @transform_9, window_bounds = array<i64: 1, 128, 512>}, {transform_indices = @transform_10, window_bounds = array<i64: 1, 1, 512>}, {transform_indices = @transform_11, window_bounds = array<i64: 1, 512, 128>}, {transform_indices = @transform_12, window_bounds = array<i64: 1, 1, 128>}, {transform_indices = @transform_13, window_bounds = array<i64: 32, 128>}]} {
    %c0_i32 = arith.constant 0 : i32
    %0 = arith.cmpi eq, %arg1, %c0_i32 : i32
    %1 = arith.extui %0 : i1 to i32
    %c0_i32_0 = arith.constant 0 : i32
    %2 = arith.cmpi ne, %1, %c0_i32_0 : i32
    scf.if %2 {
      %c0_64 = arith.constant 0 : index
      %c0_65 = arith.constant 0 : index
      %218 = vector.load %arg2[%c0_64, %c0_65] : memref<32x128xf32, #tpu.memory_space<vmem>>, vector<32x128xf32>
      %c0_66 = arith.constant 0 : index
      %c0_67 = arith.constant 0 : index
      %219 = vector.load %arg15[%c0_66, %c0_67] : memref<32x128xf32, #tpu.memory_space<vmem>>, vector<32x128xf32>
      tpu.vector_store %arg15[%c0_66, %c0_67], %218 {strides = array<i32>} : memref<32x128xf32, #tpu.memory_space<vmem>>, vector<32x128xf32>,
    } else {
    }
    %c0 = arith.constant 0 : index
    %c0_1 = arith.constant 0 : index
    %3 = vector.load %arg15[%c0, %c0_1] : memref<32x128xf32, #tpu.memory_space<vmem>>, vector<32x128xf32>
    %c0_2 = arith.constant 0 : index
    %c0_3 = arith.constant 0 : index
    %4 = vector.load %arg3[%c0_2, %c0_3] : memref<32x128xf32, #tpu.memory_space<vmem>>, vector<32x128xf32>
    %5 = arith.addf %3, %4 : vector<32x128xf32>
    %c0_4 = arith.constant 0 : index
    %c0_5 = arith.constant 0 : index
    %c0_6 = arith.constant 0 : index
    %6 = vector.load %arg4[%c0_4, %c0_5, %c0_6] : memref<1x1x128xf32, #tpu.memory_space<vmem>>, vector<1x1x128xf32>
    %7 = vector.shape_cast %6 : vector<1x1x128xf32> to vector<1x128xf32>
    %c0_7 = arith.constant 0 : index
    %c0_8 = arith.constant 0 : index
    %c0_9 = arith.constant 0 : index
    %8 = vector.load %arg5[%c0_7, %c0_8, %c0_9] : memref<1x1x128xf32, #tpu.memory_space<vmem>>, vector<1x1x128xf32>
    %9 = vector.shape_cast %8 : vector<1x1x128xf32> to vector<1x128xf32>
    %cst = arith.constant dense<0.000000e+00> : vector<32xf32>
    %10 = vector.multi_reduction <add>, %5, %cst [1] : vector<32x128xf32> to vector<32xf32>
    %11 = vector.shape_cast %10 : vector<32xf32> to vector<32x1xf32>
    %cst_10 = arith.constant 1.280000e+02 : f32
    %12 = vector.broadcast %cst_10 : f32 to vector<32x1xf32>
    %13 = arith.divf %11, %12 : vector<32x1xf32>
    %14 = vector.broadcast %13 : vector<32x1xf32> to vector<32x128xf32>
    %15 = arith.subf %5, %14 : vector<32x128xf32>
    %16 = vector.broadcast %13 : vector<32x1xf32> to vector<32x128xf32>
    %17 = arith.subf %5, %16 : vector<32x128xf32>
    %18 = arith.mulf %15, %17 : vector<32x128xf32>
    %cst_11 = arith.constant dense<0.000000e+00> : vector<32xf32>
    %19 = vector.multi_reduction <add>, %18, %cst_11 [1] : vector<32x128xf32> to vector<32xf32>
    %20 = vector.shape_cast %19 : vector<32xf32> to vector<32x1xf32>
    %cst_12 = arith.constant 1.280000e+02 : f32
    %21 = vector.broadcast %cst_12 : f32 to vector<32x1xf32>
    %22 = arith.divf %20, %21 : vector<32x1xf32>
    %23 = vector.broadcast %13 : vector<32x1xf32> to vector<32x128xf32>
    %24 = arith.subf %5, %23 : vector<32x128xf32>
    %cst_13 = arith.constant 9.99999974E-6 : f32
    %25 = vector.broadcast %cst_13 : f32 to vector<32x1xf32>
    %26 = arith.addf %22, %25 : vector<32x1xf32>
    %27 = math.rsqrt %26 : vector<32x1xf32>
    %28 = vector.broadcast %27 : vector<32x1xf32> to vector<32x128xf32>
    %29 = arith.mulf %24, %28 : vector<32x128xf32>
    %30 = vector.broadcast %7 : vector<1x128xf32> to vector<32x128xf32>
    %31 = arith.mulf %29, %30 : vector<32x128xf32>
    %32 = vector.broadcast %9 : vector<1x128xf32> to vector<32x128xf32>
    %33 = arith.addf %31, %32 : vector<32x128xf32>
    %34 = arith.truncf %33 : vector<32x128xf32> to vector<32x128xbf16>
    %c0_14 = arith.constant 0 : index
    %c0_15 = arith.constant 0 : index
    %c0_16 = arith.constant 0 : index
    %35 = vector.load %arg6[%c0_14, %c0_15, %c0_16] : memref<1x128x384xbf16, #tpu.memory_space<vmem>>, vector<1x128x384xbf16>
    %36 = vector.shape_cast %35 : vector<1x128x384xbf16> to vector<128x384xbf16>
    %cst_17 = arith.constant dense<0.000000e+00> : vector<32x384xf32>
    %37 = tpu.matmul %34, %36, %cst_17 {dimension_numbers = #tpu.dot_dimension_numbers<[1], [0], [0], [1], [0, 0, 1, 1], [], []>} : vector<32x128xbf16>, vector<128x384xbf16>, vector<32x384xf32> -> vector<32x384xf32>
    %38 = vector.extract_strided_slice %37 {offsets = [0, 0], sizes = [16, 128], strides = [1, 1]} : vector<32x384xf32> to vector<16x128xf32>
    %39 = arith.truncf %38 : vector<16x128xf32> to vector<16x128xbf16>
    %40 = vector.extract_strided_slice %37 {offsets = [0, 128], sizes = [16, 128], strides = [1, 1]} : vector<32x384xf32> to vector<16x128xf32>
    %41 = arith.truncf %40 : vector<16x128xf32> to vector<16x128xbf16>
    %42 = vector.extract_strided_slice %37 {offsets = [0, 256], sizes = [16, 128], strides = [1, 1]} : vector<32x384xf32> to vector<16x128xf32>
    %43 = arith.truncf %42 : vector<16x128xf32> to vector<16x128xbf16>
    %44 = vector.extract_strided_slice %39 {offsets = [0, 0], sizes = [16, 32], strides = [1, 1]} : vector<16x128xbf16> to vector<16x32xbf16>
    %45 = vector.extract_strided_slice %39 {offsets = [0, 32], sizes = [16, 32], strides = [1, 1]} : vector<16x128xbf16> to vector<16x32xbf16>
    %46 = vector.extract_strided_slice %39 {offsets = [0, 64], sizes = [16, 32], strides = [1, 1]} : vector<16x128xbf16> to vector<16x32xbf16>
    %47 = vector.extract_strided_slice %39 {offsets = [0, 96], sizes = [16, 32], strides = [1, 1]} : vector<16x128xbf16> to vector<16x32xbf16>
    %48 = vector.shape_cast %44 : vector<16x32xbf16> to vector<1x16x32xbf16>
    %49 = vector.shape_cast %45 : vector<16x32xbf16> to vector<1x16x32xbf16>
    %50 = vector.shape_cast %46 : vector<16x32xbf16> to vector<1x16x32xbf16>
    %51 = vector.shape_cast %47 : vector<16x32xbf16> to vector<1x16x32xbf16>
    %52 = tpu.concatenate %48, %49, %50, %51 in 0 : vector<1x16x32xbf16>, vector<1x16x32xbf16>, vector<1x16x32xbf16>, vector<1x16x32xbf16> -> vector<4x16x32xbf16>
    %53 = vector.extract_strided_slice %41 {offsets = [0, 0], sizes = [16, 32], strides = [1, 1]} : vector<16x128xbf16> to vector<16x32xbf16>
    %54 = vector.extract_strided_slice %41 {offsets = [0, 32], sizes = [16, 32], strides = [1, 1]} : vector<16x128xbf16> to vector<16x32xbf16>
    %55 = vector.extract_strided_slice %41 {offsets = [0, 64], sizes = [16, 32], strides = [1, 1]} : vector<16x128xbf16> to vector<16x32xbf16>
    %56 = vector.extract_strided_slice %41 {offsets = [0, 96], sizes = [16, 32], strides = [1, 1]} : vector<16x128xbf16> to vector<16x32xbf16>
    %57 = vector.shape_cast %53 : vector<16x32xbf16> to vector<1x16x32xbf16>
    %58 = vector.shape_cast %54 : vector<16x32xbf16> to vector<1x16x32xbf16>
    %59 = vector.shape_cast %55 : vector<16x32xbf16> to vector<1x16x32xbf16>
    %60 = vector.shape_cast %56 : vector<16x32xbf16> to vector<1x16x32xbf16>
    %61 = tpu.concatenate %57, %58, %59, %60 in 0 : vector<1x16x32xbf16>, vector<1x16x32xbf16>, vector<1x16x32xbf16>, vector<1x16x32xbf16> -> vector<4x16x32xbf16>
    %62 = vector.extract_strided_slice %43 {offsets = [0, 0], sizes = [16, 32], strides = [1, 1]} : vector<16x128xbf16> to vector<16x32xbf16>
    %63 = vector.extract_strided_slice %43 {offsets = [0, 32], sizes = [16, 32], strides = [1, 1]} : vector<16x128xbf16> to vector<16x32xbf16>
    %64 = vector.extract_strided_slice %43 {offsets = [0, 64], sizes = [16, 32], strides = [1, 1]} : vector<16x128xbf16> to vector<16x32xbf16>
    %65 = vector.extract_strided_slice %43 {offsets = [0, 96], sizes = [16, 32], strides = [1, 1]} : vector<16x128xbf16> to vector<16x32xbf16>
    %66 = vector.shape_cast %62 : vector<16x32xbf16> to vector<1x16x32xbf16>
    %67 = vector.shape_cast %63 : vector<16x32xbf16> to vector<1x16x32xbf16>
    %68 = vector.shape_cast %64 : vector<16x32xbf16> to vector<1x16x32xbf16>
    %69 = vector.shape_cast %65 : vector<16x32xbf16> to vector<1x16x32xbf16>
    %70 = tpu.concatenate %66, %67, %68, %69 in 0 : vector<1x16x32xbf16>, vector<1x16x32xbf16>, vector<1x16x32xbf16>, vector<1x16x32xbf16> -> vector<4x16x32xbf16>
    "tpu.trace_start"() <{level = 10 : i32, message = "hnd,hmd->hnm"}> : () -> ()
    %cst_18 = arith.constant dense<0.000000e+00> : vector<4x16x16xf32>
    %71 = tpu.matmul %52, %61, %cst_18 {dimension_numbers = #tpu.dot_dimension_numbers<[2], [2], [1], [1], [0, 0, 0, 1, 1, 1], [0], [0]>} : vector<4x16x32xbf16>, vector<4x16x32xbf16>, vector<4x16x16xf32> -> vector<4x16x16xf32>
    "tpu.trace_stop"() : () -> ()
    %cst_19 = arith.constant dense<0xFF800000> : vector<4x16xf32>
    %72 = vector.multi_reduction <maximumf>, %71, %cst_19 [2] : vector<4x16x16xf32> to vector<4x16xf32>
    %73 = vector.shape_cast %72 : vector<4x16xf32> to vector<4x16x1xf32>
    %74 = vector.broadcast %73 : vector<4x16x1xf32> to vector<4x16x16xf32>
    %75 = arith.subf %71, %74 : vector<4x16x16xf32>
    %76 = math.exp %75 : vector<4x16x16xf32>
    %cst_20 = arith.constant dense<0.000000e+00> : vector<4x16xf32>
    %77 = vector.multi_reduction <add>, %76, %cst_20 [2] : vector<4x16x16xf32> to vector<4x16xf32>
    %78 = vector.shape_cast %77 : vector<4x16xf32> to vector<4x16x1xf32>
    %79 = tpu.reciprocal %78 {approx = true} : vector<4x16x1xf32> -> vector<4x16x1xf32>
    %80 = vector.broadcast %79 : vector<4x16x1xf32> to vector<4x16x16xf32>
    %81 = arith.mulf %76, %80 : vector<4x16x16xf32>
    %82 = arith.truncf %81 : vector<4x16x16xf32> to vector<4x16x16xbf16>
    "tpu.trace_start"() <{level = 10 : i32, message = "hnm,hmd->hnd"}> : () -> ()
    %cst_21 = arith.constant dense<0.000000e+00> : vector<4x16x32xf32>
    %83 = tpu.matmul %82, %70, %cst_21 {dimension_numbers = #tpu.dot_dimension_numbers<[2], [1], [1], [2], [0, 0, 0, 1, 1, 2], [0], [0]>} : vector<4x16x16xbf16>, vector<4x16x32xbf16>, vector<4x16x32xf32> -> vector<4x16x32xf32>
    "tpu.trace_stop"() : () -> ()
    %84 = arith.truncf %83 : vector<4x16x32xf32> to vector<4x16x32xbf16>
    %85 = vector.extract_strided_slice %84 {offsets = [0, 0, 0], sizes = [1, 16, 32], strides = [1, 1, 1]} : vector<4x16x32xbf16> to vector<1x16x32xbf16>
    %86 = vector.shape_cast %85 : vector<1x16x32xbf16> to vector<16x32xbf16>
    %87 = vector.extract_strided_slice %84 {offsets = [1, 0, 0], sizes = [1, 16, 32], strides = [1, 1, 1]} : vector<4x16x32xbf16> to vector<1x16x32xbf16>
    %88 = vector.shape_cast %87 : vector<1x16x32xbf16> to vector<16x32xbf16>
    %89 = vector.extract_strided_slice %84 {offsets = [2, 0, 0], sizes = [1, 16, 32], strides = [1, 1, 1]} : vector<4x16x32xbf16> to vector<1x16x32xbf16>
    %90 = vector.shape_cast %89 : vector<1x16x32xbf16> to vector<16x32xbf16>
    %91 = vector.extract_strided_slice %84 {offsets = [3, 0, 0], sizes = [1, 16, 32], strides = [1, 1, 1]} : vector<4x16x32xbf16> to vector<1x16x32xbf16>
    %92 = vector.shape_cast %91 : vector<1x16x32xbf16> to vector<16x32xbf16>
    %93 = tpu.concatenate %86, %88, %90, %92 in 1 : vector<16x32xbf16>, vector<16x32xbf16>, vector<16x32xbf16>, vector<16x32xbf16> -> vector<16x128xbf16>
    %94 = vector.extract_strided_slice %37 {offsets = [16, 0], sizes = [16, 128], strides = [1, 1]} : vector<32x384xf32> to vector<16x128xf32>
    %95 = arith.truncf %94 : vector<16x128xf32> to vector<16x128xbf16>
    %96 = vector.extract_strided_slice %37 {offsets = [16, 128], sizes = [16, 128], strides = [1, 1]} : vector<32x384xf32> to vector<16x128xf32>
    %97 = arith.truncf %96 : vector<16x128xf32> to vector<16x128xbf16>
    %98 = vector.extract_strided_slice %37 {offsets = [16, 256], sizes = [16, 128], strides = [1, 1]} : vector<32x384xf32> to vector<16x128xf32>
    %99 = arith.truncf %98 : vector<16x128xf32> to vector<16x128xbf16>
    %100 = vector.extract_strided_slice %95 {offsets = [0, 0], sizes = [16, 32], strides = [1, 1]} : vector<16x128xbf16> to vector<16x32xbf16>
    %101 = vector.extract_strided_slice %95 {offsets = [0, 32], sizes = [16, 32], strides = [1, 1]} : vector<16x128xbf16> to vector<16x32xbf16>
    %102 = vector.extract_strided_slice %95 {offsets = [0, 64], sizes = [16, 32], strides = [1, 1]} : vector<16x128xbf16> to vector<16x32xbf16>
    %103 = vector.extract_strided_slice %95 {offsets = [0, 96], sizes = [16, 32], strides = [1, 1]} : vector<16x128xbf16> to vector<16x32xbf16>
    %104 = vector.shape_cast %100 : vector<16x32xbf16> to vector<1x16x32xbf16>
    %105 = vector.shape_cast %101 : vector<16x32xbf16> to vector<1x16x32xbf16>
    %106 = vector.shape_cast %102 : vector<16x32xbf16> to vector<1x16x32xbf16>
    %107 = vector.shape_cast %103 : vector<16x32xbf16> to vector<1x16x32xbf16>
    %108 = tpu.concatenate %104, %105, %106, %107 in 0 : vector<1x16x32xbf16>, vector<1x16x32xbf16>, vector<1x16x32xbf16>, vector<1x16x32xbf16> -> vector<4x16x32xbf16>
    %109 = vector.extract_strided_slice %97 {offsets = [0, 0], sizes = [16, 32], strides = [1, 1]} : vector<16x128xbf16> to vector<16x32xbf16>
    %110 = vector.extract_strided_slice %97 {offsets = [0, 32], sizes = [16, 32], strides = [1, 1]} : vector<16x128xbf16> to vector<16x32xbf16>
    %111 = vector.extract_strided_slice %97 {offsets = [0, 64], sizes = [16, 32], strides = [1, 1]} : vector<16x128xbf16> to vector<16x32xbf16>
    %112 = vector.extract_strided_slice %97 {offsets = [0, 96], sizes = [16, 32], strides = [1, 1]} : vector<16x128xbf16> to vector<16x32xbf16>
    %113 = vector.shape_cast %109 : vector<16x32xbf16> to vector<1x16x32xbf16>
    %114 = vector.shape_cast %110 : vector<16x32xbf16> to vector<1x16x32xbf16>
    %115 = vector.shape_cast %111 : vector<16x32xbf16> to vector<1x16x32xbf16>
    %116 = vector.shape_cast %112 : vector<16x32xbf16> to vector<1x16x32xbf16>
    %117 = tpu.concatenate %113, %114, %115, %116 in 0 : vector<1x16x32xbf16>, vector<1x16x32xbf16>, vector<1x16x32xbf16>, vector<1x16x32xbf16> -> vector<4x16x32xbf16>
    %118 = vector.extract_strided_slice %99 {offsets = [0, 0], sizes = [16, 32], strides = [1, 1]} : vector<16x128xbf16> to vector<16x32xbf16>
    %119 = vector.extract_strided_slice %99 {offsets = [0, 32], sizes = [16, 32], strides = [1, 1]} : vector<16x128xbf16> to vector<16x32xbf16>
    %120 = vector.extract_strided_slice %99 {offsets = [0, 64], sizes = [16, 32], strides = [1, 1]} : vector<16x128xbf16> to vector<16x32xbf16>
    %121 = vector.extract_strided_slice %99 {offsets = [0, 96], sizes = [16, 32], strides = [1, 1]} : vector<16x128xbf16> to vector<16x32xbf16>
    %122 = vector.shape_cast %118 : vector<16x32xbf16> to vector<1x16x32xbf16>
    %123 = vector.shape_cast %119 : vector<16x32xbf16> to vector<1x16x32xbf16>
    %124 = vector.shape_cast %120 : vector<16x32xbf16> to vector<1x16x32xbf16>
    %125 = vector.shape_cast %121 : vector<16x32xbf16> to vector<1x16x32xbf16>
    %126 = tpu.concatenate %122, %123, %124, %125 in 0 : vector<1x16x32xbf16>, vector<1x16x32xbf16>, vector<1x16x32xbf16>, vector<1x16x32xbf16> -> vector<4x16x32xbf16>
    "tpu.trace_start"() <{level = 10 : i32, message = "hnd,hmd->hnm"}> : () -> ()
    %cst_22 = arith.constant dense<0.000000e+00> : vector<4x16x16xf32>
    %127 = tpu.matmul %108, %117, %cst_22 {dimension_numbers = #tpu.dot_dimension_numbers<[2], [2], [1], [1], [0, 0, 0, 1, 1, 1], [0], [0]>} : vector<4x16x32xbf16>, vector<4x16x32xbf16>, vector<4x16x16xf32> -> vector<4x16x16xf32>
    "tpu.trace_stop"() : () -> ()
    %cst_23 = arith.constant dense<0xFF800000> : vector<4x16xf32>
    %128 = vector.multi_reduction <maximumf>, %127, %cst_23 [2] : vector<4x16x16xf32> to vector<4x16xf32>
    %129 = vector.shape_cast %128 : vector<4x16xf32> to vector<4x16x1xf32>
    %130 = vector.broadcast %129 : vector<4x16x1xf32> to vector<4x16x16xf32>
    %131 = arith.subf %127, %130 : vector<4x16x16xf32>
    %132 = math.exp %131 : vector<4x16x16xf32>
    %cst_24 = arith.constant dense<0.000000e+00> : vector<4x16xf32>
    %133 = vector.multi_reduction <add>, %132, %cst_24 [2] : vector<4x16x16xf32> to vector<4x16xf32>
    %134 = vector.shape_cast %133 : vector<4x16xf32> to vector<4x16x1xf32>
    %135 = tpu.reciprocal %134 {approx = true} : vector<4x16x1xf32> -> vector<4x16x1xf32>
    %136 = vector.broadcast %135 : vector<4x16x1xf32> to vector<4x16x16xf32>
    %137 = arith.mulf %132, %136 : vector<4x16x16xf32>
    %138 = arith.truncf %137 : vector<4x16x16xf32> to vector<4x16x16xbf16>
    "tpu.trace_start"() <{level = 10 : i32, message = "hnm,hmd->hnd"}> : () -> ()
    %cst_25 = arith.constant dense<0.000000e+00> : vector<4x16x32xf32>
    %139 = tpu.matmul %138, %126, %cst_25 {dimension_numbers = #tpu.dot_dimension_numbers<[2], [1], [1], [2], [0, 0, 0, 1, 1, 2], [0], [0]>} : vector<4x16x16xbf16>, vector<4x16x32xbf16>, vector<4x16x32xf32> -> vector<4x16x32xf32>
    "tpu.trace_stop"() : () -> ()
    %140 = arith.truncf %139 : vector<4x16x32xf32> to vector<4x16x32xbf16>
    %141 = vector.extract_strided_slice %140 {offsets = [0, 0, 0], sizes = [1, 16, 32], strides = [1, 1, 1]} : vector<4x16x32xbf16> to vector<1x16x32xbf16>
    %142 = vector.shape_cast %141 : vector<1x16x32xbf16> to vector<16x32xbf16>
    %143 = vector.extract_strided_slice %140 {offsets = [1, 0, 0], sizes = [1, 16, 32], strides = [1, 1, 1]} : vector<4x16x32xbf16> to vector<1x16x32xbf16>
    %144 = vector.shape_cast %143 : vector<1x16x32xbf16> to vector<16x32xbf16>
    %145 = vector.extract_strided_slice %140 {offsets = [2, 0, 0], sizes = [1, 16, 32], strides = [1, 1, 1]} : vector<4x16x32xbf16> to vector<1x16x32xbf16>
    %146 = vector.shape_cast %145 : vector<1x16x32xbf16> to vector<16x32xbf16>
    %147 = vector.extract_strided_slice %140 {offsets = [3, 0, 0], sizes = [1, 16, 32], strides = [1, 1, 1]} : vector<4x16x32xbf16> to vector<1x16x32xbf16>
    %148 = vector.shape_cast %147 : vector<1x16x32xbf16> to vector<16x32xbf16>
    %149 = tpu.concatenate %142, %144, %146, %148 in 1 : vector<16x32xbf16>, vector<16x32xbf16>, vector<16x32xbf16>, vector<16x32xbf16> -> vector<16x128xbf16>
    %150 = tpu.concatenate %93, %149 in 0 : vector<16x128xbf16>, vector<16x128xbf16> -> vector<32x128xbf16>
    %c0_26 = arith.constant 0 : index
    %c0_27 = arith.constant 0 : index
    %c0_28 = arith.constant 0 : index
    %151 = vector.load %arg7[%c0_26, %c0_27, %c0_28] : memref<1x128x128xbf16, #tpu.memory_space<vmem>>, vector<1x128x128xbf16>
    %152 = vector.shape_cast %151 : vector<1x128x128xbf16> to vector<128x128xbf16>
    %cst_29 = arith.constant dense<0.000000e+00> : vector<32x128xf32>
    %153 = tpu.matmul %150, %152, %cst_29 {dimension_numbers = #tpu.dot_dimension_numbers<[1], [0], [0], [1], [0, 0, 1, 1], [], []>} : vector<32x128xbf16>, vector<128x128xbf16>, vector<32x128xf32> -> vector<32x128xf32>
    %c0_30 = arith.constant 0 : index
    %c0_31 = arith.constant 0 : index
    %c0_32 = arith.constant 0 : index
    %154 = vector.load %arg8[%c0_30, %c0_31, %c0_32] : memref<1x1x128xf32, #tpu.memory_space<vmem>>, vector<1x1x128xf32>
    %155 = vector.shape_cast %154 : vector<1x1x128xf32> to vector<1x128xf32>
    %156 = vector.broadcast %155 : vector<1x128xf32> to vector<32x128xf32>
    %157 = arith.addf %153, %156 : vector<32x128xf32>
    %158 = arith.addf %5, %157 : vector<32x128xf32>
    %c0_33 = arith.constant 0 : index
    %c0_34 = arith.constant 0 : index
    %c0_35 = arith.constant 0 : index
    %159 = vector.load %arg9[%c0_33, %c0_34, %c0_35] : memref<1x1x128xf32, #tpu.memory_space<vmem>>, vector<1x1x128xf32>
    %160 = vector.shape_cast %159 : vector<1x1x128xf32> to vector<1x128xf32>
    %c0_36 = arith.constant 0 : index
    %c0_37 = arith.constant 0 : index
    %c0_38 = arith.constant 0 : index
    %161 = vector.load %arg10[%c0_36, %c0_37, %c0_38] : memref<1x1x128xf32, #tpu.memory_space<vmem>>, vector<1x1x128xf32>
    %162 = vector.shape_cast %161 : vector<1x1x128xf32> to vector<1x128xf32>
    %cst_39 = arith.constant dense<0.000000e+00> : vector<32xf32>
    %163 = vector.multi_reduction <add>, %158, %cst_39 [1] : vector<32x128xf32> to vector<32xf32>
    %164 = vector.shape_cast %163 : vector<32xf32> to vector<32x1xf32>
    %cst_40 = arith.constant 1.280000e+02 : f32
    %165 = vector.broadcast %cst_40 : f32 to vector<32x1xf32>
    %166 = arith.divf %164, %165 : vector<32x1xf32>
    %167 = vector.broadcast %166 : vector<32x1xf32> to vector<32x128xf32>
    %168 = arith.subf %158, %167 : vector<32x128xf32>
    %169 = vector.broadcast %166 : vector<32x1xf32> to vector<32x128xf32>
    %170 = arith.subf %158, %169 : vector<32x128xf32>
    %171 = arith.mulf %168, %170 : vector<32x128xf32>
    %cst_41 = arith.constant dense<0.000000e+00> : vector<32xf32>
    %172 = vector.multi_reduction <add>, %171, %cst_41 [1] : vector<32x128xf32> to vector<32xf32>
    %173 = vector.shape_cast %172 : vector<32xf32> to vector<32x1xf32>
    %cst_42 = arith.constant 1.280000e+02 : f32
    %174 = vector.broadcast %cst_42 : f32 to vector<32x1xf32>
    %175 = arith.divf %173, %174 : vector<32x1xf32>
    %176 = vector.broadcast %166 : vector<32x1xf32> to vector<32x128xf32>
    %177 = arith.subf %158, %176 : vector<32x128xf32>
    %cst_43 = arith.constant 9.99999974E-6 : f32
    %178 = vector.broadcast %cst_43 : f32 to vector<32x1xf32>
    %179 = arith.addf %175, %178 : vector<32x1xf32>
    %180 = math.rsqrt %179 : vector<32x1xf32>
    %181 = vector.broadcast %180 : vector<32x1xf32> to vector<32x128xf32>
    %182 = arith.mulf %177, %181 : vector<32x128xf32>
    %183 = vector.broadcast %160 : vector<1x128xf32> to vector<32x128xf32>
    %184 = arith.mulf %182, %183 : vector<32x128xf32>
    %185 = vector.broadcast %162 : vector<1x128xf32> to vector<32x128xf32>
    %186 = arith.addf %184, %185 : vector<32x128xf32>
    %187 = arith.truncf %186 : vector<32x128xf32> to vector<32x128xbf16>
    %c0_44 = arith.constant 0 : index
    %c0_45 = arith.constant 0 : index
    %c0_46 = arith.constant 0 : index
    %188 = vector.load %arg11[%c0_44, %c0_45, %c0_46] : memref<1x128x512xbf16, #tpu.memory_space<vmem>>, vector<1x128x512xbf16>
    %189 = vector.shape_cast %188 : vector<1x128x512xbf16> to vector<128x512xbf16>
    %cst_47 = arith.constant dense<0.000000e+00> : vector<32x512xf32>
    %190 = tpu.matmul %187, %189, %cst_47 {dimension_numbers = #tpu.dot_dimension_numbers<[1], [0], [0], [1], [0, 0, 1, 1], [], []>} : vector<32x128xbf16>, vector<128x512xbf16>, vector<32x512xf32> -> vector<32x512xf32>
    %c0_48 = arith.constant 0 : index
    %c0_49 = arith.constant 0 : index
    %c0_50 = arith.constant 0 : index
    %191 = vector.load %arg12[%c0_48, %c0_49, %c0_50] : memref<1x1x512xf32, #tpu.memory_space<vmem>>, vector<1x1x512xf32>
    %192 = vector.shape_cast %191 : vector<1x1x512xf32> to vector<1x512xf32>
    %193 = vector.broadcast %192 : vector<1x512xf32> to vector<32x512xf32>
    %194 = arith.addf %190, %193 : vector<32x512xf32>
    %195 = arith.mulf %194, %194 : vector<32x512xf32>
    %196 = arith.mulf %194, %195 : vector<32x512xf32>
    %cst_51 = arith.constant 4.471500e-02 : f32
    %197 = vector.broadcast %cst_51 : f32 to vector<32x512xf32>
    %198 = arith.mulf %197, %196 : vector<32x512xf32>
    %199 = arith.addf %194, %198 : vector<32x512xf32>
    %cst_52 = arith.constant 0.797884583 : f32
    %200 = vector.broadcast %cst_52 : f32 to vector<32x512xf32>
    %201 = arith.mulf %200, %199 : vector<32x512xf32>
    %202 = math.tanh %201 : vector<32x512xf32>
    %cst_53 = arith.constant 1.000000e+00 : f32
    %203 = vector.broadcast %cst_53 : f32 to vector<32x512xf32>
    %204 = arith.addf %203, %202 : vector<32x512xf32>
    %cst_54 = arith.constant 5.000000e-01 : f32
    %205 = vector.broadcast %cst_54 : f32 to vector<32x512xf32>
    %206 = arith.mulf %205, %204 : vector<32x512xf32>
    %207 = arith.mulf %194, %206 : vector<32x512xf32>
    %208 = arith.truncf %207 : vector<32x512xf32> to vector<32x512xbf16>
    %c0_55 = arith.constant 0 : index
    %c0_56 = arith.constant 0 : index
    %c0_57 = arith.constant 0 : index
    %209 = vector.load %arg13[%c0_55, %c0_56, %c0_57] : memref<1x512x128xbf16, #tpu.memory_space<vmem>>, vector<1x512x128xbf16>
    %210 = vector.shape_cast %209 : vector<1x512x128xbf16> to vector<512x128xbf16>
    %cst_58 = arith.constant dense<0.000000e+00> : vector<32x128xf32>
    %211 = tpu.matmul %208, %210, %cst_58 {dimension_numbers = #tpu.dot_dimension_numbers<[1], [0], [0], [1], [0, 0, 1, 1], [], []>} : vector<32x512xbf16>, vector<512x128xbf16>, vector<32x128xf32> -> vector<32x128xf32>
    %c0_59 = arith.constant 0 : index
    %c0_60 = arith.constant 0 : index
    %c0_61 = arith.constant 0 : index
    %212 = vector.load %arg14[%c0_59, %c0_60, %c0_61] : memref<1x1x128xf32, #tpu.memory_space<vmem>>, vector<1x1x128xf32>
    %213 = vector.shape_cast %212 : vector<1x1x128xf32> to vector<1x128xf32>
    %214 = vector.broadcast %213 : vector<1x128xf32> to vector<32x128xf32>
    %215 = arith.addf %211, %214 : vector<32x128xf32>
    %216 = arith.addf %158, %215 : vector<32x128xf32>
    %c0_62 = arith.constant 0 : index
    %c0_63 = arith.constant 0 : index
    %217 = vector.load %arg15[%c0_62, %c0_63] : memref<32x128xf32, #tpu.memory_space<vmem>>, vector<32x128xf32>
    tpu.vector_store %arg15[%c0_62, %c0_63], %216 {strides = array<i32>} : memref<32x128xf32, #tpu.memory_space<vmem>>, vector<32x128xf32>,
    return
  }
  func.func @transform_0(%arg0: i32, %arg1: i32) -> (i32, i32) {
    %c0_i32 = arith.constant 0 : i32
    %c0_i32_0 = arith.constant 0 : i32
    return %arg0, %c0_i32 : i32, i32
  }
  func.func @transform_1(%arg0: i32, %arg1: i32) -> (i32, i32) {
    %c0_i32 = arith.constant 0 : i32
    %c0_i32_0 = arith.constant 0 : i32
    return %arg0, %c0_i32 : i32, i32
  }
  func.func @transform_2(%arg0: i32, %arg1: i32) -> (i32, i32, i32) {
    %c0_i32 = arith.constant 0 : i32
    %c0_i32_0 = arith.constant 0 : i32
    %c0_i32_1 = arith.constant 0 : i32
    return %arg1, %c0_i32, %c0_i32_0 : i32, i32, i32
  }
  func.func @transform_3(%arg0: i32, %arg1: i32) -> (i32, i32, i32) {
    %c0_i32 = arith.constant 0 : i32
    %c0_i32_0 = arith.constant 0 : i32
    %c0_i32_1 = arith.constant 0 : i32
    return %arg1, %c0_i32, %c0_i32_0 : i32, i32, i32
  }
  func.func @transform_4(%arg0: i32, %arg1: i32) -> (i32, i32, i32) {
    %c0_i32 = arith.constant 0 : i32
    %c0_i32_0 = arith.constant 0 : i32
    %c0_i32_1 = arith.constant 0 : i32
    return %arg1, %c0_i32, %c0_i32_0 : i32, i32, i32
  }
  func.func @transform_5(%arg0: i32, %arg1: i32) -> (i32, i32, i32) {
    %c0_i32 = arith.constant 0 : i32
    %c0_i32_0 = arith.constant 0 : i32
    %c0_i32_1 = arith.constant 0 : i32
    return %arg1, %c0_i32, %c0_i32_0 : i32, i32, i32
  }
  func.func @transform_6(%arg0: i32, %arg1: i32) -> (i32, i32, i32) {
    %c0_i32 = arith.constant 0 : i32
    %c0_i32_0 = arith.constant 0 : i32
    %c0_i32_1 = arith.constant 0 : i32
    return %arg1, %c0_i32, %c0_i32_0 : i32, i32, i32
  }
  func.func @transform_7(%arg0: i32, %arg1: i32) -> (i32, i32, i32) {
    %c0_i32 = arith.constant 0 : i32
    %c0_i32_0 = arith.constant 0 : i32
    %c0_i32_1 = arith.constant 0 : i32
    return %arg1, %c0_i32, %c0_i32_0 : i32, i32, i32
  }
  func.func @transform_8(%arg0: i32, %arg1: i32) -> (i32, i32, i32) {
    %c0_i32 = arith.constant 0 : i32
    %c0_i32_0 = arith.constant 0 : i32
    %c0_i32_1 = arith.constant 0 : i32
    return %arg1, %c0_i32, %c0_i32_0 : i32, i32, i32
  }
  func.func @transform_9(%arg0: i32, %arg1: i32) -> (i32, i32, i32) {
    %c0_i32 = arith.constant 0 : i32
    %c0_i32_0 = arith.constant 0 : i32
    %c0_i32_1 = arith.constant 0 : i32
    return %arg1, %c0_i32, %c0_i32_0 : i32, i32, i32
  }
  func.func @transform_10(%arg0: i32, %arg1: i32) -> (i32, i32, i32) {
    %c0_i32 = arith.constant 0 : i32
    %c0_i32_0 = arith.constant 0 : i32
    %c0_i32_1 = arith.constant 0 : i32
    return %arg1, %c0_i32, %c0_i32_0 : i32, i32, i32
  }
  func.func @transform_11(%arg0: i32, %arg1: i32) -> (i32, i32, i32) {
    %c0_i32 = arith.constant 0 : i32
    %c0_i32_0 = arith.constant 0 : i32
    %c0_i32_1 = arith.constant 0 : i32
    return %arg1, %c0_i32, %c0_i32_0 : i32, i32, i32
  }
  func.func @transform_12(%arg0: i32, %arg1: i32) -> (i32, i32, i32) {
    %c0_i32 = arith.constant 0 : i32
    %c0_i32_0 = arith.constant 0 : i32
    %c0_i32_1 = arith.constant 0 : i32
    return %arg1, %c0_i32, %c0_i32_0 : i32, i32, i32
  }
  func.func @transform_13(%arg0: i32, %arg1: i32) -> (i32, i32) {
    %c0_i32 = arith.constant 0 : i32
    %c0_i32_0 = arith.constant 0 : i32
    return %arg0, %c0_i32 : i32, i32
  }
}

</mosaic_0001>

<llo_original>
// kernel: transformer_encoder.1
$region0: #{transformer_encoder.1}
  #allocation0 [shape = 'u32[]', space=smem, size = 0x4, offset = 0x4, fixed_abs, tag = 'smem constant byte address 0x4 - core index']
  #allocation1 [shape = 'u32[144,128]{1,0:T(1,128)}', space=vmem, size = 0x12000, scoped, tag = 'internal scratch']
  %s0 = inlined_call_operand.vmem [shape: f32[32,128], index: 0, kind: input, shape index: {}]
  %s1 = inlined_call_operand.vmem [shape: f32[32,128], index: 1, kind: input, shape index: {}]
  %s2 = inlined_call_operand.vmem [shape: f32[2,1,128], index: 2, kind: input, shape index: {}]
  %s3 = inlined_call_operand.vmem [shape: f32[2,1,128], index: 3, kind: input, shape index: {}]
  %s4 = inlined_call_operand.vmem [shape: bf16[2,128,384], index: 4, kind: input, shape index: {}]
  %s5 = inlined_call_operand.vmem [shape: bf16[2,128,128], index: 5, kind: input, shape index: {}]
  %s6 = inlined_call_operand.vmem [shape: f32[2,1,128], index: 6, kind: input, shape index: {}]
  %s7 = inlined_call_operand.vmem [shape: f32[2,1,128], index: 7, kind: input, shape index: {}]
  %s8 = inlined_call_operand.vmem [shape: f32[2,1,128], index: 8, kind: input, shape index: {}]
  %s9 = inlined_call_operand.vmem [shape: bf16[2,128,512], index: 9, kind: input, shape index: {}]
  %s10 = inlined_call_operand.vmem [shape: f32[2,1,512], index: 10, kind: input, shape index: {}]
  %s11 = inlined_call_operand.vmem [shape: bf16[2,512,128], index: 11, kind: input, shape index: {}]
  %s12 = inlined_call_operand.vmem [shape: f32[2,1,128], index: 12, kind: input, shape index: {}]
  %s13 = inlined_call_operand.hbm [shape: f32[32,128], index: 13, kind: output, shape index: {}]
  %s14 = sld [smem:[#allocation0]]
  $region89: #{transformer_encoder.1} parent=0
    _
  %s16 = ssub.s32 1, %s14
  %s17 = scalar_select 0, %s16, %s14
  $region1: #{transformer_encoder.1} parent=0
    #allocation2 [shape = 'u8[16384]{0}', space=vmem, size = 0x4000, scoped, tag = 'output window, operand 0, single buffered']
    #allocation3 [shape = 's32[2]{0}', space=sflag, size = 0x8, scoped, tag = 'scoped memory for transformer_encoder.1']
    %18 = vsyncpa [#allocation3], 0
    loop: start=0, step=1, limit=4
    $region2: #{transformer_encoder.1} parent=1 // loop_pre_header
      _
    $region3: #{transformer_encoder.1} parent=1 // loop_header
      %s20 = sphi 0, %s24
      %p21 = scmp.ge.s32.totalorder %s20, 4
      %s27 = sphi 0, %s39
      %s28 = sphi 0, %s35
      %s29 = sphi 0, %s27
      %s30 = sphi 0, %s28
      %s31 = sphi 0, %s29
      %s32 = sphi 0, %s30
      %s42 = sphi 0, %s44
      %s45 = sphi 0, %s42
      %s46 = sphi 0, %s45
      %s62 = sphi 0, %s46
      %s68 = sphi 0, %s70
      %s71 = sphi 0, %s68
      %s72 = sphi 0, %s71
      %s88 = sphi 0, %s72
      %s94 = sphi 0, %s96
      %s97 = sphi 0, %s94
      %s98 = sphi 0, %s97
      %s114 = sphi 0, %s98
      %s120 = sphi 0, %s122
      %s123 = sphi 0, %s120
      %s124 = sphi 0, %s123
      %s140 = sphi 0, %s124
      %s146 = sphi 0, %s148
      %s149 = sphi 0, %s146
      %s150 = sphi 0, %s149
      %s166 = sphi 0, %s150
      %s172 = sphi 0, %s174
      %s175 = sphi 0, %s172
      %s176 = sphi 0, %s175
      %s192 = sphi 0, %s176
      %s198 = sphi 0, %s200
      %s201 = sphi 0, %s198
      %s202 = sphi 0, %s201
      %s218 = sphi 0, %s202
      %s224 = sphi 0, %s226
      %s227 = sphi 0, %s224
      %s228 = sphi 0, %s227
      %s244 = sphi 0, %s228
      %s250 = sphi 0, %s252
      %s253 = sphi 0, %s250
      %s254 = sphi 0, %s253
      %s270 = sphi 0, %s254
      %s276 = sphi 0, %s278
      %s279 = sphi 0, %s276
      %s280 = sphi 0, %s279
      %s296 = sphi 0, %s280
      %s302 = sphi 0, %s304
      %s305 = sphi 0, %s302
      %s306 = sphi 0, %s305
      %s322 = sphi 0, %s306
      %s328 = sphi 0, %s330
      %s331 = sphi 0, %s328
      %s332 = sphi 0, %s331
      %s348 = sphi 0, %s332
      %s354 = sphi 0, %s356
      %s357 = sphi 0, %s354
      %s358 = sphi 0, %s357
      %s374 = sphi 0, %s358
      %s380 = sphi 0, %s382
      %s383 = sphi 0, %s380
      %s384 = sphi 0, %s383
      %s400 = sphi 0, %s384
    $region4: #{transformer_encoder.1} parent=1 // loop_header_branch
      %23 = sbr.rel (%p21) target = $region8
    $region5: #{transformer_encoder.1} parent=1 // loop_body
      %s25 = ssub.s32 %s20, 1
      %s26 = ssub.s32 %s20, 2
      %s33 = sadd.s32 1, %s28
      %p34 = scmp.ge.s32.totalorder %s33, 2
      %s35 = scalar_select %p34, 0, %s33
      %s36 = sadd.s32 1, %s27
      %s37 = scalar_select %p34, %s36, %s27
      %p38 = scmp.ge.s32.totalorder %s37, 1
      %s39 = scalar_select %p38, 0, %s37
      %s40 = ssub.s32 %s27, %s39
      %p41 = scmp.eq.s32.totalorder %s40, 0
      %s43 = sadd.s32 %s42, 1
      %s44 = scalar_select %p41, %s42, %s43
      %p47 = pneg %p41
      %p48 = scmp.eq.s32.totalorder %s20, 1
      %p49 = por %p47, %p48
      %p50 = scmp.ne.s32.totalorder %s42, %s45
      %p51 = scmp.eq.s32.totalorder %s20, 0
      %p52 = por %p50, %p51
      %p53 = scmp.ne.s32.totalorder %s42, %s45
      %p54 = scmp.eq.s32.totalorder %s25, 1
      %p55 = por %p53, %p54
      %p56 = scmp.ne.s32.totalorder %s45, %s46
      %p57 = scmp.eq.s32.totalorder %s25, 0
      %p58 = por %p56, %p57
      %p59 = scmp.ne.s32.totalorder %s45, %s46
      %p60 = scmp.eq.s32.totalorder %s26, 1
      %p61 = por %p59, %p60
      %p63 = scmp.ne.s32.totalorder %s46, %s62
      %p64 = scmp.eq.s32.totalorder %s26, 0
      %p65 = por %p63, %p64
      %s66 = ssub.s32 %s27, %s39
      %p67 = scmp.eq.s32.totalorder %s66, 0
      %s69 = sadd.s32 %s68, 1
      %s70 = scalar_select %p67, %s68, %s69
      %p73 = pneg %p67
      %p74 = scmp.eq.s32.totalorder %s20, 1
      %p75 = por %p73, %p74
      %p76 = scmp.ne.s32.totalorder %s68, %s71
      %p77 = scmp.eq.s32.totalorder %s20, 0
      %p78 = por %p76, %p77
      %p79 = scmp.ne.s32.totalorder %s68, %s71
      %p80 = scmp.eq.s32.totalorder %s25, 1
      %p81 = por %p79, %p80
      %p82 = scmp.ne.s32.totalorder %s71, %s72
      %p83 = scmp.eq.s32.totalorder %s25, 0
      %p84 = por %p82, %p83
      %p85 = scmp.ne.s32.totalorder %s71, %s72
      %p86 = scmp.eq.s32.totalorder %s26, 1
      %p87 = por %p85, %p86
      %p89 = scmp.ne.s32.totalorder %s72, %s88
      %p90 = scmp.eq.s32.totalorder %s26, 0
      %p91 = por %p89, %p90
      %s92 = ssub.s32 %s28, %s35
      %p93 = scmp.eq.s32.totalorder %s92, 0
      %s95 = sadd.s32 %s94, 1
      %s96 = scalar_select %p93, %s94, %s95
      %p99 = pneg %p93
      %p100 = scmp.eq.s32.totalorder %s20, 1
      %p101 = por %p99, %p100
      %p102 = scmp.ne.s32.totalorder %s94, %s97
      %p103 = scmp.eq.s32.totalorder %s20, 0
      %p104 = por %p102, %p103
      %p105 = scmp.ne.s32.totalorder %s94, %s97
      %p106 = scmp.eq.s32.totalorder %s25, 1
      %p107 = por %p105, %p106
      %p108 = scmp.ne.s32.totalorder %s97, %s98
      %p109 = scmp.eq.s32.totalorder %s25, 0
      %p110 = por %p108, %p109
      %p111 = scmp.ne.s32.totalorder %s97, %s98
      %p112 = scmp.eq.s32.totalorder %s26, 1
      %p113 = por %p111, %p112
      %p115 = scmp.ne.s32.totalorder %s98, %s114
      %p116 = scmp.eq.s32.totalorder %s26, 0
      %p117 = por %p115, %p116
      %s118 = ssub.s32 %s28, %s35
      %p119 = scmp.eq.s32.totalorder %s118, 0
      %s121 = sadd.s32 %s120, 1
      %s122 = scalar_select %p119, %s120, %s121
      %p125 = pneg %p119
      %p126 = scmp.eq.s32.totalorder %s20, 1
      %p127 = por %p125, %p126
      %p128 = scmp.ne.s32.totalorder %s120, %s123
      %p129 = scmp.eq.s32.totalorder %s20, 0
      %p130 = por %p128, %p129
      %p131 = scmp.ne.s32.totalorder %s120, %s123
      %p132 = scmp.eq.s32.totalorder %s25, 1
      %p133 = por %p131, %p132
      %p134 = scmp.ne.s32.totalorder %s123, %s124
      %p135 = scmp.eq.s32.totalorder %s25, 0
      %p136 = por %p134, %p135
      %p137 = scmp.ne.s32.totalorder %s123, %s124
      %p138 = scmp.eq.s32.totalorder %s26, 1
      %p139 = por %p137, %p138
      %p141 = scmp.ne.s32.totalorder %s124, %s140
      %p142 = scmp.eq.s32.totalorder %s26, 0
      %p143 = por %p141, %p142
      %s144 = ssub.s32 %s28, %s35
      %p145 = scmp.eq.s32.totalorder %s144, 0
      %s147 = sadd.s32 %s146, 1
      %s148 = scalar_select %p145, %s146, %s147
      %p151 = pneg %p145
      %p152 = scmp.eq.s32.totalorder %s20, 1
      %p153 = por %p151, %p152
      %p154 = scmp.ne.s32.totalorder %s146, %s149
      %p155 = scmp.eq.s32.totalorder %s20, 0
      %p156 = por %p154, %p155
      %p157 = scmp.ne.s32.totalorder %s146, %s149
      %p158 = scmp.eq.s32.totalorder %s25, 1
      %p159 = por %p157, %p158
      %p160 = scmp.ne.s32.totalorder %s149, %s150
      %p161 = scmp.eq.s32.totalorder %s25, 0
      %p162 = por %p160, %p161
      %p163 = scmp.ne.s32.totalorder %s149, %s150
      %p164 = scmp.eq.s32.totalorder %s26, 1
      %p165 = por %p163, %p164
      %p167 = scmp.ne.s32.totalorder %s150, %s166
      %p168 = scmp.eq.s32.totalorder %s26, 0
      %p169 = por %p167, %p168
      %s170 = ssub.s32 %s28, %s35
      %p171 = scmp.eq.s32.totalorder %s170, 0
      %s173 = sadd.s32 %s172, 1
      %s174 = scalar_select %p171, %s172, %s173
      %p177 = pneg %p171
      %p178 = scmp.eq.s32.totalorder %s20, 1
      %p179 = por %p177, %p178
      %p180 = scmp.ne.s32.totalorder %s172, %s175
      %p181 = scmp.eq.s32.totalorder %s20, 0
      %p182 = por %p180, %p181
      %p183 = scmp.ne.s32.totalorder %s172, %s175
      %p184 = scmp.eq.s32.totalorder %s25, 1
      %p185 = por %p183, %p184
      %p186 = scmp.ne.s32.totalorder %s175, %s176
      %p187 = scmp.eq.s32.totalorder %s25, 0
      %p188 = por %p186, %p187
      %p189 = scmp.ne.s32.totalorder %s175, %s176
      %p190 = scmp.eq.s32.totalorder %s26, 1
      %p191 = por %p189, %p190
      %p193 = scmp.ne.s32.totalorder %s176, %s192
      %p194 = scmp.eq.s32.totalorder %s26, 0
      %p195 = por %p193, %p194
      %s196 = ssub.s32 %s28, %s35
      %p197 = scmp.eq.s32.totalorder %s196, 0
      %s199 = sadd.s32 %s198, 1
      %s200 = scalar_select %p197, %s198, %s199
      %p203 = pneg %p197
      %p204 = scmp.eq.s32.totalorder %s20, 1
      %p205 = por %p203, %p204
      %p206 = scmp.ne.s32.totalorder %s198, %s201
      %p207 = scmp.eq.s32.totalorder %s20, 0
      %p208 = por %p206, %p207
      %p209 = scmp.ne.s32.totalorder %s198, %s201
      %p210 = scmp.eq.s32.totalorder %s25, 1
      %p211 = por %p209, %p210
      %p212 = scmp.ne.s32.totalorder %s201, %s202
      %p213 = scmp.eq.s32.totalorder %s25, 0
      %p214 = por %p212, %p213
      %p215 = scmp.ne.s32.totalorder %s201, %s202
      %p216 = scmp.eq.s32.totalorder %s26, 1
      %p217 = por %p215, %p216
      %p219 = scmp.ne.s32.totalorder %s202, %s218
      %p220 = scmp.eq.s32.totalorder %s26, 0
      %p221 = por %p219, %p220
      %s222 = ssub.s32 %s28, %s35
      %p223 = scmp.eq.s32.totalorder %s222, 0
      %s225 = sadd.s32 %s224, 1
      %s226 = scalar_select %p223, %s224, %s225
      %p229 = pneg %p223
      %p230 = scmp.eq.s32.totalorder %s20, 1
      %p231 = por %p229, %p230
      %p232 = scmp.ne.s32.totalorder %s224, %s227
      %p233 = scmp.eq.s32.totalorder %s20, 0
      %p234 = por %p232, %p233
      %p235 = scmp.ne.s32.totalorder %s224, %s227
      %p236 = scmp.eq.s32.totalorder %s25, 1
      %p237 = por %p235, %p236
      %p238 = scmp.ne.s32.totalorder %s227, %s228
      %p239 = scmp.eq.s32.totalorder %s25, 0
      %p240 = por %p238, %p239
      %p241 = scmp.ne.s32.totalorder %s227, %s228
      %p242 = scmp.eq.s32.totalorder %s26, 1
      %p243 = por %p241, %p242
      %p245 = scmp.ne.s32.totalorder %s228, %s244
      %p246 = scmp.eq.s32.totalorder %s26, 0
      %p247 = por %p245, %p246
      %s248 = ssub.s32 %s28, %s35
      %p249 = scmp.eq.s32.totalorder %s248, 0
      %s251 = sadd.s32 %s250, 1
      %s252 = scalar_select %p249, %s250, %s251
      %p255 = pneg %p249
      %p256 = scmp.eq.s32.totalorder %s20, 1
      %p257 = por %p255, %p256
      %p258 = scmp.ne.s32.totalorder %s250, %s253
      %p259 = scmp.eq.s32.totalorder %s20, 0
      %p260 = por %p258, %p259
      %p261 = scmp.ne.s32.totalorder %s250, %s253
      %p262 = scmp.eq.s32.totalorder %s25, 1
      %p263 = por %p261, %p262
      %p264 = scmp.ne.s32.totalorder %s253, %s254
      %p265 = scmp.eq.s32.totalorder %s25, 0
      %p266 = por %p264, %p265
      %p267 = scmp.ne.s32.totalorder %s253, %s254
      %p268 = scmp.eq.s32.totalorder %s26, 1
      %p269 = por %p267, %p268
      %p271 = scmp.ne.s32.totalorder %s254, %s270
      %p272 = scmp.eq.s32.totalorder %s26, 0
      %p273 = por %p271, %p272
      %s274 = ssub.s32 %s28, %s35
      %p275 = scmp.eq.s32.totalorder %s274, 0
      %s277 = sadd.s32 %s276, 1
      %s278 = scalar_select %p275, %s276, %s277
      %p281 = pneg %p275
      %p282 = scmp.eq.s32.totalorder %s20, 1
      %p283 = por %p281, %p282
      %p284 = scmp.ne.s32.totalorder %s276, %s279
      %p285 = scmp.eq.s32.totalorder %s20, 0
      %p286 = por %p284, %p285
      %p287 = scmp.ne.s32.totalorder %s276, %s279
      %p288 = scmp.eq.s32.totalorder %s25, 1
      %p289 = por %p287, %p288
      %p290 = scmp.ne.s32.totalorder %s279, %s280
      %p291 = scmp.eq.s32.totalorder %s25, 0
      %p292 = por %p290, %p291
      %p293 = scmp.ne.s32.totalorder %s279, %s280
      %p294 = scmp.eq.s32.totalorder %s26, 1
      %p295 = por %p293, %p294
      %p297 = scmp.ne.s32.totalorder %s280, %s296
      %p298 = scmp.eq.s32.totalorder %s26, 0
      %p299 = por %p297, %p298
      %s300 = ssub.s32 %s28, %s35
      %p301 = scmp.eq.s32.totalorder %s300, 0
      %s303 = sadd.s32 %s302, 1
      %s304 = scalar_select %p301, %s302, %s303
      %p307 = pneg %p301
      %p308 = scmp.eq.s32.totalorder %s20, 1
      %p309 = por %p307, %p308
      %p310 = scmp.ne.s32.totalorder %s302, %s305
      %p311 = scmp.eq.s32.totalorder %s20, 0
      %p312 = por %p310, %p311
      %p313 = scmp.ne.s32.totalorder %s302, %s305
      %p314 = scmp.eq.s32.totalorder %s25, 1
      %p315 = por %p313, %p314
      %p316 = scmp.ne.s32.totalorder %s305, %s306
      %p317 = scmp.eq.s32.totalorder %s25, 0
      %p318 = por %p316, %p317
      %p319 = scmp.ne.s32.totalorder %s305, %s306
      %p320 = scmp.eq.s32.totalorder %s26, 1
      %p321 = por %p319, %p320
      %p323 = scmp.ne.s32.totalorder %s306, %s322
      %p324 = scmp.eq.s32.totalorder %s26, 0
      %p325 = por %p323, %p324
      %s326 = ssub.s32 %s28, %s35
      %p327 = scmp.eq.s32.totalorder %s326, 0
      %s329 = sadd.s32 %s328, 1
      %s330 = scalar_select %p327, %s328, %s329
      %p333 = pneg %p327
      %p334 = scmp.eq.s32.totalorder %s20, 1
      %p335 = por %p333, %p334
      %p336 = scmp.ne.s32.totalorder %s328, %s331
      %p337 = scmp.eq.s32.totalorder %s20, 0
      %p338 = por %p336, %p337
      %p339 = scmp.ne.s32.totalorder %s328, %s331
      %p340 = scmp.eq.s32.totalorder %s25, 1
      %p341 = por %p339, %p340
      %p342 = scmp.ne.s32.totalorder %s331, %s332
      %p343 = scmp.eq.s32.totalorder %s25, 0
      %p344 = por %p342, %p343
      %p345 = scmp.ne.s32.totalorder %s331, %s332
      %p346 = scmp.eq.s32.totalorder %s26, 1
      %p347 = por %p345, %p346
      %p349 = scmp.ne.s32.totalorder %s332, %s348
      %p350 = scmp.eq.s32.totalorder %s26, 0
      %p351 = por %p349, %p350
      %s352 = ssub.s32 %s28, %s35
      %p353 = scmp.eq.s32.totalorder %s352, 0
      %s355 = sadd.s32 %s354, 1
      %s356 = scalar_select %p353, %s354, %s355
      %p359 = pneg %p353
      %p360 = scmp.eq.s32.totalorder %s20, 1
      %p361 = por %p359, %p360
      %p362 = scmp.ne.s32.totalorder %s354, %s357
      %p363 = scmp.eq.s32.totalorder %s20, 0
      %p364 = por %p362, %p363
      %p365 = scmp.ne.s32.totalorder %s354, %s357
      %p366 = scmp.eq.s32.totalorder %s25, 1
      %p367 = por %p365, %p366
      %p368 = scmp.ne.s32.totalorder %s357, %s358
      %p369 = scmp.eq.s32.totalorder %s25, 0
      %p370 = por %p368, %p369
      %p371 = scmp.ne.s32.totalorder %s357, %s358
      %p372 = scmp.eq.s32.totalorder %s26, 1
      %p373 = por %p371, %p372
      %p375 = scmp.ne.s32.totalorder %s358, %s374
      %p376 = scmp.eq.s32.totalorder %s26, 0
      %p377 = por %p375, %p376
      %s378 = ssub.s32 %s27, %s39
      %p379 = scmp.eq.s32.totalorder %s378, 0
      %s381 = sadd.s32 %s380, 1
      %s382 = scalar_select %p379, %s380, %s381
      %p385 = pneg %p379
      %p386 = scmp.eq.s32.totalorder %s20, 1
      %p387 = por %p385, %p386
      %p388 = scmp.ne.s32.totalorder %s380, %s383
      %p389 = scmp.eq.s32.totalorder %s20, 0
      %p390 = por %p388, %p389
      %p391 = scmp.ne.s32.totalorder %s380, %s383
      %p392 = scmp.eq.s32.totalorder %s25, 1
      %p393 = por %p391, %p392
      %p394 = scmp.ne.s32.totalorder %s383, %s384
      %p395 = scmp.eq.s32.totalorder %s25, 0
      %p396 = por %p394, %p395
      %p397 = scmp.ne.s32.totalorder %s383, %s384
      %p398 = scmp.eq.s32.totalorder %s26, 1
      %p399 = por %p397, %p398
      %p401 = scmp.ne.s32.totalorder %s384, %s400
      %p402 = scmp.eq.s32.totalorder %s26, 0
      %p403 = por %p401, %p402
      %p404 = scmp.le.s32.totalorder 1, %s20
      %p405 = scmp.lt.s32.totalorder %s20, 3
      %p406 = pnand %p404, %p405
      %p407 = pneg %p406
      // Predicated region
      $region9: #{transformer_encoder.1} parent=5 // pred_check
        _
      $region10: #{transformer_encoder.1} parent=5 // pred_check_branch
        %409 = sbr.rel (%p406) target = $region12
      $region11: #{transformer_encoder.1} parent=5 // pred_region
        %s410 = ssub.s32 %s20, 1
        // Predicated region
        $region13: #{transformer_encoder.1} parent=11 // pred_check
          %p411 = pneg %p58
        $region14: #{transformer_encoder.1} parent=11 // pred_check_branch
          %413 = sbr.rel (%p411) target = $region16
        $region15: #{transformer_encoder.1} parent=11 // pred_region
          %s414 = smul.u32 4, %s29
          %p415 = scmp.lt.s32.totalorder %s414, 3
          %s416 = scalar_select %p415, %s414, 3
          %s417 = smul.addr %s416, 8
          %s418 = scalar_lea.vmem %s0, %s417
          %s419 = smul.u32 4, %s29
        $region16: #{transformer_encoder.1} parent=11 // pred_fallthru
          _
        // Predicated region
        $region17: #{transformer_encoder.1} parent=11 // pred_check
          %p420 = pneg %p84
        $region18: #{transformer_encoder.1} parent=11 // pred_check_branch
          %422 = sbr.rel (%p420) target = $region20
        $region19: #{transformer_encoder.1} parent=11 // pred_region
          %s423 = smul.u32 4, %s29
          %p424 = scmp.lt.s32.totalorder %s423, 3
          %s425 = scalar_select %p424, %s423, 3
          %s426 = smul.addr %s425, 8
          %s427 = scalar_lea.vmem %s1, %s426
          %s428 = smul.u32 4, %s29
        $region20: #{transformer_encoder.1} parent=11 // pred_fallthru
          _
      $region12: #{transformer_encoder.1} parent=5 // pred_fallthru
        _
      %p429 = scmp.lt.s32.totalorder %s20, 2
      // Predicated region
      $region21: #{transformer_encoder.1} parent=5 // pred_check
        %p430 = pneg %p429
      $region22: #{transformer_encoder.1} parent=5 // pred_check_branch
        %432 = sbr.rel (%p430) target = $region24
      $region23: #{transformer_encoder.1} parent=5 // pred_region
        // Predicated region
        $region25: #{transformer_encoder.1} parent=23 // pred_check
          %p433 = pneg %p104
        $region26: #{transformer_encoder.1} parent=23 // pred_check_branch
          %435 = sbr.rel (%p433) target = $region28
        $region27: #{transformer_encoder.1} parent=23 // pred_region
          %p436 = scmp.lt.s32.totalorder %s28, 1
          %s437 = scalar_select %p436, %s28, 1
          %s438 = scalar_lea.vmem %s2, %s437
        $region28: #{transformer_encoder.1} parent=23 // pred_fallthru
          _
        // Predicated region
        $region29: #{transformer_encoder.1} parent=23 // pred_check
          %p439 = pneg %p130
        $region30: #{transformer_encoder.1} parent=23 // pred_check_branch
          %441 = sbr.rel (%p439) target = $region32
        $region31: #{transformer_encoder.1} parent=23 // pred_region
          %p442 = scmp.lt.s32.totalorder %s28, 1
          %s443 = scalar_select %p442, %s28, 1
          %s444 = scalar_lea.vmem %s3, %s443
        $region32: #{transformer_encoder.1} parent=23 // pred_fallthru
          _
        // Predicated region
        $region33: #{transformer_encoder.1} parent=23 // pred_check
          %p445 = pneg %p156
        $region34: #{transformer_encoder.1} parent=23 // pred_check_branch
          %447 = sbr.rel (%p445) target = $region36
        $region35: #{transformer_encoder.1} parent=23 // pred_region
          %p448 = scmp.lt.s32.totalorder %s28, 1
          %s449 = scalar_select %p448, %s28, 1
          %s450 = smul.addr %s449, 48
          %s451 = smul.addr %s450, 4
          %s452 = scalar_lea.vmem %s4, %s451
        $region36: #{transformer_encoder.1} parent=23 // pred_fallthru
          _
        // Predicated region
        $region37: #{transformer_encoder.1} parent=23 // pred_check
          %p453 = pneg %p182
        $region38: #{transformer_encoder.1} parent=23 // pred_check_branch
          %455 = sbr.rel (%p453) target = $region40
        $region39: #{transformer_encoder.1} parent=23 // pred_region
          %p456 = scmp.lt.s32.totalorder %s28, 1
          %s457 = scalar_select %p456, %s28, 1
          %s458 = smul.addr %s457, 16
          %s459 = smul.addr %s458, 4
          %s460 = scalar_lea.vmem %s5, %s459
        $region40: #{transformer_encoder.1} parent=23 // pred_fallthru
          _
        // Predicated region
        $region41: #{transformer_encoder.1} parent=23 // pred_check
          %p461 = pneg %p208
        $region42: #{transformer_encoder.1} parent=23 // pred_check_branch
          %463 = sbr.rel (%p461) target = $region44
        $region43: #{transformer_encoder.1} parent=23 // pred_region
          %p464 = scmp.lt.s32.totalorder %s28, 1
          %s465 = scalar_select %p464, %s28, 1
          %s466 = scalar_lea.vmem %s6, %s465
        $region44: #{transformer_encoder.1} parent=23 // pred_fallthru
          _
        // Predicated region
        $region45: #{transformer_encoder.1} parent=23 // pred_check
          %p467 = pneg %p234
        $region46: #{transformer_encoder.1} parent=23 // pred_check_branch
          %469 = sbr.rel (%p467) target = $region48
        $region47: #{transformer_encoder.1} parent=23 // pred_region
          %p470 = scmp.lt.s32.totalorder %s28, 1
          %s471 = scalar_select %p470, %s28, 1
          %s472 = scalar_lea.vmem %s7, %s471
        $region48: #{transformer_encoder.1} parent=23 // pred_fallthru
          _
        // Predicated region
        $region49: #{transformer_encoder.1} parent=23 // pred_check
          %p473 = pneg %p260
        $region50: #{transformer_encoder.1} parent=23 // pred_check_branch
          %475 = sbr.rel (%p473) target = $region52
        $region51: #{transformer_encoder.1} parent=23 // pred_region
          %p476 = scmp.lt.s32.totalorder %s28, 1
          %s477 = scalar_select %p476, %s28, 1
          %s478 = scalar_lea.vmem %s8, %s477
        $region52: #{transformer_encoder.1} parent=23 // pred_fallthru
          _
        // Predicated region
        $region53: #{transformer_encoder.1} parent=23 // pred_check
          %p479 = pneg %p286
        $region54: #{transformer_encoder.1} parent=23 // pred_check_branch
          %481 = sbr.rel (%p479) target = $region56
        $region55: #{transformer_encoder.1} parent=23 // pred_region
          %p482 = scmp.lt.s32.totalorder %s28, 1
          %s483 = scalar_select %p482, %s28, 1
          %s484 = smul.addr %s483, 64
          %s485 = smul.addr %s484, 4
          %s486 = scalar_lea.vmem %s9, %s485
        $region56: #{transformer_encoder.1} parent=23 // pred_fallthru
          _
        // Predicated region
        $region57: #{transformer_encoder.1} parent=23 // pred_check
          %p487 = pneg %p312
        $region58: #{transformer_encoder.1} parent=23 // pred_check_branch
          %489 = sbr.rel (%p487) target = $region60
        $region59: #{transformer_encoder.1} parent=23 // pred_region
          %p490 = scmp.lt.s32.totalorder %s28, 1
          %s491 = scalar_select %p490, %s28, 1
          %s492 = smul.addr %s491, 4
          %s493 = scalar_lea.vmem %s10, %s492
        $region60: #{transformer_encoder.1} parent=23 // pred_fallthru
          _
        // Predicated region
        $region61: #{transformer_encoder.1} parent=23 // pred_check
          %p494 = pneg %p338
        $region62: #{transformer_encoder.1} parent=23 // pred_check_branch
          %496 = sbr.rel (%p494) target = $region64
        $region63: #{transformer_encoder.1} parent=23 // pred_region
          %p497 = scmp.lt.s32.totalorder %s28, 1
          %s498 = scalar_select %p497, %s28, 1
          %s499 = smul.addr %s498, 64
          %s500 = smul.addr %s499, 4
          %s501 = scalar_lea.vmem %s11, %s500
        $region64: #{transformer_encoder.1} parent=23 // pred_fallthru
          _
        // Predicated region
        $region65: #{transformer_encoder.1} parent=23 // pred_check
          %p502 = pneg %p364
        $region66: #{transformer_encoder.1} parent=23 // pred_check_branch
          %504 = sbr.rel (%p502) target = $region68
        $region67: #{transformer_encoder.1} parent=23 // pred_region
          %p505 = scmp.lt.s32.totalorder %s28, 1
          %s506 = scalar_select %p505, %s28, 1
          %s507 = scalar_lea.vmem %s12, %s506
        $region68: #{transformer_encoder.1} parent=23 // pred_fallthru
          _
      $region24: #{transformer_encoder.1} parent=5 // pred_fallthru
        _
      %p508 = scmp.le.s32.totalorder 1, %s20
      %p509 = scmp.lt.s32.totalorder %s20, 3
      %p510 = pnand %p508, %p509
      %p511 = pneg %p510
      // Predicated region
      $region69: #{transformer_encoder.1} parent=5 // pred_check
        _
      $region70: #{transformer_encoder.1} parent=5 // pred_check_branch
        %513 = sbr.rel (%p510) target = $region72
      $region71: #{transformer_encoder.1} parent=5 // pred_region
        %s514 = ssub.s32 %s20, 1
        %s515 = smul.u32 4, %s29
        %p516 = scmp.lt.s32.totalorder %s515, 3
        %s517 = scalar_select %p516, %s515, 3
        %s518 = smul.addr %s517, 8
        %s519 = scalar_lea.vmem %s0, %s518
        %p520 = pneg %p58
        %p521 = pneg %p55
        %s522 = smul.u32 4, %s29
        %p523 = scmp.lt.s32.totalorder %s522, 3
        %s524 = scalar_select %p523, %s522, 3
        %s525 = smul.addr %s524, 8
        %s526 = scalar_lea.vmem %s1, %s525
        %p527 = pneg %p84
        %p528 = pneg %p81
        %p529 = scmp.lt.s32.totalorder %s30, 1
        %s530 = scalar_select %p529, %s30, 1
        %s531 = scalar_lea.vmem %s2, %s530
        %p532 = pneg %p110
        %p533 = pneg %p107
        %p534 = scmp.lt.s32.totalorder %s30, 1
        %s535 = scalar_select %p534, %s30, 1
        %s536 = scalar_lea.vmem %s3, %s535
        %p537 = pneg %p136
        %p538 = pneg %p133
        %p539 = scmp.lt.s32.totalorder %s30, 1
        %s540 = scalar_select %p539, %s30, 1
        %s541 = smul.addr %s540, 48
        %s542 = smul.addr %s541, 4
        %s543 = scalar_lea.vmem %s4, %s542
        %p544 = pneg %p162
        %p545 = pneg %p159
        %p546 = scmp.lt.s32.totalorder %s30, 1
        %s547 = scalar_select %p546, %s30, 1
        %s548 = smul.addr %s547, 16
        %s549 = smul.addr %s548, 4
        %s550 = scalar_lea.vmem %s5, %s549
        %p551 = pneg %p188
        %p552 = pneg %p185
        %p553 = scmp.lt.s32.totalorder %s30, 1
        %s554 = scalar_select %p553, %s30, 1
        %s555 = scalar_lea.vmem %s6, %s554
        %p556 = pneg %p214
        %p557 = pneg %p211
        %p558 = scmp.lt.s32.totalorder %s30, 1
        %s559 = scalar_select %p558, %s30, 1
        %s560 = scalar_lea.vmem %s7, %s559
        %p561 = pneg %p240
        %p562 = pneg %p237
        %p563 = scmp.lt.s32.totalorder %s30, 1
        %s564 = scalar_select %p563, %s30, 1
        %s565 = scalar_lea.vmem %s8, %s564
        %p566 = pneg %p266
        %p567 = pneg %p263
        %p568 = scmp.lt.s32.totalorder %s30, 1
        %s569 = scalar_select %p568, %s30, 1
        %s570 = smul.addr %s569, 64
        %s571 = smul.addr %s570, 4
        %s572 = scalar_lea.vmem %s9, %s571
        %p573 = pneg %p292
        %p574 = pneg %p289
        %p575 = scmp.lt.s32.totalorder %s30, 1
        %s576 = scalar_select %p575, %s30, 1
        %s577 = smul.addr %s576, 4
        %s578 = scalar_lea.vmem %s10, %s577
        %p579 = pneg %p318
        %p580 = pneg %p315
        %p581 = scmp.lt.s32.totalorder %s30, 1
        %s582 = scalar_select %p581, %s30, 1
        %s583 = smul.addr %s582, 64
        %s584 = smul.addr %s583, 4
        %s585 = scalar_lea.vmem %s11, %s584
        %p586 = pneg %p344
        %p587 = pneg %p341
        %p588 = scmp.lt.s32.totalorder %s30, 1
        %s589 = scalar_select %p588, %s30, 1
        %s590 = scalar_lea.vmem %s12, %s589
        %p591 = pneg %p370
        %p592 = pneg %p367
        %p593 = pneg %p396
        %p594 = pneg %p393
        %s595 = smul.u32 4, %s29
        %p596 = scmp.lt.s32.totalorder %s595, 3
        %s597 = scalar_select %p596, %s595, 3
        %s598 = smul.addr %s597, 8
        %s599 = scalar_lea.vmem %s0, %s598
        %s600 = smul.u32 4, %s29
        %s601 = smul.u32 4, %s29
        %p602 = scmp.lt.s32.totalorder %s601, 3
        %s603 = scalar_select %p602, %s601, 3
        %s604 = smul.addr %s603, 8
        %s605 = scalar_lea.vmem %s1, %s604
        %s606 = smul.u32 4, %s29
        %p607 = scmp.lt.s32.totalorder %s30, 1
        %s608 = scalar_select %p607, %s30, 1
        %s609 = scalar_lea.vmem %s2, %s608
        %p610 = scmp.lt.s32.totalorder %s30, 1
        %s611 = scalar_select %p610, %s30, 1
        %s612 = scalar_lea.vmem %s3, %s611
        %p613 = scmp.lt.s32.totalorder %s30, 1
        %s614 = scalar_select %p613, %s30, 1
        %s615 = smul.addr %s614, 48
        %s616 = smul.addr %s615, 4
        %s617 = scalar_lea.vmem %s4, %s616
        %p618 = scmp.lt.s32.totalorder %s30, 1
        %s619 = scalar_select %p618, %s30, 1
        %s620 = smul.addr %s619, 16
        %s621 = smul.addr %s620, 4
        %s622 = scalar_lea.vmem %s5, %s621
        %p623 = scmp.lt.s32.totalorder %s30, 1
        %s624 = scalar_select %p623, %s30, 1
        %s625 = scalar_lea.vmem %s6, %s624
        %p626 = scmp.lt.s32.totalorder %s30, 1
        %s627 = scalar_select %p626, %s30, 1
        %s628 = scalar_lea.vmem %s7, %s627
        %p629 = scmp.lt.s32.totalorder %s30, 1
        %s630 = scalar_select %p629, %s30, 1
        %s631 = scalar_lea.vmem %s8, %s630
        %p632 = scmp.lt.s32.totalorder %s30, 1
        %s633 = scalar_select %p632, %s30, 1
        %s634 = smul.addr %s633, 64
        %s635 = smul.addr %s634, 4
        %s636 = scalar_lea.vmem %s9, %s635
        %p637 = scmp.lt.s32.totalorder %s30, 1
        %s638 = scalar_select %p637, %s30, 1
        %s639 = smul.addr %s638, 4
        %s640 = scalar_lea.vmem %s10, %s639
        %p641 = scmp.lt.s32.totalorder %s30, 1
        %s642 = scalar_select %p641, %s30, 1
        %s643 = smul.addr %s642, 64
        %s644 = smul.addr %s643, 4
        %s645 = scalar_lea.vmem %s11, %s644
        %p646 = scmp.lt.s32.totalorder %s30, 1
        %s647 = scalar_select %p646, %s30, 1
        %s648 = scalar_lea.vmem %s12, %s647
        %s649 = smul.u32 4, %s29
        %p651 = scmp.eq.s32.totalorder %s30, 0
        // Predicated region
        $region73: #{transformer_encoder.1} parent=71 // pred_check
          %p652 = pneg %p651
        $region74: #{transformer_encoder.1} parent=71 // pred_check_branch
          %654 = sbr.rel (%p652) target = $region76
        $region75: #{transformer_encoder.1} parent=71 // pred_region
          %v655 = vld [vmem:[%s599] sm:$0xff]
          %v656 = vld [vmem:[%s599 + $0x8] sm:$0xff]
          %v657 = vld [vmem:[%s599 + $0x10] sm:$0xff]
          %v658 = vld [vmem:[%s599 + $0x18] sm:$0xff]
          %659 = vst [vmem:[#allocation2] sm:$0xff] %v655
          %660 = vst [vmem:[#allocation2 + $0x8] sm:$0xff] %v656
          %661 = vst [vmem:[#allocation2 + $0x10] sm:$0xff] %v657
          %662 = vst [vmem:[#allocation2 + $0x18] sm:$0xff] %v658
        $region76: #{transformer_encoder.1} parent=71 // pred_fallthru
          _
        %v663 = vld [vmem:[#allocation2] sm:$0xff]
        %v664 = vld [vmem:[#allocation2 + $0x8] sm:$0xff]
        %v665 = vld [vmem:[#allocation2 + $0x10] sm:$0xff]
        %v666 = vld [vmem:[#allocation2 + $0x18] sm:$0xff]
        %v667 = vld [vmem:[%s605] sm:$0xff]
        %v668 = vld [vmem:[%s605 + $0x8] sm:$0xff]
        %v669 = vld [vmem:[%s605 + $0x10] sm:$0xff]
        %v670 = vld [vmem:[%s605 + $0x18] sm:$0xff]
        %v671 = vadd.f32 %v663, %v667
        %v672 = vadd.f32 %v664, %v668
        %v673 = vadd.f32 %v665, %v669
        %v674 = vadd.f32 %v666, %v670
        %v675 = vld [vmem:[%s609] sm:$0x1]
        %v676 = vld [vmem:[%s612] sm:$0x1]
        %677 = vadd.xlane.f32.xlu0 %v671
        %v678 = vpop.xlane.xlu0 %677
        %679 = vadd.xlane.f32.xlu0 %v672
        %v680 = vpop.xlane.xlu0 %679
        %681 = vadd.xlane.f32.xlu0 %v673
        %v682 = vpop.xlane.xlu0 %681
        %683 = vadd.xlane.f32.xlu0 %v674
        %v684 = vpop.xlane.xlu0 %683
        %v685 = vrcp.pop 128.0
        %v686 = vmul.f32 %v678, %v685
        %v687 = vmul.f32 %v680, %v685
        %v688 = vmul.f32 %v682, %v685
        %v689 = vmul.f32 %v684, %v685
        %v690 = vsub.f32 %v671, %v686
        %v691 = vsub.f32 %v672, %v687
        %v692 = vsub.f32 %v673, %v688
        %v693 = vsub.f32 %v674, %v689
        %v694 = vmul.f32 %v690, %v690
        %v695 = vmul.f32 %v691, %v691
        %v696 = vmul.f32 %v692, %v692
        %v697 = vmul.f32 %v693, %v693
        %698 = vadd.xlane.f32.xlu0 %v694
        %v699 = vpop.xlane.xlu0 %698
        %700 = vadd.xlane.f32.xlu0 %v695
        %v701 = vpop.xlane.xlu0 %700
        %702 = vadd.xlane.f32.xlu0 %v696
        %v703 = vpop.xlane.xlu0 %702
        %704 = vadd.xlane.f32.xlu0 %v697
        %v705 = vpop.xlane.xlu0 %704
        %v706 = vmul.f32 %v699, %v685
        %v707 = vmul.f32 %v701, %v685
        %v708 = vmul.f32 %v703, %v685
        %v709 = vmul.f32 %v705, %v685
        %v710 = vadd.f32 %v706, 1e-05
        %v711 = vadd.f32 %v707, 1e-05
        %v712 = vadd.f32 %v708, 1e-05
        %v713 = vadd.f32 %v709, 1e-05
        %v714 = vrsqrt.pop %v710
        %v715 = vrsqrt.pop %v711
        %v716 = vrsqrt.pop %v712
        %v717 = vrsqrt.pop %v713
        %v718 = vmul.f32 %v690, %v714
        %v719 = vmul.f32 %v691, %v715
        %v720 = vmul.f32 %v692, %v716
        %v721 = vmul.f32 %v693, %v717
        %v723 = vlaneseq
        %v724 = vshrl.u32 %v723, 7
        %v725 = vsub.s32 0, %v724
        %v726 = vrot.slane %v675, %v725
        %v728 = vmul.f32 %v718, %v726
        %v729 = vmul.f32 %v719, %v726
        %v730 = vmul.f32 %v720, %v726
        %v731 = vmul.f32 %v721, %v726
        %v733 = vlaneseq
        %v734 = vshrl.u32 %v733, 7
        %v735 = vsub.s32 0, %v734
        %v736 = vrot.slane %v676, %v735
        %v738 = vadd.f32 %v728, %v736
        %v739 = vadd.f32 %v729, %v736
        %v740 = vadd.f32 %v730, %v736
        %v741 = vadd.f32 %v731, %v736
        %v742 = vpack.c.bf16 %v739, %v738
        %v743 = vpack.c.bf16 %v741, %v740
        %v744 = vld [vmem:[%s617] sm:$0xff]
        %v745 = vld [vmem:[%s617 + $0x8] sm:$0xf]
        %v746 = vld [vmem:[%s617 + $0xc] sm:$0xff]
        %v747 = vld [vmem:[%s617 + $0x14] sm:$0xf]
        %v748 = vld [vmem:[%s617 + $0x18] sm:$0xff]
        %v749 = vld [vmem:[%s617 + $0x20] sm:$0xf]
        %v750 = vld [vmem:[%s617 + $0x24] sm:$0xff]
        %v751 = vld [vmem:[%s617 + $0x2c] sm:$0xf]
        %v752 = vld [vmem:[%s617 + $0x30] sm:$0xff]
        %v753 = vld [vmem:[%s617 + $0x38] sm:$0xf]
        %v754 = vld [vmem:[%s617 + $0x3c] sm:$0xff]
        %v755 = vld [vmem:[%s617 + $0x44] sm:$0xf]
        %v756 = vld [vmem:[%s617 + $0x48] sm:$0xff]
        %v757 = vld [vmem:[%s617 + $0x50] sm:$0xf]
        %v758 = vld [vmem:[%s617 + $0x54] sm:$0xff]
        %v759 = vld [vmem:[%s617 + $0x5c] sm:$0xf]
        %v760 = vld [vmem:[%s617 + $0x60] sm:$0xff]
        %v761 = vld [vmem:[%s617 + $0x68] sm:$0xf]
        %v762 = vld [vmem:[%s617 + $0x6c] sm:$0xff]
        %v763 = vld [vmem:[%s617 + $0x74] sm:$0xf]
        %v764 = vld [vmem:[%s617 + $0x78] sm:$0xff]
        %v765 = vld [vmem:[%s617 + $0x80] sm:$0xf]
        %v766 = vld [vmem:[%s617 + $0x84] sm:$0xff]
        %v767 = vld [vmem:[%s617 + $0x8c] sm:$0xf]
        %v768 = vld [vmem:[%s617 + $0x90] sm:$0xff]
        %v769 = vld [vmem:[%s617 + $0x98] sm:$0xf]
        %v770 = vld [vmem:[%s617 + $0x9c] sm:$0xff]
        %v771 = vld [vmem:[%s617 + $0xa4] sm:$0xf]
        %v772 = vld [vmem:[%s617 + $0xa8] sm:$0xff]
        %v773 = vld [vmem:[%s617 + $0xb0] sm:$0xf]
        %v774 = vld [vmem:[%s617 + $0xb4] sm:$0xff]
        %v775 = vld [vmem:[%s617 + $0xbc] sm:$0xf]
        %v808 = vunpack.c.l.b16 %v744
        %v809 = vunpack.c.h.b16 %v744
        %v810 = vunpack.c.l.b16 %v745
        %v811 = vunpack.c.l.b16 %v746
        %v812 = vunpack.c.h.b16 %v746
        %v813 = vunpack.c.l.b16 %v747
        %v814 = vunpack.c.l.b16 %v748
        %v815 = vunpack.c.h.b16 %v748
        %v816 = vunpack.c.l.b16 %v749
        %v817 = vunpack.c.l.b16 %v750
        %v818 = vunpack.c.h.b16 %v750
        %v819 = vunpack.c.l.b16 %v751
        %v820 = vunpack.c.l.b16 %v752
        %v821 = vunpack.c.h.b16 %v752
        %v822 = vunpack.c.l.b16 %v753
        %v823 = vunpack.c.l.b16 %v754
        %v824 = vunpack.c.h.b16 %v754
        %v825 = vunpack.c.l.b16 %v755
        %v826 = vunpack.c.l.b16 %v756
        %v827 = vunpack.c.h.b16 %v756
        %v828 = vunpack.c.l.b16 %v757
        %v829 = vunpack.c.l.b16 %v758
        %v830 = vunpack.c.h.b16 %v758
        %v831 = vunpack.c.l.b16 %v759
        %v832 = vunpack.c.l.b16 %v760
        %v833 = vunpack.c.h.b16 %v760
        %v834 = vunpack.c.l.b16 %v761
        %v835 = vunpack.c.l.b16 %v762
        %v836 = vunpack.c.h.b16 %v762
        %v837 = vunpack.c.l.b16 %v763
        %v838 = vunpack.c.l.b16 %v764
        %v839 = vunpack.c.h.b16 %v764
        %v840 = vunpack.c.l.b16 %v765
        %v841 = vunpack.c.l.b16 %v766
        %v842 = vunpack.c.h.b16 %v766
        %v843 = vunpack.c.l.b16 %v767
        %v844 = vunpack.c.l.b16 %v768
        %v845 = vunpack.c.h.b16 %v768
        %v846 = vunpack.c.l.b16 %v769
        %v847 = vunpack.c.l.b16 %v770
        %v848 = vunpack.c.h.b16 %v770
        %v849 = vunpack.c.l.b16 %v771
        %v850 = vunpack.c.l.b16 %v772
        %v851 = vunpack.c.h.b16 %v772
        %v852 = vunpack.c.l.b16 %v773
        %v853 = vunpack.c.l.b16 %v774
        %v854 = vunpack.c.h.b16 %v774
        %v855 = vunpack.c.l.b16 %v775
        %v856 = vpack.c.b16 %v811, %v808
        %v857 = vpack.c.b16 %v812, %v809
        %v858 = vpack.c.b16 %v813, %v810
        %v859 = vpack.c.b16 %v817, %v814
        %v860 = vpack.c.b16 %v818, %v815
        %v861 = vpack.c.b16 %v819, %v816
        %v862 = vpack.c.b16 %v823, %v820
        %v863 = vpack.c.b16 %v824, %v821
        %v864 = vpack.c.b16 %v825, %v822
        %v865 = vpack.c.b16 %v829, %v826
        %v866 = vpack.c.b16 %v830, %v827
        %v867 = vpack.c.b16 %v831, %v828
        %v868 = vpack.c.b16 %v835, %v832
        %v869 = vpack.c.b16 %v836, %v833
        %v870 = vpack.c.b16 %v837, %v834
        %v871 = vpack.c.b16 %v841, %v838
        %v872 = vpack.c.b16 %v842, %v839
        %v873 = vpack.c.b16 %v843, %v840
        %v874 = vpack.c.b16 %v847, %v844
        %v875 = vpack.c.b16 %v848, %v845
        %v876 = vpack.c.b16 %v849, %v846
        %v877 = vpack.c.b16 %v853, %v850
        %v878 = vpack.c.b16 %v854, %v851
        %v879 = vpack.c.b16 %v855, %v852
        %904 = vmatprep.subr.bf16.mxu0 %v878
        %905 = vmatpush1.bf16.msra.mxu0 %v877
        %906 = vmatprep.subr.bf16.mxu0 %v875
        %907 = vmatpush1.bf16.msra.mxu0 %v874
        %908 = vmatprep.subr.bf16.mxu0 %v872
        %909 = vmatpush1.bf16.msra.mxu0 %v871
        %910 = vmatprep.subr.bf16.mxu0 %v869
        %911 = vmatpush1.bf16.msra.mxu0 %v868
        %912 = vmatprep.subr.bf16.mxu0 %v866
        %913 = vmatpush1.bf16.msra.mxu0 %v865
        %914 = vmatprep.subr.bf16.mxu0 %v863
        %915 = vmatpush1.bf16.msra.mxu0 %v862
        %916 = vmatprep.subr.bf16.mxu0 %v860
        %917 = vmatpush1.bf16.msra.mxu0 %v859
        %918 = vmatprep.subr.bf16.mxu0 %v857
        %919 = vmatpush1.bf16.msra.mxu0 %v856
        %920 = vmatprep.subr.bf16.mxu0 0
        %921 = vmatpush2.bf16.msra.mxu0 0
        %922 = vmatprep.subr.bf16.mxu0 0
        %923 = vmatpush2.bf16.msra.mxu0 0
        %924 = vmatprep.subr.bf16.mxu0 0
        %925 = vmatpush2.bf16.msra.mxu0 0
        %926 = vmatprep.subr.bf16.mxu0 0
        %927 = vmatpush2.bf16.msra.mxu0 0
        %928 = vmatprep.subr.bf16.mxu0 0
        %929 = vmatpush2.bf16.msra.mxu0 0
        %930 = vmatprep.subr.bf16.mxu0 0
        %931 = vmatpush2.bf16.msra.mxu0 0
        %932 = vmatprep.subr.bf16.mxu0 0
        %933 = vmatpush2.bf16.msra.mxu0 0
        %934 = vmatprep.subr.bf16.mxu0 0
        %935 = vmatpush2.bf16.msra.mxu0 0
        %936 = vmatprep.mubr.bf16.mxu0 0
        %937 = vmatmul.mubr.bf16.gmra.mxu0 %v742
        %v938 = vpop.f32.mrf.mxu0
        %v939 = vadd.f32 0.0, %v938
        %v940 = vpop.f32.mrf.mxu0
        %v941 = vadd.f32 0.0, %v940
        %v942 = vpop.f32.mrf.mxu0
        %v943 = vadd.f32 0.0, %v942
        %v944 = vpop.f32.mrf.mxu0
        %v945 = vadd.f32 0.0, %v944
        %946 = vmatprep.mubr.bf16.mxu0 0
        %947 = vmatmul.mubr.bf16.gmra.mxu0 %v743
        %v948 = vpop.f32.mrf.mxu0
        %v949 = vadd.f32 0.0, %v948
        %v950 = vpop.f32.mrf.mxu0
        %v951 = vadd.f32 0.0, %v950
        %v952 = vpop.f32.mrf.mxu0
        %v953 = vadd.f32 0.0, %v952
        %v954 = vpop.f32.mrf.mxu0
        %v955 = vadd.f32 0.0, %v954
        %956 = vdwg.mxu0
        %957 = vmatprep.subr.bf16.mxu0 0
        %958 = vmatpush1.bf16.msra.mxu0 %v879
        %959 = vmatprep.subr.bf16.mxu0 0
        %960 = vmatpush1.bf16.msra.mxu0 %v876
        %961 = vmatprep.subr.bf16.mxu0 0
        %962 = vmatpush1.bf16.msra.mxu0 %v873
        %963 = vmatprep.subr.bf16.mxu0 0
        %964 = vmatpush1.bf16.msra.mxu0 %v870
        %965 = vmatprep.subr.bf16.mxu0 0
        %966 = vmatpush1.bf16.msra.mxu0 %v867
        %967 = vmatprep.subr.bf16.mxu0 0
        %968 = vmatpush1.bf16.msra.mxu0 %v864
        %969 = vmatprep.subr.bf16.mxu0 0
        %970 = vmatpush1.bf16.msra.mxu0 %v861
        %971 = vmatprep.subr.bf16.mxu0 0
        %972 = vmatpush1.bf16.msra.mxu0 %v858
        %973 = vmatprep.subr.bf16.mxu0 0
        %974 = vmatpush2.bf16.msra.mxu0 0
        %975 = vmatprep.subr.bf16.mxu0 0
        %976 = vmatpush2.bf16.msra.mxu0 0
        %977 = vmatprep.subr.bf16.mxu0 0
        %978 = vmatpush2.bf16.msra.mxu0 0
        %979 = vmatprep.subr.bf16.mxu0 0
        %980 = vmatpush2.bf16.msra.mxu0 0
        %981 = vmatprep.subr.bf16.mxu0 0
        %982 = vmatpush2.bf16.msra.mxu0 0
        %983 = vmatprep.subr.bf16.mxu0 0
        %984 = vmatpush2.bf16.msra.mxu0 0
        %985 = vmatprep.subr.bf16.mxu0 0
        %986 = vmatpush2.bf16.msra.mxu0 0
        %987 = vmatprep.subr.bf16.mxu0 0
        %988 = vmatpush2.bf16.msra.mxu0 0
        %989 = vmatprep.mubr.bf16.mxu0 0
        %990 = vmatmul.mubr.bf16.gmra.mxu0 %v742
        %v991 = vpop.f32.mrf.mxu0
        %v992 = vadd.f32 0.0, %v991
        %v993 = vpop.f32.mrf.mxu0
        %v994 = vpop.f32.mrf.mxu0
        %v995 = vadd.f32 0.0, %v994
        %v996 = vpop.f32.mrf.mxu0
        %997 = vmatprep.mubr.bf16.mxu0 0
        %998 = vmatmul.mubr.bf16.gmra.mxu0 %v743
        %v999 = vpop.f32.mrf.mxu0
        %v1000 = vadd.f32 0.0, %v999
        %v1001 = vpop.f32.mrf.mxu0
        %v1002 = vpop.f32.mrf.mxu0
        %v1003 = vadd.f32 0.0, %v1002
        %v1004 = vpop.f32.mrf.mxu0
        %1005 = vdwg.mxu0
        %v1006 = vpack.c.bf16 %v943, %v939
        %v1007 = vpack.c.bf16 %v945, %v941
        %v1008 = vpack.c.bf16 %v995, %v992
        %1010 = vrot.lane.b32.xlu0 %v1006, 96
        %v1011 = vpop.permute.xlu0 %1010
        %1012 = vrot.lane.b32.xlu0 %v1006, 64
        %v1013 = vpop.permute.xlu0 %1012
        %1014 = vrot.lane.b32.xlu0 %v1006, 32
        %v1015 = vpop.permute.xlu0 %1014
        %1017 = vrot.lane.b32.xlu0 %v1007, 96
        %v1018 = vpop.permute.xlu0 %1017
        %1019 = vrot.lane.b32.xlu0 %v1007, 64
        %v1020 = vpop.permute.xlu0 %1019
        %1021 = vrot.lane.b32.xlu0 %v1007, 32
        %v1022 = vpop.permute.xlu0 %1021
        %1024 = vrot.lane.b32.xlu0 %v1008, 96
        %v1025 = vpop.permute.xlu0 %1024
        %1027 = vrot.lane.b32.xlu0 %v1008, 64
        %v1028 = vpop.permute.xlu0 %1027
        %1030 = vrot.lane.b32.xlu0 %v1008, 32
        %v1031 = vpop.permute.xlu0 %1030
        %vm1033 = vcmask 261120
        %v1035 = vsel %vm1033, %v1006, 0
        %v1038 = vsel %vm1033, %v1007, 0
        %1040 = vmatprep.subr.bf16.mxu0 0
        %1041 = vmatpush1.bf16.xpose.msra.mxu0 0
        %1042 = vmatprep.subr.bf16.mxu0 0
        %1043 = vmatpush1.bf16.xpose.msra.mxu0 0
        %1044 = vmatprep.subr.bf16.mxu0 0
        %1045 = vmatpush1.bf16.xpose.msra.mxu0 0
        %1046 = vmatprep.subr.bf16.mxu0 0
        %1047 = vmatpush1.bf16.xpose.msra.mxu0 0
        %1048 = vmatprep.subr.bf16.mxu0 0
        %1049 = vmatpush1.bf16.xpose.msra.mxu0 0
        %1050 = vmatprep.subr.bf16.mxu0 0
        %1051 = vmatpush1.bf16.xpose.msra.mxu0 0
        %1052 = vmatprep.subr.bf16.mxu0 0
        %1053 = vmatpush1.bf16.xpose.msra.mxu0 0
        %1054 = vmatprep.subr.bf16.mxu0 0
        %1055 = vmatpush1.bf16.xpose.msra.mxu0 %v1038
        %1056 = vmatprep.subr.bf16.mxu0 0
        %1057 = vmatpush2.bf16.xpose.msra.mxu0 0
        %1058 = vmatprep.subr.bf16.mxu0 0
        %1059 = vmatpush2.bf16.xpose.msra.mxu0 0
        %1060 = vmatprep.subr.bf16.mxu0 0
        %1061 = vmatpush2.bf16.xpose.msra.mxu0 0
        %1062 = vmatprep.subr.bf16.mxu0 0
        %1063 = vmatpush2.bf16.xpose.msra.mxu0 0
        %1064 = vmatprep.subr.bf16.mxu0 0
        %1065 = vmatpush2.bf16.xpose.msra.mxu0 0
        %1066 = vmatprep.subr.bf16.mxu0 0
        %1067 = vmatpush2.bf16.xpose.msra.mxu0 0
        %1068 = vmatprep.subr.bf16.mxu0 0
        %1069 = vmatpush2.bf16.xpose.msra.mxu0 0
        %1070 = vmatprep.subr.bf16.mxu0 0
        %1071 = vmatpush2.bf16.xpose.msra.mxu0 0
        %1072 = vmatprep.mubr.bf16.mxu0 0
        %1073 = vmatmul.mubr.bf16.gmra.mxu0 %v1035
        %v1074 = vpop.f32.mrf.mxu0
        %v1075 = vadd.f32 0.0, %v1074
        %v1076 = vpop.f32.mrf.mxu0
        %v1077 = vpop.f32.mrf.mxu0
        %v1078 = vadd.f32 0.0, %v1077
        %v1079 = vpop.f32.mrf.mxu0
        %1080 = vdwg.mxu0
        %v1082 = vsel %vm1033, %v1011, 0
        %v1085 = vsel %vm1033, %v1018, 0
        %1087 = vmatprep.subr.bf16.mxu0 0
        %1088 = vmatpush1.bf16.xpose.msra.mxu0 0
        %1089 = vmatprep.subr.bf16.mxu0 0
        %1090 = vmatpush1.bf16.xpose.msra.mxu0 0
        %1091 = vmatprep.subr.bf16.mxu0 0
        %1092 = vmatpush1.bf16.xpose.msra.mxu0 0
        %1093 = vmatprep.subr.bf16.mxu0 0
        %1094 = vmatpush1.bf16.xpose.msra.mxu0 0
        %1095 = vmatprep.subr.bf16.mxu0 0
        %1096 = vmatpush1.bf16.xpose.msra.mxu0 0
        %1097 = vmatprep.subr.bf16.mxu0 0
        %1098 = vmatpush1.bf16.xpose.msra.mxu0 0
        %1099 = vmatprep.subr.bf16.mxu0 0
        %1100 = vmatpush1.bf16.xpose.msra.mxu0 0
        %1101 = vmatprep.subr.bf16.mxu0 0
        %1102 = vmatpush1.bf16.xpose.msra.mxu0 %v1085
        %1103 = vmatprep.subr.bf16.mxu0 0
        %1104 = vmatpush2.bf16.xpose.msra.mxu0 0
        %1105 = vmatprep.subr.bf16.mxu0 0
        %1106 = vmatpush2.bf16.xpose.msra.mxu0 0
        %1107 = vmatprep.subr.bf16.mxu0 0
        %1108 = vmatpush2.bf16.xpose.msra.mxu0 0
        %1109 = vmatprep.subr.bf16.mxu0 0
        %1110 = vmatpush2.bf16.xpose.msra.mxu0 0
        %1111 = vmatprep.subr.bf16.mxu0 0
        %1112 = vmatpush2.bf16.xpose.msra.mxu0 0
        %1113 = vmatprep.subr.bf16.mxu0 0
        %1114 = vmatpush2.bf16.xpose.msra.mxu0 0
        %1115 = vmatprep.subr.bf16.mxu0 0
        %1116 = vmatpush2.bf16.xpose.msra.mxu0 0
        %1117 = vmatprep.subr.bf16.mxu0 0
        %1118 = vmatpush2.bf16.xpose.msra.mxu0 0
        %1119 = vmatprep.mubr.bf16.mxu0 0
        %1120 = vmatmul.mubr.bf16.gmra.mxu0 %v1082
        %v1121 = vpop.f32.mrf.mxu0
        %v1122 = vadd.f32 0.0, %v1121
        %v1123 = vpop.f32.mrf.mxu0
        %v1124 = vpop.f32.mrf.mxu0
        %v1125 = vadd.f32 0.0, %v1124
        %v1126 = vpop.f32.mrf.mxu0
        %1127 = vdwg.mxu0
        %v1129 = vsel %vm1033, %v1013, 0
        %v1132 = vsel %vm1033, %v1020, 0
        %1134 = vmatprep.subr.bf16.mxu0 0
        %1135 = vmatpush1.bf16.xpose.msra.mxu0 0
        %1136 = vmatprep.subr.bf16.mxu0 0
        %1137 = vmatpush1.bf16.xpose.msra.mxu0 0
        %1138 = vmatprep.subr.bf16.mxu0 0
        %1139 = vmatpush1.bf16.xpose.msra.mxu0 0
        %1140 = vmatprep.subr.bf16.mxu0 0
        %1141 = vmatpush1.bf16.xpose.msra.mxu0 0
        %1142 = vmatprep.subr.bf16.mxu0 0
        %1143 = vmatpush1.bf16.xpose.msra.mxu0 0
        %1144 = vmatprep.subr.bf16.mxu0 0
        %1145 = vmatpush1.bf16.xpose.msra.mxu0 0
        %1146 = vmatprep.subr.bf16.mxu0 0
        %1147 = vmatpush1.bf16.xpose.msra.mxu0 0
        %1148 = vmatprep.subr.bf16.mxu0 0
        %1149 = vmatpush1.bf16.xpose.msra.mxu0 %v1132
        %1150 = vmatprep.subr.bf16.mxu0 0
        %1151 = vmatpush2.bf16.xpose.msra.mxu0 0
        %1152 = vmatprep.subr.bf16.mxu0 0
        %1153 = vmatpush2.bf16.xpose.msra.mxu0 0
        %1154 = vmatprep.subr.bf16.mxu0 0
        %1155 = vmatpush2.bf16.xpose.msra.mxu0 0
        %1156 = vmatprep.subr.bf16.mxu0 0
        %1157 = vmatpush2.bf16.xpose.msra.mxu0 0
        %1158 = vmatprep.subr.bf16.mxu0 0
        %1159 = vmatpush2.bf16.xpose.msra.mxu0 0
        %1160 = vmatprep.subr.bf16.mxu0 0
        %1161 = vmatpush2.bf16.xpose.msra.mxu0 0
        %1162 = vmatprep.subr.bf16.mxu0 0
        %1163 = vmatpush2.bf16.xpose.msra.mxu0 0
        %1164 = vmatprep.subr.bf16.mxu0 0
        %1165 = vmatpush2.bf16.xpose.msra.mxu0 0
        %1166 = vmatprep.mubr.bf16.mxu0 0
        %1167 = vmatmul.mubr.bf16.gmra.mxu0 %v1129
        %v1168 = vpop.f32.mrf.mxu0
        %v1169 = vadd.f32 0.0, %v1168
        %v1170 = vpop.f32.mrf.mxu0
        %v1171 = vpop.f32.mrf.mxu0
        %v1172 = vadd.f32 0.0, %v1171
        %v1173 = vpop.f32.mrf.mxu0
        %1174 = vdwg.mxu0
        %v1176 = vsel %vm1033, %v1015, 0
        %v1179 = vsel %vm1033, %v1022, 0
        %1181 = vmatprep.subr.bf16.mxu0 0
        %1182 = vmatpush1.bf16.xpose.msra.mxu0 0
        %1183 = vmatprep.subr.bf16.mxu0 0
        %1184 = vmatpush1.bf16.xpose.msra.mxu0 0
        %1185 = vmatprep.subr.bf16.mxu0 0
        %1186 = vmatpush1.bf16.xpose.msra.mxu0 0
        %1187 = vmatprep.subr.bf16.mxu0 0
        %1188 = vmatpush1.bf16.xpose.msra.mxu0 0
        %1189 = vmatprep.subr.bf16.mxu0 0
        %1190 = vmatpush1.bf16.xpose.msra.mxu0 0
        %1191 = vmatprep.subr.bf16.mxu0 0
        %1192 = vmatpush1.bf16.xpose.msra.mxu0 0
        %1193 = vmatprep.subr.bf16.mxu0 0
        %1194 = vmatpush1.bf16.xpose.msra.mxu0 0
        %1195 = vmatprep.subr.bf16.mxu0 0
        %1196 = vmatpush1.bf16.xpose.msra.mxu0 %v1179
        %1197 = vmatprep.subr.bf16.mxu0 0
        %1198 = vmatpush2.bf16.xpose.msra.mxu0 0
        %1199 = vmatprep.subr.bf16.mxu0 0
        %1200 = vmatpush2.bf16.xpose.msra.mxu0 0
        %1201 = vmatprep.subr.bf16.mxu0 0
        %1202 = vmatpush2.bf16.xpose.msra.mxu0 0
        %1203 = vmatprep.subr.bf16.mxu0 0
        %1204 = vmatpush2.bf16.xpose.msra.mxu0 0
        %1205 = vmatprep.subr.bf16.mxu0 0
        %1206 = vmatpush2.bf16.xpose.msra.mxu0 0
        %1207 = vmatprep.subr.bf16.mxu0 0
        %1208 = vmatpush2.bf16.xpose.msra.mxu0 0
        %1209 = vmatprep.subr.bf16.mxu0 0
        %1210 = vmatpush2.bf16.xpose.msra.mxu0 0
        %1211 = vmatprep.subr.bf16.mxu0 0
        %1212 = vmatpush2.bf16.xpose.msra.mxu0 0
        %1213 = vmatprep.mubr.bf16.mxu0 0
        %1214 = vmatmul.mubr.bf16.gmra.mxu0 %v1176
        %v1215 = vpop.f32.mrf.mxu0
        %v1216 = vadd.f32 0.0, %v1215
        %v1217 = vpop.f32.mrf.mxu0
        %v1218 = vpop.f32.mrf.mxu0
        %v1219 = vadd.f32 0.0, %v1218
        %v1220 = vpop.f32.mrf.mxu0
        %1221 = vdwg.mxu0
        %vm1222 = vcmask 130048
        %v1223 = vsel %vm1222, %v1075, -inf
        %1224 = vmax.xlane.f32.xlu0 %v1223
        %v1225 = vpop.xlane.xlu0 %1224
        %v1226 = vsel %vm1222, %v1078, -inf
        %1227 = vmax.xlane.f32.xlu0 %v1226
        %v1228 = vpop.xlane.xlu0 %1227
        %v1229 = vsel %vm1222, %v1122, -inf
        %1230 = vmax.xlane.f32.xlu0 %v1229
        %v1231 = vpop.xlane.xlu0 %1230
        %v1232 = vsel %vm1222, %v1125, -inf
        %1233 = vmax.xlane.f32.xlu0 %v1232
        %v1234 = vpop.xlane.xlu0 %1233
        %v1235 = vsel %vm1222, %v1169, -inf
        %1236 = vmax.xlane.f32.xlu0 %v1235
        %v1237 = vpop.xlane.xlu0 %1236
        %v1238 = vsel %vm1222, %v1172, -inf
        %1239 = vmax.xlane.f32.xlu0 %v1238
        %v1240 = vpop.xlane.xlu0 %1239
        %v1241 = vsel %vm1222, %v1216, -inf
        %1242 = vmax.xlane.f32.xlu0 %v1241
        %v1243 = vpop.xlane.xlu0 %1242
        %v1244 = vsel %vm1222, %v1219, -inf
        %1245 = vmax.xlane.f32.xlu0 %v1244
        %v1246 = vpop.xlane.xlu0 %1245
        %v1247 = vsub.f32 %v1075, %v1225
        %v1248 = vsub.f32 %v1078, %v1228
        %v1249 = vsub.f32 %v1122, %v1231
        %v1250 = vsub.f32 %v1125, %v1234
        %v1251 = vsub.f32 %v1169, %v1237
        %v1252 = vsub.f32 %v1172, %v1240
        %v1253 = vsub.f32 %v1216, %v1243
        %v1254 = vsub.f32 %v1219, %v1246
        %v1255 = vmul.f32 %v1247, 1.442695
        %v1256 = vpow.pop %v1255
        %v1257 = vmul.f32 %v1248, 1.442695
        %v1258 = vpow.pop %v1257
        %v1259 = vmul.f32 %v1249, 1.442695
        %v1260 = vpow.pop %v1259
        %v1261 = vmul.f32 %v1250, 1.442695
        %v1262 = vpow.pop %v1261
        %v1263 = vmul.f32 %v1251, 1.442695
        %v1264 = vpow.pop %v1263
        %v1265 = vmul.f32 %v1252, 1.442695
        %v1266 = vpow.pop %v1265
        %v1267 = vmul.f32 %v1253, 1.442695
        %v1268 = vpow.pop %v1267
        %v1269 = vmul.f32 %v1254, 1.442695
        %v1270 = vpow.pop %v1269
        %v1271 = vsel %vm1222, %v1256, 0.0
        %1272 = vadd.xlane.f32.xlu0 %v1271
        %v1273 = vpop.xlane.xlu0 %1272
        %v1274 = vsel %vm1222, %v1258, 0.0
        %1275 = vadd.xlane.f32.xlu0 %v1274
        %v1276 = vpop.xlane.xlu0 %1275
        %v1277 = vsel %vm1222, %v1260, 0.0
        %1278 = vadd.xlane.f32.xlu0 %v1277
        %v1279 = vpop.xlane.xlu0 %1278
        %v1280 = vsel %vm1222, %v1262, 0.0
        %1281 = vadd.xlane.f32.xlu0 %v1280
        %v1282 = vpop.xlane.xlu0 %1281
        %v1283 = vsel %vm1222, %v1264, 0.0
        %1284 = vadd.xlane.f32.xlu0 %v1283
        %v1285 = vpop.xlane.xlu0 %1284
        %v1286 = vsel %vm1222, %v1266, 0.0
        %1287 = vadd.xlane.f32.xlu0 %v1286
        %v1288 = vpop.xlane.xlu0 %1287
        %v1289 = vsel %vm1222, %v1268, 0.0
        %1290 = vadd.xlane.f32.xlu0 %v1289
        %v1291 = vpop.xlane.xlu0 %1290
        %v1292 = vsel %vm1222, %v1270, 0.0
        %1293 = vadd.xlane.f32.xlu0 %v1292
        %v1294 = vpop.xlane.xlu0 %1293
        %v1295 = vrcp.pop %v1273
        %v1296 = vrcp.pop %v1276
        %v1297 = vrcp.pop %v1279
        %v1298 = vrcp.pop %v1282
        %v1299 = vrcp.pop %v1285
        %v1300 = vrcp.pop %v1288
        %v1301 = vrcp.pop %v1291
        %v1302 = vrcp.pop %v1294
        %v1303 = vmul.f32 %v1256, %v1295
        %v1304 = vmul.f32 %v1258, %v1296
        %v1305 = vmul.f32 %v1260, %v1297
        %v1306 = vmul.f32 %v1262, %v1298
        %v1307 = vmul.f32 %v1264, %v1299
        %v1308 = vmul.f32 %v1266, %v1300
        %v1309 = vmul.f32 %v1268, %v1301
        %v1310 = vmul.f32 %v1270, %v1302
        %v1311 = vpack.c.bf16 %v1304, %v1303
        %v1312 = vpack.c.bf16 %v1306, %v1305
        %v1313 = vpack.c.bf16 %v1308, %v1307
        %v1314 = vpack.c.bf16 %v1310, %v1309
        %v1316 = vsel %vm1222, %v1311, 0
        %1318 = vmatprep.subr.bf16.mxu0 0
        %1319 = vmatpush1.bf16.msra.mxu0 0
        %1320 = vmatprep.subr.bf16.mxu0 0
        %1321 = vmatpush1.bf16.msra.mxu0 0
        %1322 = vmatprep.subr.bf16.mxu0 0
        %1323 = vmatpush1.bf16.msra.mxu0 0
        %1324 = vmatprep.subr.bf16.mxu0 0
        %1325 = vmatpush1.bf16.msra.mxu0 0
        %1326 = vmatprep.subr.bf16.mxu0 0
        %1327 = vmatpush1.bf16.msra.mxu0 0
        %1328 = vmatprep.subr.bf16.mxu0 0
        %1329 = vmatpush1.bf16.msra.mxu0 0
        %1330 = vmatprep.subr.bf16.mxu0 0
        %1331 = vmatpush1.bf16.msra.mxu0 0
        %1332 = vmatprep.subr.bf16.mxu0 0
        %1333 = vmatpush1.bf16.msra.mxu0 %v1008
        %1334 = vmatprep.subr.bf16.mxu0 0
        %1335 = vmatpush2.bf16.msra.mxu0 0
        %1336 = vmatprep.subr.bf16.mxu0 0
        %1337 = vmatpush2.bf16.msra.mxu0 0
        %1338 = vmatprep.subr.bf16.mxu0 0
        %1339 = vmatpush2.bf16.msra.mxu0 0
        %1340 = vmatprep.subr.bf16.mxu0 0
        %1341 = vmatpush2.bf16.msra.mxu0 0
        %1342 = vmatprep.subr.bf16.mxu0 0
        %1343 = vmatpush2.bf16.msra.mxu0 0
        %1344 = vmatprep.subr.bf16.mxu0 0
        %1345 = vmatpush2.bf16.msra.mxu0 0
        %1346 = vmatprep.subr.bf16.mxu0 0
        %1347 = vmatpush2.bf16.msra.mxu0 0
        %1348 = vmatprep.subr.bf16.mxu0 0
        %1349 = vmatpush2.bf16.msra.mxu0 0
        %1350 = vmatprep.mubr.bf16.mxu0 0
        %1351 = vmatmul.mubr.bf16.gmra.mxu0 %v1316
        %v1352 = vpop.f32.mrf.mxu0
        %v1353 = vadd.f32 0.0, %v1352
        %v1354 = vpop.f32.mrf.mxu0
        %v1355 = vpop.f32.mrf.mxu0
        %v1356 = vadd.f32 0.0, %v1355
        %v1357 = vpop.f32.mrf.mxu0
        %1358 = vdwg.mxu0
        %v1360 = vsel %vm1222, %v1312, 0
        %1362 = vmatprep.subr.bf16.mxu0 0
        %1363 = vmatpush1.bf16.msra.mxu0 0
        %1364 = vmatprep.subr.bf16.mxu0 0
        %1365 = vmatpush1.bf16.msra.mxu0 0
        %1366 = vmatprep.subr.bf16.mxu0 0
        %1367 = vmatpush1.bf16.msra.mxu0 0
        %1368 = vmatprep.subr.bf16.mxu0 0
        %1369 = vmatpush1.bf16.msra.mxu0 0
        %1370 = vmatprep.subr.bf16.mxu0 0
        %1371 = vmatpush1.bf16.msra.mxu0 0
        %1372 = vmatprep.subr.bf16.mxu0 0
        %1373 = vmatpush1.bf16.msra.mxu0 0
        %1374 = vmatprep.subr.bf16.mxu0 0
        %1375 = vmatpush1.bf16.msra.mxu0 0
        %1376 = vmatprep.subr.bf16.mxu0 0
        %1377 = vmatpush1.bf16.msra.mxu0 %v1025
        %1378 = vmatprep.subr.bf16.mxu0 0
        %1379 = vmatpush2.bf16.msra.mxu0 0
        %1380 = vmatprep.subr.bf16.mxu0 0
        %1381 = vmatpush2.bf16.msra.mxu0 0
        %1382 = vmatprep.subr.bf16.mxu0 0
        %1383 = vmatpush2.bf16.msra.mxu0 0
        %1384 = vmatprep.subr.bf16.mxu0 0
        %1385 = vmatpush2.bf16.msra.mxu0 0
        %1386 = vmatprep.subr.bf16.mxu0 0
        %1387 = vmatpush2.bf16.msra.mxu0 0
        %1388 = vmatprep.subr.bf16.mxu0 0
        %1389 = vmatpush2.bf16.msra.mxu0 0
        %1390 = vmatprep.subr.bf16.mxu0 0
        %1391 = vmatpush2.bf16.msra.mxu0 0
        %1392 = vmatprep.subr.bf16.mxu0 0
        %1393 = vmatpush2.bf16.msra.mxu0 0
        %1394 = vmatprep.mubr.bf16.mxu0 0
        %1395 = vmatmul.mubr.bf16.gmra.mxu0 %v1360
        %v1396 = vpop.f32.mrf.mxu0
        %v1397 = vadd.f32 0.0, %v1396
        %v1398 = vpop.f32.mrf.mxu0
        %v1399 = vpop.f32.mrf.mxu0
        %v1400 = vadd.f32 0.0, %v1399
        %v1401 = vpop.f32.mrf.mxu0
        %1402 = vdwg.mxu0
        %v1404 = vsel %vm1222, %v1313, 0
        %1406 = vmatprep.subr.bf16.mxu0 0
        %1407 = vmatpush1.bf16.msra.mxu0 0
        %1408 = vmatprep.subr.bf16.mxu0 0
        %1409 = vmatpush1.bf16.msra.mxu0 0
        %1410 = vmatprep.subr.bf16.mxu0 0
        %1411 = vmatpush1.bf16.msra.mxu0 0
        %1412 = vmatprep.subr.bf16.mxu0 0
        %1413 = vmatpush1.bf16.msra.mxu0 0
        %1414 = vmatprep.subr.bf16.mxu0 0
        %1415 = vmatpush1.bf16.msra.mxu0 0
        %1416 = vmatprep.subr.bf16.mxu0 0
        %1417 = vmatpush1.bf16.msra.mxu0 0
        %1418 = vmatprep.subr.bf16.mxu0 0
        %1419 = vmatpush1.bf16.msra.mxu0 0
        %1420 = vmatprep.subr.bf16.mxu0 0
        %1421 = vmatpush1.bf16.msra.mxu0 %v1028
        %1422 = vmatprep.subr.bf16.mxu0 0
        %1423 = vmatpush2.bf16.msra.mxu0 0
        %1424 = vmatprep.subr.bf16.mxu0 0
        %1425 = vmatpush2.bf16.msra.mxu0 0
        %1426 = vmatprep.subr.bf16.mxu0 0
        %1427 = vmatpush2.bf16.msra.mxu0 0
        %1428 = vmatprep.subr.bf16.mxu0 0
        %1429 = vmatpush2.bf16.msra.mxu0 0
        %1430 = vmatprep.subr.bf16.mxu0 0
        %1431 = vmatpush2.bf16.msra.mxu0 0
        %1432 = vmatprep.subr.bf16.mxu0 0
        %1433 = vmatpush2.bf16.msra.mxu0 0
        %1434 = vmatprep.subr.bf16.mxu0 0
        %1435 = vmatpush2.bf16.msra.mxu0 0
        %1436 = vmatprep.subr.bf16.mxu0 0
        %1437 = vmatpush2.bf16.msra.mxu0 0
        %1438 = vmatprep.mubr.bf16.mxu0 0
        %1439 = vmatmul.mubr.bf16.gmra.mxu0 %v1404
        %v1440 = vpop.f32.mrf.mxu0
        %v1441 = vadd.f32 0.0, %v1440
        %v1442 = vpop.f32.mrf.mxu0
        %v1443 = vpop.f32.mrf.mxu0
        %v1444 = vadd.f32 0.0, %v1443
        %v1445 = vpop.f32.mrf.mxu0
        %1446 = vdwg.mxu0
        %v1448 = vsel %vm1222, %v1314, 0
        %1450 = vmatprep.subr.bf16.mxu0 0
        %1451 = vmatpush1.bf16.msra.mxu0 0
        %1452 = vmatprep.subr.bf16.mxu0 0
        %1453 = vmatpush1.bf16.msra.mxu0 0
        %1454 = vmatprep.subr.bf16.mxu0 0
        %1455 = vmatpush1.bf16.msra.mxu0 0
        %1456 = vmatprep.subr.bf16.mxu0 0
        %1457 = vmatpush1.bf16.msra.mxu0 0
        %1458 = vmatprep.subr.bf16.mxu0 0
        %1459 = vmatpush1.bf16.msra.mxu0 0
        %1460 = vmatprep.subr.bf16.mxu0 0
        %1461 = vmatpush1.bf16.msra.mxu0 0
        %1462 = vmatprep.subr.bf16.mxu0 0
        %1463 = vmatpush1.bf16.msra.mxu0 0
        %1464 = vmatprep.subr.bf16.mxu0 0
        %1465 = vmatpush1.bf16.msra.mxu0 %v1031
        %1466 = vmatprep.subr.bf16.mxu0 0
        %1467 = vmatpush2.bf16.msra.mxu0 0
        %1468 = vmatprep.subr.bf16.mxu0 0
        %1469 = vmatpush2.bf16.msra.mxu0 0
        %1470 = vmatprep.subr.bf16.mxu0 0
        %1471 = vmatpush2.bf16.msra.mxu0 0
        %1472 = vmatprep.subr.bf16.mxu0 0
        %1473 = vmatpush2.bf16.msra.mxu0 0
        %1474 = vmatprep.subr.bf16.mxu0 0
        %1475 = vmatpush2.bf16.msra.mxu0 0
        %1476 = vmatprep.subr.bf16.mxu0 0
        %1477 = vmatpush2.bf16.msra.mxu0 0
        %1478 = vmatprep.subr.bf16.mxu0 0
        %1479 = vmatpush2.bf16.msra.mxu0 0
        %1480 = vmatprep.subr.bf16.mxu0 0
        %1481 = vmatpush2.bf16.msra.mxu0 0
        %1482 = vmatprep.mubr.bf16.mxu0 0
        %1483 = vmatmul.mubr.bf16.gmra.mxu0 %v1448
        %v1484 = vpop.f32.mrf.mxu0
        %v1485 = vadd.f32 0.0, %v1484
        %v1486 = vpop.f32.mrf.mxu0
        %v1487 = vpop.f32.mrf.mxu0
        %v1488 = vadd.f32 0.0, %v1487
        %v1489 = vpop.f32.mrf.mxu0
        %1490 = vdwg.mxu0
        %v1491 = vpack.c.bf16 %v1356, %v1353
        %v1492 = vpack.c.bf16 %v1400, %v1397
        %v1493 = vpack.c.bf16 %v1444, %v1441
        %v1494 = vpack.c.bf16 %v1488, %v1485
        %1496 = vrot.lane.b32.xlu0 %v1492, 32
        %v1497 = vpop.permute.xlu0 %1496
        %1499 = vrot.lane.b32.xlu0 %v1493, 64
        %v1500 = vpop.permute.xlu0 %1499
        %1502 = vrot.lane.b32.xlu0 %v1494, 96
        %v1503 = vpop.permute.xlu0 %1502
        %v1506 = vsel %vm1033, %v1491, %v1497
        %vm1507 = vcmask 523264
        %v1509 = vsel %vm1507, %v1506, %v1500
        %vm1510 = vcmask 785408
        %v1512 = vsel %vm1510, %v1509, %v1503
        %v1514 = vpack.c.bf16 %v953, %v949
        %v1515 = vpack.c.bf16 %v955, %v951
        %v1516 = vpack.c.bf16 %v1003, %v1000
        %1518 = vrot.lane.b32.xlu0 %v1514, 96
        %v1519 = vpop.permute.xlu0 %1518
        %1520 = vrot.lane.b32.xlu0 %v1514, 64
        %v1521 = vpop.permute.xlu0 %1520
        %1522 = vrot.lane.b32.xlu0 %v1514, 32
        %v1523 = vpop.permute.xlu0 %1522
        %1525 = vrot.lane.b32.xlu0 %v1515, 96
        %v1526 = vpop.permute.xlu0 %1525
        %1527 = vrot.lane.b32.xlu0 %v1515, 64
        %v1528 = vpop.permute.xlu0 %1527
        %1529 = vrot.lane.b32.xlu0 %v1515, 32
        %v1530 = vpop.permute.xlu0 %1529
        %1532 = vrot.lane.b32.xlu0 %v1516, 96
        %v1533 = vpop.permute.xlu0 %1532
        %1535 = vrot.lane.b32.xlu0 %v1516, 64
        %v1536 = vpop.permute.xlu0 %1535
        %1538 = vrot.lane.b32.xlu0 %v1516, 32
        %v1539 = vpop.permute.xlu0 %1538
        %v1542 = vsel %vm1033, %v1514, 0
        %v1545 = vsel %vm1033, %v1515, 0
        %1547 = vmatprep.subr.bf16.mxu0 0
        %1548 = vmatpush1.bf16.xpose.msra.mxu0 0
        %1549 = vmatprep.subr.bf16.mxu0 0
        %1550 = vmatpush1.bf16.xpose.msra.mxu0 0
        %1551 = vmatprep.subr.bf16.mxu0 0
        %1552 = vmatpush1.bf16.xpose.msra.mxu0 0
        %1553 = vmatprep.subr.bf16.mxu0 0
        %1554 = vmatpush1.bf16.xpose.msra.mxu0 0
        %1555 = vmatprep.subr.bf16.mxu0 0
        %1556 = vmatpush1.bf16.xpose.msra.mxu0 0
        %1557 = vmatprep.subr.bf16.mxu0 0
        %1558 = vmatpush1.bf16.xpose.msra.mxu0 0
        %1559 = vmatprep.subr.bf16.mxu0 0
        %1560 = vmatpush1.bf16.xpose.msra.mxu0 0
        %1561 = vmatprep.subr.bf16.mxu0 0
        %1562 = vmatpush1.bf16.xpose.msra.mxu0 %v1545
        %1563 = vmatprep.subr.bf16.mxu0 0
        %1564 = vmatpush2.bf16.xpose.msra.mxu0 0
        %1565 = vmatprep.subr.bf16.mxu0 0
        %1566 = vmatpush2.bf16.xpose.msra.mxu0 0
        %1567 = vmatprep.subr.bf16.mxu0 0
        %1568 = vmatpush2.bf16.xpose.msra.mxu0 0
        %1569 = vmatprep.subr.bf16.mxu0 0
        %1570 = vmatpush2.bf16.xpose.msra.mxu0 0
        %1571 = vmatprep.subr.bf16.mxu0 0
        %1572 = vmatpush2.bf16.xpose.msra.mxu0 0
        %1573 = vmatprep.subr.bf16.mxu0 0
        %1574 = vmatpush2.bf16.xpose.msra.mxu0 0
        %1575 = vmatprep.subr.bf16.mxu0 0
        %1576 = vmatpush2.bf16.xpose.msra.mxu0 0
        %1577 = vmatprep.subr.bf16.mxu0 0
        %1578 = vmatpush2.bf16.xpose.msra.mxu0 0
        %1579 = vmatprep.mubr.bf16.mxu0 0
        %1580 = vmatmul.mubr.bf16.gmra.mxu0 %v1542
        %v1581 = vpop.f32.mrf.mxu0
        %v1582 = vadd.f32 0.0, %v1581
        %v1583 = vpop.f32.mrf.mxu0
        %v1584 = vpop.f32.mrf.mxu0
        %v1585 = vadd.f32 0.0, %v1584
        %v1586 = vpop.f32.mrf.mxu0
        %1587 = vdwg.mxu0
        %v1589 = vsel %vm1033, %v1519, 0
        %v1592 = vsel %vm1033, %v1526, 0
        %1594 = vmatprep.subr.bf16.mxu0 0
        %1595 = vmatpush1.bf16.xpose.msra.mxu0 0
        %1596 = vmatprep.subr.bf16.mxu0 0
        %1597 = vmatpush1.bf16.xpose.msra.mxu0 0
        %1598 = vmatprep.subr.bf16.mxu0 0
        %1599 = vmatpush1.bf16.xpose.msra.mxu0 0
        %1600 = vmatprep.subr.bf16.mxu0 0
        %1601 = vmatpush1.bf16.xpose.msra.mxu0 0
        %1602 = vmatprep.subr.bf16.mxu0 0
        %1603 = vmatpush1.bf16.xpose.msra.mxu0 0
        %1604 = vmatprep.subr.bf16.mxu0 0
        %1605 = vmatpush1.bf16.xpose.msra.mxu0 0
        %1606 = vmatprep.subr.bf16.mxu0 0
        %1607 = vmatpush1.bf16.xpose.msra.mxu0 0
        %1608 = vmatprep.subr.bf16.mxu0 0
        %1609 = vmatpush1.bf16.xpose.msra.mxu0 %v1592
        %1610 = vmatprep.subr.bf16.mxu0 0
        %1611 = vmatpush2.bf16.xpose.msra.mxu0 0
        %1612 = vmatprep.subr.bf16.mxu0 0
        %1613 = vmatpush2.bf16.xpose.msra.mxu0 0
        %1614 = vmatprep.subr.bf16.mxu0 0
        %1615 = vmatpush2.bf16.xpose.msra.mxu0 0
        %1616 = vmatprep.subr.bf16.mxu0 0
        %1617 = vmatpush2.bf16.xpose.msra.mxu0 0
        %1618 = vmatprep.subr.bf16.mxu0 0
        %1619 = vmatpush2.bf16.xpose.msra.mxu0 0
        %1620 = vmatprep.subr.bf16.mxu0 0
        %1621 = vmatpush2.bf16.xpose.msra.mxu0 0
        %1622 = vmatprep.subr.bf16.mxu0 0
        %1623 = vmatpush2.bf16.xpose.msra.mxu0 0
        %1624 = vmatprep.subr.bf16.mxu0 0
        %1625 = vmatpush2.bf16.xpose.msra.mxu0 0
        %1626 = vmatprep.mubr.bf16.mxu0 0
        %1627 = vmatmul.mubr.bf16.gmra.mxu0 %v1589
        %v1628 = vpop.f32.mrf.mxu0
        %v1629 = vadd.f32 0.0, %v1628
        %v1630 = vpop.f32.mrf.mxu0
        %v1631 = vpop.f32.mrf.mxu0
        %v1632 = vadd.f32 0.0, %v1631
        %v1633 = vpop.f32.mrf.mxu0
        %1634 = vdwg.mxu0
        %v1636 = vsel %vm1033, %v1521, 0
        %v1639 = vsel %vm1033, %v1528, 0
        %1641 = vmatprep.subr.bf16.mxu0 0
        %1642 = vmatpush1.bf16.xpose.msra.mxu0 0
        %1643 = vmatprep.subr.bf16.mxu0 0
        %1644 = vmatpush1.bf16.xpose.msra.mxu0 0
        %1645 = vmatprep.subr.bf16.mxu0 0
        %1646 = vmatpush1.bf16.xpose.msra.mxu0 0
        %1647 = vmatprep.subr.bf16.mxu0 0
        %1648 = vmatpush1.bf16.xpose.msra.mxu0 0
        %1649 = vmatprep.subr.bf16.mxu0 0
        %1650 = vmatpush1.bf16.xpose.msra.mxu0 0
        %1651 = vmatprep.subr.bf16.mxu0 0
        %1652 = vmatpush1.bf16.xpose.msra.mxu0 0
        %1653 = vmatprep.subr.bf16.mxu0 0
        %1654 = vmatpush1.bf16.xpose.msra.mxu0 0
        %1655 = vmatprep.subr.bf16.mxu0 0
        %1656 = vmatpush1.bf16.xpose.msra.mxu0 %v1639
        %1657 = vmatprep.subr.bf16.mxu0 0
        %1658 = vmatpush2.bf16.xpose.msra.mxu0 0
        %1659 = vmatprep.subr.bf16.mxu0 0
        %1660 = vmatpush2.bf16.xpose.msra.mxu0 0
        %1661 = vmatprep.subr.bf16.mxu0 0
        %1662 = vmatpush2.bf16.xpose.msra.mxu0 0
        %1663 = vmatprep.subr.bf16.mxu0 0
        %1664 = vmatpush2.bf16.xpose.msra.mxu0 0
        %1665 = vmatprep.subr.bf16.mxu0 0
        %1666 = vmatpush2.bf16.xpose.msra.mxu0 0
        %1667 = vmatprep.subr.bf16.mxu0 0
        %1668 = vmatpush2.bf16.xpose.msra.mxu0 0
        %1669 = vmatprep.subr.bf16.mxu0 0
        %1670 = vmatpush2.bf16.xpose.msra.mxu0 0
        %1671 = vmatprep.subr.bf16.mxu0 0
        %1672 = vmatpush2.bf16.xpose.msra.mxu0 0
        %1673 = vmatprep.mubr.bf16.mxu0 0
        %1674 = vmatmul.mubr.bf16.gmra.mxu0 %v1636
        %v1675 = vpop.f32.mrf.mxu0
        %v1676 = vadd.f32 0.0, %v1675
        %v1677 = vpop.f32.mrf.mxu0
        %v1678 = vpop.f32.mrf.mxu0
        %v1679 = vadd.f32 0.0, %v1678
        %v1680 = vpop.f32.mrf.mxu0
        %1681 = vdwg.mxu0
        %v1683 = vsel %vm1033, %v1523, 0
        %v1686 = vsel %vm1033, %v1530, 0
        %1688 = vmatprep.subr.bf16.mxu0 0
        %1689 = vmatpush1.bf16.xpose.msra.mxu0 0
        %1690 = vmatprep.subr.bf16.mxu0 0
        %1691 = vmatpush1.bf16.xpose.msra.mxu0 0
        %1692 = vmatprep.subr.bf16.mxu0 0
        %1693 = vmatpush1.bf16.xpose.msra.mxu0 0
        %1694 = vmatprep.subr.bf16.mxu0 0
        %1695 = vmatpush1.bf16.xpose.msra.mxu0 0
        %1696 = vmatprep.subr.bf16.mxu0 0
        %1697 = vmatpush1.bf16.xpose.msra.mxu0 0
        %1698 = vmatprep.subr.bf16.mxu0 0
        %1699 = vmatpush1.bf16.xpose.msra.mxu0 0
        %1700 = vmatprep.subr.bf16.mxu0 0
        %1701 = vmatpush1.bf16.xpose.msra.mxu0 0
        %1702 = vmatprep.subr.bf16.mxu0 0
        %1703 = vmatpush1.bf16.xpose.msra.mxu0 %v1686
        %1704 = vmatprep.subr.bf16.mxu0 0
        %1705 = vmatpush2.bf16.xpose.msra.mxu0 0
        %1706 = vmatprep.subr.bf16.mxu0 0
        %1707 = vmatpush2.bf16.xpose.msra.mxu0 0
        %1708 = vmatprep.subr.bf16.mxu0 0
        %1709 = vmatpush2.bf16.xpose.msra.mxu0 0
        %1710 = vmatprep.subr.bf16.mxu0 0
        %1711 = vmatpush2.bf16.xpose.msra.mxu0 0
        %1712 = vmatprep.subr.bf16.mxu0 0
        %1713 = vmatpush2.bf16.xpose.msra.mxu0 0
        %1714 = vmatprep.subr.bf16.mxu0 0
        %1715 = vmatpush2.bf16.xpose.msra.mxu0 0
        %1716 = vmatprep.subr.bf16.mxu0 0
        %1717 = vmatpush2.bf16.xpose.msra.mxu0 0
        %1718 = vmatprep.subr.bf16.mxu0 0
        %1719 = vmatpush2.bf16.xpose.msra.mxu0 0
        %1720 = vmatprep.mubr.bf16.mxu0 0
        %1721 = vmatmul.mubr.bf16.gmra.mxu0 %v1683
        %v1722 = vpop.f32.mrf.mxu0
        %v1723 = vadd.f32 0.0, %v1722
        %v1724 = vpop.f32.mrf.mxu0
        %v1725 = vpop.f32.mrf.mxu0
        %v1726 = vadd.f32 0.0, %v1725
        %v1727 = vpop.f32.mrf.mxu0
        %1728 = vdwg.mxu0
        %v1729 = vsel %vm1222, %v1582, -inf
        %1730 = vmax.xlane.f32.xlu0 %v1729
        %v1731 = vpop.xlane.xlu0 %1730
        %v1732 = vsel %vm1222, %v1585, -inf
        %1733 = vmax.xlane.f32.xlu0 %v1732
        %v1734 = vpop.xlane.xlu0 %1733
        %v1735 = vsel %vm1222, %v1629, -inf
        %1736 = vmax.xlane.f32.xlu0 %v1735
        %v1737 = vpop.xlane.xlu0 %1736
        %v1738 = vsel %vm1222, %v1632, -inf
        %1739 = vmax.xlane.f32.xlu0 %v1738
        %v1740 = vpop.xlane.xlu0 %1739
        %v1741 = vsel %vm1222, %v1676, -inf
        %1742 = vmax.xlane.f32.xlu0 %v1741
        %v1743 = vpop.xlane.xlu0 %1742
        %v1744 = vsel %vm1222, %v1679, -inf
        %1745 = vmax.xlane.f32.xlu0 %v1744
        %v1746 = vpop.xlane.xlu0 %1745
        %v1747 = vsel %vm1222, %v1723, -inf
        %1748 = vmax.xlane.f32.xlu0 %v1747
        %v1749 = vpop.xlane.xlu0 %1748
        %v1750 = vsel %vm1222, %v1726, -inf
        %1751 = vmax.xlane.f32.xlu0 %v1750
        %v1752 = vpop.xlane.xlu0 %1751
        %v1753 = vsub.f32 %v1582, %v1731
        %v1754 = vsub.f32 %v1585, %v1734
        %v1755 = vsub.f32 %v1629, %v1737
        %v1756 = vsub.f32 %v1632, %v1740
        %v1757 = vsub.f32 %v1676, %v1743
        %v1758 = vsub.f32 %v1679, %v1746
        %v1759 = vsub.f32 %v1723, %v1749
        %v1760 = vsub.f32 %v1726, %v1752
        %v1761 = vmul.f32 %v1753, 1.442695
        %v1762 = vpow.pop %v1761
        %v1763 = vmul.f32 %v1754, 1.442695
        %v1764 = vpow.pop %v1763
        %v1765 = vmul.f32 %v1755, 1.442695
        %v1766 = vpow.pop %v1765
        %v1767 = vmul.f32 %v1756, 1.442695
        %v1768 = vpow.pop %v1767
        %v1769 = vmul.f32 %v1757, 1.442695
        %v1770 = vpow.pop %v1769
        %v1771 = vmul.f32 %v1758, 1.442695
        %v1772 = vpow.pop %v1771
        %v1773 = vmul.f32 %v1759, 1.442695
        %v1774 = vpow.pop %v1773
        %v1775 = vmul.f32 %v1760, 1.442695
        %v1776 = vpow.pop %v1775
        %v1777 = vsel %vm1222, %v1762, 0.0
        %1778 = vadd.xlane.f32.xlu0 %v1777
        %v1779 = vpop.xlane.xlu0 %1778
        %v1780 = vsel %vm1222, %v1764, 0.0
        %1781 = vadd.xlane.f32.xlu0 %v1780
        %v1782 = vpop.xlane.xlu0 %1781
        %v1783 = vsel %vm1222, %v1766, 0.0
        %1784 = vadd.xlane.f32.xlu0 %v1783
        %v1785 = vpop.xlane.xlu0 %1784
        %v1786 = vsel %vm1222, %v1768, 0.0
        %1787 = vadd.xlane.f32.xlu0 %v1786
        %v1788 = vpop.xlane.xlu0 %1787
        %v1789 = vsel %vm1222, %v1770, 0.0
        %1790 = vadd.xlane.f32.xlu0 %v1789
        %v1791 = vpop.xlane.xlu0 %1790
        %v1792 = vsel %vm1222, %v1772, 0.0
        %1793 = vadd.xlane.f32.xlu0 %v1792
        %v1794 = vpop.xlane.xlu0 %1793
        %v1795 = vsel %vm1222, %v1774, 0.0
        %1796 = vadd.xlane.f32.xlu0 %v1795
        %v1797 = vpop.xlane.xlu0 %1796
        %v1798 = vsel %vm1222, %v1776, 0.0
        %1799 = vadd.xlane.f32.xlu0 %v1798
        %v1800 = vpop.xlane.xlu0 %1799
        %v1801 = vrcp.pop %v1779
        %v1802 = vrcp.pop %v1782
        %v1803 = vrcp.pop %v1785
        %v1804 = vrcp.pop %v1788
        %v1805 = vrcp.pop %v1791
        %v1806 = vrcp.pop %v1794
        %v1807 = vrcp.pop %v1797
        %v1808 = vrcp.pop %v1800
        %v1809 = vmul.f32 %v1762, %v1801
        %v1810 = vmul.f32 %v1764, %v1802
        %v1811 = vmul.f32 %v1766, %v1803
        %v1812 = vmul.f32 %v1768, %v1804
        %v1813 = vmul.f32 %v1770, %v1805
        %v1814 = vmul.f32 %v1772, %v1806
        %v1815 = vmul.f32 %v1774, %v1807
        %v1816 = vmul.f32 %v1776, %v1808
        %v1817 = vpack.c.bf16 %v1810, %v1809
        %v1818 = vpack.c.bf16 %v1812, %v1811
        %v1819 = vpack.c.bf16 %v1814, %v1813
        %v1820 = vpack.c.bf16 %v1816, %v1815
        %v1822 = vsel %vm1222, %v1817, 0
        %1824 = vmatprep.subr.bf16.mxu0 0
        %1825 = vmatpush1.bf16.msra.mxu0 0
        %1826 = vmatprep.subr.bf16.mxu0 0
        %1827 = vmatpush1.bf16.msra.mxu0 0
        %1828 = vmatprep.subr.bf16.mxu0 0
        %1829 = vmatpush1.bf16.msra.mxu0 0
        %1830 = vmatprep.subr.bf16.mxu0 0
        %1831 = vmatpush1.bf16.msra.mxu0 0
        %1832 = vmatprep.subr.bf16.mxu0 0
        %1833 = vmatpush1.bf16.msra.mxu0 0
        %1834 = vmatprep.subr.bf16.mxu0 0
        %1835 = vmatpush1.bf16.msra.mxu0 0
        %1836 = vmatprep.subr.bf16.mxu0 0
        %1837 = vmatpush1.bf16.msra.mxu0 0
        %1838 = vmatprep.subr.bf16.mxu0 0
        %1839 = vmatpush1.bf16.msra.mxu0 %v1516
        %1840 = vmatprep.subr.bf16.mxu0 0
        %1841 = vmatpush2.bf16.msra.mxu0 0
        %1842 = vmatprep.subr.bf16.mxu0 0
        %1843 = vmatpush2.bf16.msra.mxu0 0
        %1844 = vmatprep.subr.bf16.mxu0 0
        %1845 = vmatpush2.bf16.msra.mxu0 0
        %1846 = vmatprep.subr.bf16.mxu0 0
        %1847 = vmatpush2.bf16.msra.mxu0 0
        %1848 = vmatprep.subr.bf16.mxu0 0
        %1849 = vmatpush2.bf16.msra.mxu0 0
        %1850 = vmatprep.subr.bf16.mxu0 0
        %1851 = vmatpush2.bf16.msra.mxu0 0
        %1852 = vmatprep.subr.bf16.mxu0 0
        %1853 = vmatpush2.bf16.msra.mxu0 0
        %1854 = vmatprep.subr.bf16.mxu0 0
        %1855 = vmatpush2.bf16.msra.mxu0 0
        %1856 = vmatprep.mubr.bf16.mxu0 0
        %1857 = vmatmul.mubr.bf16.gmra.mxu0 %v1822
        %v1858 = vpop.f32.mrf.mxu0
        %v1859 = vadd.f32 0.0, %v1858
        %v1860 = vpop.f32.mrf.mxu0
        %v1861 = vpop.f32.mrf.mxu0
        %v1862 = vadd.f32 0.0, %v1861
        %v1863 = vpop.f32.mrf.mxu0
        %1864 = vdwg.mxu0
        %v1866 = vsel %vm1222, %v1818, 0
        %1868 = vmatprep.subr.bf16.mxu0 0
        %1869 = vmatpush1.bf16.msra.mxu0 0
        %1870 = vmatprep.subr.bf16.mxu0 0
        %1871 = vmatpush1.bf16.msra.mxu0 0
        %1872 = vmatprep.subr.bf16.mxu0 0
        %1873 = vmatpush1.bf16.msra.mxu0 0
        %1874 = vmatprep.subr.bf16.mxu0 0
        %1875 = vmatpush1.bf16.msra.mxu0 0
        %1876 = vmatprep.subr.bf16.mxu0 0
        %1877 = vmatpush1.bf16.msra.mxu0 0
        %1878 = vmatprep.subr.bf16.mxu0 0
        %1879 = vmatpush1.bf16.msra.mxu0 0
        %1880 = vmatprep.subr.bf16.mxu0 0
        %1881 = vmatpush1.bf16.msra.mxu0 0
        %1882 = vmatprep.subr.bf16.mxu0 0
        %1883 = vmatpush1.bf16.msra.mxu0 %v1533
        %1884 = vmatprep.subr.bf16.mxu0 0
        %1885 = vmatpush2.bf16.msra.mxu0 0
        %1886 = vmatprep.subr.bf16.mxu0 0
        %1887 = vmatpush2.bf16.msra.mxu0 0
        %1888 = vmatprep.subr.bf16.mxu0 0
        %1889 = vmatpush2.bf16.msra.mxu0 0
        %1890 = vmatprep.subr.bf16.mxu0 0
        %1891 = vmatpush2.bf16.msra.mxu0 0
        %1892 = vmatprep.subr.bf16.mxu0 0
        %1893 = vmatpush2.bf16.msra.mxu0 0
        %1894 = vmatprep.subr.bf16.mxu0 0
        %1895 = vmatpush2.bf16.msra.mxu0 0
        %1896 = vmatprep.subr.bf16.mxu0 0
        %1897 = vmatpush2.bf16.msra.mxu0 0
        %1898 = vmatprep.subr.bf16.mxu0 0
        %1899 = vmatpush2.bf16.msra.mxu0 0
        %1900 = vmatprep.mubr.bf16.mxu0 0
        %1901 = vmatmul.mubr.bf16.gmra.mxu0 %v1866
        %v1902 = vpop.f32.mrf.mxu0
        %v1903 = vadd.f32 0.0, %v1902
        %v1904 = vpop.f32.mrf.mxu0
        %v1905 = vpop.f32.mrf.mxu0
        %v1906 = vadd.f32 0.0, %v1905
        %v1907 = vpop.f32.mrf.mxu0
        %1908 = vdwg.mxu0
        %v1910 = vsel %vm1222, %v1819, 0
        %1912 = vmatprep.subr.bf16.mxu0 0
        %1913 = vmatpush1.bf16.msra.mxu0 0
        %1914 = vmatprep.subr.bf16.mxu0 0
        %1915 = vmatpush1.bf16.msra.mxu0 0
        %1916 = vmatprep.subr.bf16.mxu0 0
        %1917 = vmatpush1.bf16.msra.mxu0 0
        %1918 = vmatprep.subr.bf16.mxu0 0
        %1919 = vmatpush1.bf16.msra.mxu0 0
        %1920 = vmatprep.subr.bf16.mxu0 0
        %1921 = vmatpush1.bf16.msra.mxu0 0
        %1922 = vmatprep.subr.bf16.mxu0 0
        %1923 = vmatpush1.bf16.msra.mxu0 0
        %1924 = vmatprep.subr.bf16.mxu0 0
        %1925 = vmatpush1.bf16.msra.mxu0 0
        %1926 = vmatprep.subr.bf16.mxu0 0
        %1927 = vmatpush1.bf16.msra.mxu0 %v1536
        %1928 = vmatprep.subr.bf16.mxu0 0
        %1929 = vmatpush2.bf16.msra.mxu0 0
        %1930 = vmatprep.subr.bf16.mxu0 0
        %1931 = vmatpush2.bf16.msra.mxu0 0
        %1932 = vmatprep.subr.bf16.mxu0 0
        %1933 = vmatpush2.bf16.msra.mxu0 0
        %1934 = vmatprep.subr.bf16.mxu0 0
        %1935 = vmatpush2.bf16.msra.mxu0 0
        %1936 = vmatprep.subr.bf16.mxu0 0
        %1937 = vmatpush2.bf16.msra.mxu0 0
        %1938 = vmatprep.subr.bf16.mxu0 0
        %1939 = vmatpush2.bf16.msra.mxu0 0
        %1940 = vmatprep.subr.bf16.mxu0 0
        %1941 = vmatpush2.bf16.msra.mxu0 0
        %1942 = vmatprep.subr.bf16.mxu0 0
        %1943 = vmatpush2.bf16.msra.mxu0 0
        %1944 = vmatprep.mubr.bf16.mxu0 0
        %1945 = vmatmul.mubr.bf16.gmra.mxu0 %v1910
        %v1946 = vpop.f32.mrf.mxu0
        %v1947 = vadd.f32 0.0, %v1946
        %v1948 = vpop.f32.mrf.mxu0
        %v1949 = vpop.f32.mrf.mxu0
        %v1950 = vadd.f32 0.0, %v1949
        %v1951 = vpop.f32.mrf.mxu0
        %1952 = vdwg.mxu0
        %v1954 = vsel %vm1222, %v1820, 0
        %1956 = vmatprep.subr.bf16.mxu0 0
        %1957 = vmatpush1.bf16.msra.mxu0 0
        %1958 = vmatprep.subr.bf16.mxu0 0
        %1959 = vmatpush1.bf16.msra.mxu0 0
        %1960 = vmatprep.subr.bf16.mxu0 0
        %1961 = vmatpush1.bf16.msra.mxu0 0
        %1962 = vmatprep.subr.bf16.mxu0 0
        %1963 = vmatpush1.bf16.msra.mxu0 0
        %1964 = vmatprep.subr.bf16.mxu0 0
        %1965 = vmatpush1.bf16.msra.mxu0 0
        %1966 = vmatprep.subr.bf16.mxu0 0
        %1967 = vmatpush1.bf16.msra.mxu0 0
        %1968 = vmatprep.subr.bf16.mxu0 0
        %1969 = vmatpush1.bf16.msra.mxu0 0
        %1970 = vmatprep.subr.bf16.mxu0 0
        %1971 = vmatpush1.bf16.msra.mxu0 %v1539
        %1972 = vmatprep.subr.bf16.mxu0 0
        %1973 = vmatpush2.bf16.msra.mxu0 0
        %1974 = vmatprep.subr.bf16.mxu0 0
        %1975 = vmatpush2.bf16.msra.mxu0 0
        %1976 = vmatprep.subr.bf16.mxu0 0
        %1977 = vmatpush2.bf16.msra.mxu0 0
        %1978 = vmatprep.subr.bf16.mxu0 0
        %1979 = vmatpush2.bf16.msra.mxu0 0
        %1980 = vmatprep.subr.bf16.mxu0 0
        %1981 = vmatpush2.bf16.msra.mxu0 0
        %1982 = vmatprep.subr.bf16.mxu0 0
        %1983 = vmatpush2.bf16.msra.mxu0 0
        %1984 = vmatprep.subr.bf16.mxu0 0
        %1985 = vmatpush2.bf16.msra.mxu0 0
        %1986 = vmatprep.subr.bf16.mxu0 0
        %1987 = vmatpush2.bf16.msra.mxu0 0
        %1988 = vmatprep.mubr.bf16.mxu0 0
        %1989 = vmatmul.mubr.bf16.gmra.mxu0 %v1954
        %v1990 = vpop.f32.mrf.mxu0
        %v1991 = vadd.f32 0.0, %v1990
        %v1992 = vpop.f32.mrf.mxu0
        %v1993 = vpop.f32.mrf.mxu0
        %v1994 = vadd.f32 0.0, %v1993
        %v1995 = vpop.f32.mrf.mxu0
        %1996 = vdwg.mxu0
        %v1997 = vpack.c.bf16 %v1862, %v1859
        %v1998 = vpack.c.bf16 %v1906, %v1903
        %v1999 = vpack.c.bf16 %v1950, %v1947
        %v2000 = vpack.c.bf16 %v1994, %v1991
        %2002 = vrot.lane.b32.xlu0 %v1998, 32
        %v2003 = vpop.permute.xlu0 %2002
        %2005 = vrot.lane.b32.xlu0 %v1999, 64
        %v2006 = vpop.permute.xlu0 %2005
        %2008 = vrot.lane.b32.xlu0 %v2000, 96
        %v2009 = vpop.permute.xlu0 %2008
        %v2012 = vsel %vm1033, %v1997, %v2003
        %v2014 = vsel %vm1507, %v2012, %v2006
        %v2016 = vsel %vm1510, %v2014, %v2009
        %v2018 = vld [vmem:[%s622] sm:$0xf]
        %v2019 = vld [vmem:[%s622 + $0x4] sm:$0xf]
        %v2020 = vld [vmem:[%s622 + $0x8] sm:$0xf]
        %v2021 = vld [vmem:[%s622 + $0xc] sm:$0xf]
        %v2022 = vld [vmem:[%s622 + $0x10] sm:$0xf]
        %v2023 = vld [vmem:[%s622 + $0x14] sm:$0xf]
        %v2024 = vld [vmem:[%s622 + $0x18] sm:$0xf]
        %v2025 = vld [vmem:[%s622 + $0x1c] sm:$0xf]
        %v2026 = vld [vmem:[%s622 + $0x20] sm:$0xf]
        %v2027 = vld [vmem:[%s622 + $0x24] sm:$0xf]
        %v2028 = vld [vmem:[%s622 + $0x28] sm:$0xf]
        %v2029 = vld [vmem:[%s622 + $0x2c] sm:$0xf]
        %v2030 = vld [vmem:[%s622 + $0x30] sm:$0xf]
        %v2031 = vld [vmem:[%s622 + $0x34] sm:$0xf]
        %v2032 = vld [vmem:[%s622 + $0x38] sm:$0xf]
        %v2033 = vld [vmem:[%s622 + $0x3c] sm:$0xf]
        %v2034 = vld [vmem:[%s625] sm:$0x1]
        %v2036 = vlaneseq
        %v2037 = vshrl.u32 %v2036, 7
        %v2038 = vsub.s32 0, %v2037
        %v2039 = vrot.slane %v2034, %v2038
        %v2057 = vunpack.c.l.b16 %v2018
        %v2058 = vunpack.c.l.b16 %v2019
        %v2059 = vunpack.c.l.b16 %v2020
        %v2060 = vunpack.c.l.b16 %v2021
        %v2061 = vunpack.c.l.b16 %v2022
        %v2062 = vunpack.c.l.b16 %v2023
        %v2063 = vunpack.c.l.b16 %v2024
        %v2064 = vunpack.c.l.b16 %v2025
        %v2065 = vunpack.c.l.b16 %v2026
        %v2066 = vunpack.c.l.b16 %v2027
        %v2067 = vunpack.c.l.b16 %v2028
        %v2068 = vunpack.c.l.b16 %v2029
        %v2069 = vunpack.c.l.b16 %v2030
        %v2070 = vunpack.c.l.b16 %v2031
        %v2071 = vunpack.c.l.b16 %v2032
        %v2072 = vunpack.c.l.b16 %v2033
        %v2073 = vpack.c.b16 %v2058, %v2057
        %v2074 = vpack.c.b16 %v2060, %v2059
        %v2075 = vpack.c.b16 %v2062, %v2061
        %v2076 = vpack.c.b16 %v2064, %v2063
        %v2077 = vpack.c.b16 %v2066, %v2065
        %v2078 = vpack.c.b16 %v2068, %v2067
        %v2079 = vpack.c.b16 %v2070, %v2069
        %v2080 = vpack.c.b16 %v2072, %v2071
        %2089 = vmatprep.subr.bf16.mxu0 0
        %2090 = vmatpush1.bf16.msra.mxu0 %v2080
        %2091 = vmatprep.subr.bf16.mxu0 0
        %2092 = vmatpush1.bf16.msra.mxu0 %v2079
        %2093 = vmatprep.subr.bf16.mxu0 0
        %2094 = vmatpush1.bf16.msra.mxu0 %v2078
        %2095 = vmatprep.subr.bf16.mxu0 0
        %2096 = vmatpush1.bf16.msra.mxu0 %v2077
        %2097 = vmatprep.subr.bf16.mxu0 0
        %2098 = vmatpush1.bf16.msra.mxu0 %v2076
        %2099 = vmatprep.subr.bf16.mxu0 0
        %2100 = vmatpush1.bf16.msra.mxu0 %v2075
        %2101 = vmatprep.subr.bf16.mxu0 0
        %2102 = vmatpush1.bf16.msra.mxu0 %v2074
        %2103 = vmatprep.subr.bf16.mxu0 0
        %2104 = vmatpush1.bf16.msra.mxu0 %v2073
        %2105 = vmatprep.subr.bf16.mxu0 0
        %2106 = vmatpush2.bf16.msra.mxu0 0
        %2107 = vmatprep.subr.bf16.mxu0 0
        %2108 = vmatpush2.bf16.msra.mxu0 0
        %2109 = vmatprep.subr.bf16.mxu0 0
        %2110 = vmatpush2.bf16.msra.mxu0 0
        %2111 = vmatprep.subr.bf16.mxu0 0
        %2112 = vmatpush2.bf16.msra.mxu0 0
        %2113 = vmatprep.subr.bf16.mxu0 0
        %2114 = vmatpush2.bf16.msra.mxu0 0
        %2115 = vmatprep.subr.bf16.mxu0 0
        %2116 = vmatpush2.bf16.msra.mxu0 0
        %2117 = vmatprep.subr.bf16.mxu0 0
        %2118 = vmatpush2.bf16.msra.mxu0 0
        %2119 = vmatprep.subr.bf16.mxu0 0
        %2120 = vmatpush2.bf16.msra.mxu0 0
        %2121 = vmatprep.mubr.bf16.mxu0 0
        %2122 = vmatmul.mubr.bf16.gmra.mxu0 %v1512
        %v2123 = vpop.f32.mrf.mxu0
        %v2124 = vadd.f32 %v2039, %v2123
        %v2125 = vpop.f32.mrf.mxu0
        %v2126 = vpop.f32.mrf.mxu0
        %v2127 = vadd.f32 %v2039, %v2126
        %v2128 = vpop.f32.mrf.mxu0
        %2129 = vmatprep.mubr.bf16.mxu0 0
        %2130 = vmatmul.mubr.bf16.gmra.mxu0 %v2016
        %v2131 = vpop.f32.mrf.mxu0
        %v2132 = vadd.f32 %v2039, %v2131
        %v2133 = vpop.f32.mrf.mxu0
        %v2134 = vpop.f32.mrf.mxu0
        %v2135 = vadd.f32 %v2039, %v2134
        %v2136 = vpop.f32.mrf.mxu0
        %2137 = vdwg.mxu0
        %v2138 = vadd.f32 %v671, %v2124
        %v2139 = vadd.f32 %v672, %v2127
        %v2140 = vadd.f32 %v673, %v2132
        %v2141 = vadd.f32 %v674, %v2135
        %v2142 = vld [vmem:[%s628] sm:$0x1]
        %v2143 = vld [vmem:[%s631] sm:$0x1]
        %2144 = vadd.xlane.f32.xlu0 %v2138
        %v2145 = vpop.xlane.xlu0 %2144
        %2146 = vadd.xlane.f32.xlu0 %v2139
        %v2147 = vpop.xlane.xlu0 %2146
        %2148 = vadd.xlane.f32.xlu0 %v2140
        %v2149 = vpop.xlane.xlu0 %2148
        %2150 = vadd.xlane.f32.xlu0 %v2141
        %v2151 = vpop.xlane.xlu0 %2150
        %v2152 = vmul.f32 %v2145, %v685
        %v2153 = vmul.f32 %v2147, %v685
        %v2154 = vmul.f32 %v2149, %v685
        %v2155 = vmul.f32 %v2151, %v685
        %v2156 = vsub.f32 %v2138, %v2152
        %v2157 = vsub.f32 %v2139, %v2153
        %v2158 = vsub.f32 %v2140, %v2154
        %v2159 = vsub.f32 %v2141, %v2155
        %v2160 = vmul.f32 %v2156, %v2156
        %v2161 = vmul.f32 %v2157, %v2157
        %v2162 = vmul.f32 %v2158, %v2158
        %v2163 = vmul.f32 %v2159, %v2159
        %2164 = vadd.xlane.f32.xlu0 %v2160
        %v2165 = vpop.xlane.xlu0 %2164
        %2166 = vadd.xlane.f32.xlu0 %v2161
        %v2167 = vpop.xlane.xlu0 %2166
        %2168 = vadd.xlane.f32.xlu0 %v2162
        %v2169 = vpop.xlane.xlu0 %2168
        %2170 = vadd.xlane.f32.xlu0 %v2163
        %v2171 = vpop.xlane.xlu0 %2170
        %v2172 = vmul.f32 %v2165, %v685
        %v2173 = vmul.f32 %v2167, %v685
        %v2174 = vmul.f32 %v2169, %v685
        %v2175 = vmul.f32 %v2171, %v685
        %v2176 = vadd.f32 %v2172, 1e-05
        %v2177 = vadd.f32 %v2173, 1e-05
        %v2178 = vadd.f32 %v2174, 1e-05
        %v2179 = vadd.f32 %v2175, 1e-05
        %v2180 = vrsqrt.pop %v2176
        %v2181 = vrsqrt.pop %v2177
        %v2182 = vrsqrt.pop %v2178
        %v2183 = vrsqrt.pop %v2179
        %v2184 = vmul.f32 %v2156, %v2180
        %v2185 = vmul.f32 %v2157, %v2181
        %v2186 = vmul.f32 %v2158, %v2182
        %v2187 = vmul.f32 %v2159, %v2183
        %v2189 = vlaneseq
        %v2190 = vshrl.u32 %v2189, 7
        %v2191 = vsub.s32 0, %v2190
        %v2192 = vrot.slane %v2142, %v2191
        %v2194 = vmul.f32 %v2184, %v2192
        %v2195 = vmul.f32 %v2185, %v2192
        %v2196 = vmul.f32 %v2186, %v2192
        %v2197 = vmul.f32 %v2187, %v2192
        %v2199 = vlaneseq
        %v2200 = vshrl.u32 %v2199, 7
        %v2201 = vsub.s32 0, %v2200
        %v2202 = vrot.slane %v2143, %v2201
        %v2204 = vadd.f32 %v2194, %v2202
        %v2205 = vadd.f32 %v2195, %v2202
        %v2206 = vadd.f32 %v2196, %v2202
        %v2207 = vadd.f32 %v2197, %v2202
        %v2208 = vpack.c.bf16 %v2205, %v2204
        %v2209 = vpack.c.bf16 %v2207, %v2206
        %v2210 = vld [vmem:[%s636] sm:$0xff]
        %v2211 = vld [vmem:[%s636 + $0x8] sm:$0xff]
        %v2212 = vld [vmem:[%s636 + $0x10] sm:$0xff]
        %v2213 = vld [vmem:[%s636 + $0x18] sm:$0xff]
        %v2214 = vld [vmem:[%s636 + $0x20] sm:$0xff]
        %v2215 = vld [vmem:[%s636 + $0x28] sm:$0xff]
        %v2216 = vld [vmem:[%s636 + $0x30] sm:$0xff]
        %v2217 = vld [vmem:[%s636 + $0x38] sm:$0xff]
        %v2218 = vld [vmem:[%s636 + $0x40] sm:$0xff]
        %v2219 = vld [vmem:[%s636 + $0x48] sm:$0xff]
        %v2220 = vld [vmem:[%s636 + $0x50] sm:$0xff]
        %v2221 = vld [vmem:[%s636 + $0x58] sm:$0xff]
        %v2222 = vld [vmem:[%s636 + $0x60] sm:$0xff]
        %v2223 = vld [vmem:[%s636 + $0x68] sm:$0xff]
        %v2224 = vld [vmem:[%s636 + $0x70] sm:$0xff]
        %v2225 = vld [vmem:[%s636 + $0x78] sm:$0xff]
        %v2226 = vld [vmem:[%s636 + $0x80] sm:$0xff]
        %v2227 = vld [vmem:[%s636 + $0x88] sm:$0xff]
        %v2228 = vld [vmem:[%s636 + $0x90] sm:$0xff]
        %v2229 = vld [vmem:[%s636 + $0x98] sm:$0xff]
        %v2230 = vld [vmem:[%s636 + $0xa0] sm:$0xff]
        %v2231 = vld [vmem:[%s636 + $0xa8] sm:$0xff]
        %v2232 = vld [vmem:[%s636 + $0xb0] sm:$0xff]
        %v2233 = vld [vmem:[%s636 + $0xb8] sm:$0xff]
        %v2234 = vld [vmem:[%s636 + $0xc0] sm:$0xff]
        %v2235 = vld [vmem:[%s636 + $0xc8] sm:$0xff]
        %v2236 = vld [vmem:[%s636 + $0xd0] sm:$0xff]
        %v2237 = vld [vmem:[%s636 + $0xd8] sm:$0xff]
        %v2238 = vld [vmem:[%s636 + $0xe0] sm:$0xff]
        %v2239 = vld [vmem:[%s636 + $0xe8] sm:$0xff]
        %v2240 = vld [vmem:[%s636 + $0xf0] sm:$0xff]
        %v2241 = vld [vmem:[%s636 + $0xf8] sm:$0xff]
        %v2242 = vld [vmem:[%s640] sm:$0xf]
        %v2244 = vlaneseq
        %v2245 = vshrl.u32 %v2244, 7
        %v2246 = vsub.s32 0, %v2245
        %v2247 = vrot.slane %v2242, %v2246
        %v2248 = vlaneseq
        %v2249 = vshrl.u32 %v2248, 7
        %v2250 = vsub.s32 1, %v2249
        %v2251 = vrot.slane %v2242, %v2250
        %v2252 = vlaneseq
        %v2253 = vshrl.u32 %v2252, 7
        %v2254 = vsub.s32 2, %v2253
        %v2255 = vrot.slane %v2242, %v2254
        %v2256 = vlaneseq
        %v2257 = vshrl.u32 %v2256, 7
        %v2258 = vsub.s32 3, %v2257
        %v2259 = vrot.slane %v2242, %v2258
        %v2296 = vunpack.c.l.b16 %v2210
        %v2297 = vunpack.c.h.b16 %v2210
        %v2298 = vunpack.c.l.b16 %v2211
        %v2299 = vunpack.c.h.b16 %v2211
        %v2300 = vunpack.c.l.b16 %v2212
        %v2301 = vunpack.c.h.b16 %v2212
        %v2302 = vunpack.c.l.b16 %v2213
        %v2303 = vunpack.c.h.b16 %v2213
        %v2304 = vunpack.c.l.b16 %v2214
        %v2305 = vunpack.c.h.b16 %v2214
        %v2306 = vunpack.c.l.b16 %v2215
        %v2307 = vunpack.c.h.b16 %v2215
        %v2308 = vunpack.c.l.b16 %v2216
        %v2309 = vunpack.c.h.b16 %v2216
        %v2310 = vunpack.c.l.b16 %v2217
        %v2311 = vunpack.c.h.b16 %v2217
        %v2312 = vunpack.c.l.b16 %v2218
        %v2313 = vunpack.c.h.b16 %v2218
        %v2314 = vunpack.c.l.b16 %v2219
        %v2315 = vunpack.c.h.b16 %v2219
        %v2316 = vunpack.c.l.b16 %v2220
        %v2317 = vunpack.c.h.b16 %v2220
        %v2318 = vunpack.c.l.b16 %v2221
        %v2319 = vunpack.c.h.b16 %v2221
        %v2320 = vunpack.c.l.b16 %v2222
        %v2321 = vunpack.c.h.b16 %v2222
        %v2322 = vunpack.c.l.b16 %v2223
        %v2323 = vunpack.c.h.b16 %v2223
        %v2324 = vunpack.c.l.b16 %v2224
        %v2325 = vunpack.c.h.b16 %v2224
        %v2326 = vunpack.c.l.b16 %v2225
        %v2327 = vunpack.c.h.b16 %v2225
        %v2328 = vunpack.c.l.b16 %v2226
        %v2329 = vunpack.c.h.b16 %v2226
        %v2330 = vunpack.c.l.b16 %v2227
        %v2331 = vunpack.c.h.b16 %v2227
        %v2332 = vunpack.c.l.b16 %v2228
        %v2333 = vunpack.c.h.b16 %v2228
        %v2334 = vunpack.c.l.b16 %v2229
        %v2335 = vunpack.c.h.b16 %v2229
        %v2336 = vunpack.c.l.b16 %v2230
        %v2337 = vunpack.c.h.b16 %v2230
        %v2338 = vunpack.c.l.b16 %v2231
        %v2339 = vunpack.c.h.b16 %v2231
        %v2340 = vunpack.c.l.b16 %v2232
        %v2341 = vunpack.c.h.b16 %v2232
        %v2342 = vunpack.c.l.b16 %v2233
        %v2343 = vunpack.c.h.b16 %v2233
        %v2344 = vunpack.c.l.b16 %v2234
        %v2345 = vunpack.c.h.b16 %v2234
        %v2346 = vunpack.c.l.b16 %v2235
        %v2347 = vunpack.c.h.b16 %v2235
        %v2348 = vunpack.c.l.b16 %v2236
        %v2349 = vunpack.c.h.b16 %v2236
        %v2350 = vunpack.c.l.b16 %v2237
        %v2351 = vunpack.c.h.b16 %v2237
        %v2352 = vunpack.c.l.b16 %v2238
        %v2353 = vunpack.c.h.b16 %v2238
        %v2354 = vunpack.c.l.b16 %v2239
        %v2355 = vunpack.c.h.b16 %v2239
        %v2356 = vunpack.c.l.b16 %v2240
        %v2357 = vunpack.c.h.b16 %v2240
        %v2358 = vunpack.c.l.b16 %v2241
        %v2359 = vunpack.c.h.b16 %v2241
        %v2360 = vpack.c.b16 %v2300, %v2296
        %v2361 = vpack.c.b16 %v2301, %v2297
        %v2362 = vpack.c.b16 %v2302, %v2298
        %v2363 = vpack.c.b16 %v2303, %v2299
        %v2364 = vpack.c.b16 %v2308, %v2304
        %v2365 = vpack.c.b16 %v2309, %v2305
        %v2366 = vpack.c.b16 %v2310, %v2306
        %v2367 = vpack.c.b16 %v2311, %v2307
        %v2368 = vpack.c.b16 %v2316, %v2312
        %v2369 = vpack.c.b16 %v2317, %v2313
        %v2370 = vpack.c.b16 %v2318, %v2314
        %v2371 = vpack.c.b16 %v2319, %v2315
        %v2372 = vpack.c.b16 %v2324, %v2320
        %v2373 = vpack.c.b16 %v2325, %v2321
        %v2374 = vpack.c.b16 %v2326, %v2322
        %v2375 = vpack.c.b16 %v2327, %v2323
        %v2376 = vpack.c.b16 %v2332, %v2328
        %v2377 = vpack.c.b16 %v2333, %v2329
        %v2378 = vpack.c.b16 %v2334, %v2330
        %v2379 = vpack.c.b16 %v2335, %v2331
        %v2380 = vpack.c.b16 %v2340, %v2336
        %v2381 = vpack.c.b16 %v2341, %v2337
        %v2382 = vpack.c.b16 %v2342, %v2338
        %v2383 = vpack.c.b16 %v2343, %v2339
        %v2384 = vpack.c.b16 %v2348, %v2344
        %v2385 = vpack.c.b16 %v2349, %v2345
        %v2386 = vpack.c.b16 %v2350, %v2346
        %v2387 = vpack.c.b16 %v2351, %v2347
        %v2388 = vpack.c.b16 %v2356, %v2352
        %v2389 = vpack.c.b16 %v2357, %v2353
        %v2390 = vpack.c.b16 %v2358, %v2354
        %v2391 = vpack.c.b16 %v2359, %v2355
        %2424 = vmatprep.subr.bf16.mxu0 %v2389
        %2425 = vmatpush1.bf16.msra.mxu0 %v2388
        %2426 = vmatprep.subr.bf16.mxu0 %v2385
        %2427 = vmatpush1.bf16.msra.mxu0 %v2384
        %2428 = vmatprep.subr.bf16.mxu0 %v2381
        %2429 = vmatpush1.bf16.msra.mxu0 %v2380
        %2430 = vmatprep.subr.bf16.mxu0 %v2377
        %2431 = vmatpush1.bf16.msra.mxu0 %v2376
        %2432 = vmatprep.subr.bf16.mxu0 %v2373
        %2433 = vmatpush1.bf16.msra.mxu0 %v2372
        %2434 = vmatprep.subr.bf16.mxu0 %v2369
        %2435 = vmatpush1.bf16.msra.mxu0 %v2368
        %2436 = vmatprep.subr.bf16.mxu0 %v2365
        %2437 = vmatpush1.bf16.msra.mxu0 %v2364
        %2438 = vmatprep.subr.bf16.mxu0 %v2361
        %2439 = vmatpush1.bf16.msra.mxu0 %v2360
        %2440 = vmatprep.subr.bf16.mxu0 0
        %2441 = vmatpush2.bf16.msra.mxu0 0
        %2442 = vmatprep.subr.bf16.mxu0 0
        %2443 = vmatpush2.bf16.msra.mxu0 0
        %2444 = vmatprep.subr.bf16.mxu0 0
        %2445 = vmatpush2.bf16.msra.mxu0 0
        %2446 = vmatprep.subr.bf16.mxu0 0
        %2447 = vmatpush2.bf16.msra.mxu0 0
        %2448 = vmatprep.subr.bf16.mxu0 0
        %2449 = vmatpush2.bf16.msra.mxu0 0
        %2450 = vmatprep.subr.bf16.mxu0 0
        %2451 = vmatpush2.bf16.msra.mxu0 0
        %2452 = vmatprep.subr.bf16.mxu0 0
        %2453 = vmatpush2.bf16.msra.mxu0 0
        %2454 = vmatprep.subr.bf16.mxu0 0
        %2455 = vmatpush2.bf16.msra.mxu0 0
        %2456 = vmatprep.mubr.bf16.mxu0 0
        %2457 = vmatmul.mubr.bf16.gmra.mxu0 %v2208
        %v2458 = vpop.f32.mrf.mxu0
        %v2459 = vadd.f32 %v2247, %v2458
        %v2460 = vpop.f32.mrf.mxu0
        %v2461 = vadd.f32 %v2251, %v2460
        %v2462 = vpop.f32.mrf.mxu0
        %v2463 = vadd.f32 %v2247, %v2462
        %v2464 = vpop.f32.mrf.mxu0
        %v2465 = vadd.f32 %v2251, %v2464
        %2466 = vmatprep.mubr.bf16.mxu0 0
        %2467 = vmatmul.mubr.bf16.gmra.mxu0 %v2209
        %v2468 = vpop.f32.mrf.mxu0
        %v2469 = vadd.f32 %v2247, %v2468
        %v2470 = vpop.f32.mrf.mxu0
        %v2471 = vadd.f32 %v2251, %v2470
        %v2472 = vpop.f32.mrf.mxu0
        %v2473 = vadd.f32 %v2247, %v2472
        %v2474 = vpop.f32.mrf.mxu0
        %v2475 = vadd.f32 %v2251, %v2474
        %2476 = vdwg.mxu0
        %2477 = vmatprep.subr.bf16.mxu0 %v2391
        %2478 = vmatpush1.bf16.msra.mxu0 %v2390
        %2479 = vmatprep.subr.bf16.mxu0 %v2387
        %2480 = vmatpush1.bf16.msra.mxu0 %v2386
        %2481 = vmatprep.subr.bf16.mxu0 %v2383
        %2482 = vmatpush1.bf16.msra.mxu0 %v2382
        %2483 = vmatprep.subr.bf16.mxu0 %v2379
        %2484 = vmatpush1.bf16.msra.mxu0 %v2378
        %2485 = vmatprep.subr.bf16.mxu0 %v2375
        %2486 = vmatpush1.bf16.msra.mxu0 %v2374
        %2487 = vmatprep.subr.bf16.mxu0 %v2371
        %2488 = vmatpush1.bf16.msra.mxu0 %v2370
        %2489 = vmatprep.subr.bf16.mxu0 %v2367
        %2490 = vmatpush1.bf16.msra.mxu0 %v2366
        %2491 = vmatprep.subr.bf16.mxu0 %v2363
        %2492 = vmatpush1.bf16.msra.mxu0 %v2362
        %2493 = vmatprep.subr.bf16.mxu0 0
        %2494 = vmatpush2.bf16.msra.mxu0 0
        %2495 = vmatprep.subr.bf16.mxu0 0
        %2496 = vmatpush2.bf16.msra.mxu0 0
        %2497 = vmatprep.subr.bf16.mxu0 0
        %2498 = vmatpush2.bf16.msra.mxu0 0
        %2499 = vmatprep.subr.bf16.mxu0 0
        %2500 = vmatpush2.bf16.msra.mxu0 0
        %2501 = vmatprep.subr.bf16.mxu0 0
        %2502 = vmatpush2.bf16.msra.mxu0 0
        %2503 = vmatprep.subr.bf16.mxu0 0
        %2504 = vmatpush2.bf16.msra.mxu0 0
        %2505 = vmatprep.subr.bf16.mxu0 0
        %2506 = vmatpush2.bf16.msra.mxu0 0
        %2507 = vmatprep.subr.bf16.mxu0 0
        %2508 = vmatpush2.bf16.msra.mxu0 0
        %2509 = vmatprep.mubr.bf16.mxu0 0
        %2510 = vmatmul.mubr.bf16.gmra.mxu0 %v2208
        %v2511 = vpop.f32.mrf.mxu0
        %v2512 = vadd.f32 %v2255, %v2511
        %v2513 = vpop.f32.mrf.mxu0
        %v2514 = vadd.f32 %v2259, %v2513
        %v2515 = vpop.f32.mrf.mxu0
        %v2516 = vadd.f32 %v2255, %v2515
        %v2517 = vpop.f32.mrf.mxu0
        %v2518 = vadd.f32 %v2259, %v2517
        %2519 = vmatprep.mubr.bf16.mxu0 0
        %2520 = vmatmul.mubr.bf16.gmra.mxu0 %v2209
        %v2521 = vpop.f32.mrf.mxu0
        %v2522 = vadd.f32 %v2255, %v2521
        %v2523 = vpop.f32.mrf.mxu0
        %v2524 = vadd.f32 %v2259, %v2523
        %v2525 = vpop.f32.mrf.mxu0
        %v2526 = vadd.f32 %v2255, %v2525
        %v2527 = vpop.f32.mrf.mxu0
        %v2528 = vadd.f32 %v2259, %v2527
        %2529 = vdwg.mxu0
        %v2530 = vmul.f32 %v2459, %v2459
        %v2531 = vmul.f32 %v2461, %v2461
        %v2532 = vmul.f32 %v2512, %v2512
        %v2533 = vmul.f32 %v2514, %v2514
        %v2534 = vmul.f32 %v2463, %v2463
        %v2535 = vmul.f32 %v2465, %v2465
        %v2536 = vmul.f32 %v2516, %v2516
        %v2537 = vmul.f32 %v2518, %v2518
        %v2538 = vmul.f32 %v2469, %v2469
        %v2539 = vmul.f32 %v2471, %v2471
        %v2540 = vmul.f32 %v2522, %v2522
        %v2541 = vmul.f32 %v2524, %v2524
        %v2542 = vmul.f32 %v2473, %v2473
        %v2543 = vmul.f32 %v2475, %v2475
        %v2544 = vmul.f32 %v2526, %v2526
        %v2545 = vmul.f32 %v2528, %v2528
        %v2546 = vmul.f32 %v2459, %v2530
        %v2547 = vmul.f32 %v2461, %v2531
        %v2548 = vmul.f32 %v2512, %v2532
        %v2549 = vmul.f32 %v2514, %v2533
        %v2550 = vmul.f32 %v2463, %v2534
        %v2551 = vmul.f32 %v2465, %v2535
        %v2552 = vmul.f32 %v2516, %v2536
        %v2553 = vmul.f32 %v2518, %v2537
        %v2554 = vmul.f32 %v2469, %v2538
        %v2555 = vmul.f32 %v2471, %v2539
        %v2556 = vmul.f32 %v2522, %v2540
        %v2557 = vmul.f32 %v2524, %v2541
        %v2558 = vmul.f32 %v2473, %v2542
        %v2559 = vmul.f32 %v2475, %v2543
        %v2560 = vmul.f32 %v2526, %v2544
        %v2561 = vmul.f32 %v2528, %v2545
        %v2562 = vmul.f32 %v2546, 0.044715
        %v2563 = vmul.f32 %v2547, 0.044715
        %v2564 = vmul.f32 %v2548, 0.044715
        %v2565 = vmul.f32 %v2549, 0.044715
        %v2566 = vmul.f32 %v2550, 0.044715
        %v2567 = vmul.f32 %v2551, 0.044715
        %v2568 = vmul.f32 %v2552, 0.044715
        %v2569 = vmul.f32 %v2553, 0.044715
        %v2570 = vmul.f32 %v2554, 0.044715
        %v2571 = vmul.f32 %v2555, 0.044715
        %v2572 = vmul.f32 %v2556, 0.044715
        %v2573 = vmul.f32 %v2557, 0.044715
        %v2574 = vmul.f32 %v2558, 0.044715
        %v2575 = vmul.f32 %v2559, 0.044715
        %v2576 = vmul.f32 %v2560, 0.044715
        %v2577 = vmul.f32 %v2561, 0.044715
        %v2578 = vadd.f32 %v2459, %v2562
        %v2579 = vadd.f32 %v2461, %v2563
        %v2580 = vadd.f32 %v2512, %v2564
        %v2581 = vadd.f32 %v2514, %v2565
        %v2582 = vadd.f32 %v2463, %v2566
        %v2583 = vadd.f32 %v2465, %v2567
        %v2584 = vadd.f32 %v2516, %v2568
        %v2585 = vadd.f32 %v2518, %v2569
        %v2586 = vadd.f32 %v2469, %v2570
        %v2587 = vadd.f32 %v2471, %v2571
        %v2588 = vadd.f32 %v2522, %v2572
        %v2589 = vadd.f32 %v2524, %v2573
        %v2590 = vadd.f32 %v2473, %v2574
        %v2591 = vadd.f32 %v2475, %v2575
        %v2592 = vadd.f32 %v2526, %v2576
        %v2593 = vadd.f32 %v2528, %v2577
        %v2594 = vmul.f32 %v2578, 0.7978846
        %v2595 = vmul.f32 %v2579, 0.7978846
        %v2596 = vmul.f32 %v2580, 0.7978846
        %v2597 = vmul.f32 %v2581, 0.7978846
        %v2598 = vmul.f32 %v2582, 0.7978846
        %v2599 = vmul.f32 %v2583, 0.7978846
        %v2600 = vmul.f32 %v2584, 0.7978846
        %v2601 = vmul.f32 %v2585, 0.7978846
        %v2602 = vmul.f32 %v2586, 0.7978846
        %v2603 = vmul.f32 %v2587, 0.7978846
        %v2604 = vmul.f32 %v2588, 0.7978846
        %v2605 = vmul.f32 %v2589, 0.7978846
        %v2606 = vmul.f32 %v2590, 0.7978846
        %v2607 = vmul.f32 %v2591, 0.7978846
        %v2608 = vmul.f32 %v2592, 0.7978846
        %v2609 = vmul.f32 %v2593, 0.7978846
        %v2610 = vtanh.pop %v2594
        %v2611 = vtanh.pop %v2595
        %v2612 = vtanh.pop %v2596
        %v2613 = vtanh.pop %v2597
        %v2614 = vtanh.pop %v2598
        %v2615 = vtanh.pop %v2599
        %v2616 = vtanh.pop %v2600
        %v2617 = vtanh.pop %v2601
        %v2618 = vtanh.pop %v2602
        %v2619 = vtanh.pop %v2603
        %v2620 = vtanh.pop %v2604
        %v2621 = vtanh.pop %v2605
        %v2622 = vtanh.pop %v2606
        %v2623 = vtanh.pop %v2607
        %v2624 = vtanh.pop %v2608
        %v2625 = vtanh.pop %v2609
        %v2626 = vadd.f32 %v2610, 1.0
        %v2627 = vadd.f32 %v2611, 1.0
        %v2628 = vadd.f32 %v2612, 1.0
        %v2629 = vadd.f32 %v2613, 1.0
        %v2630 = vadd.f32 %v2614, 1.0
        %v2631 = vadd.f32 %v2615, 1.0
        %v2632 = vadd.f32 %v2616, 1.0
        %v2633 = vadd.f32 %v2617, 1.0
        %v2634 = vadd.f32 %v2618, 1.0
        %v2635 = vadd.f32 %v2619, 1.0
        %v2636 = vadd.f32 %v2620, 1.0
        %v2637 = vadd.f32 %v2621, 1.0
        %v2638 = vadd.f32 %v2622, 1.0
        %v2639 = vadd.f32 %v2623, 1.0
        %v2640 = vadd.f32 %v2624, 1.0
        %v2641 = vadd.f32 %v2625, 1.0
        %v2642 = vmul.f32 %v2626, 0.5
        %v2643 = vmul.f32 %v2627, 0.5
        %v2644 = vmul.f32 %v2628, 0.5
        %v2645 = vmul.f32 %v2629, 0.5
        %v2646 = vmul.f32 %v2630, 0.5
        %v2647 = vmul.f32 %v2631, 0.5
        %v2648 = vmul.f32 %v2632, 0.5
        %v2649 = vmul.f32 %v2633, 0.5
        %v2650 = vmul.f32 %v2634, 0.5
        %v2651 = vmul.f32 %v2635, 0.5
        %v2652 = vmul.f32 %v2636, 0.5
        %v2653 = vmul.f32 %v2637, 0.5
        %v2654 = vmul.f32 %v2638, 0.5
        %v2655 = vmul.f32 %v2639, 0.5
        %v2656 = vmul.f32 %v2640, 0.5
        %v2657 = vmul.f32 %v2641, 0.5
        %v2658 = vmul.f32 %v2459, %v2642
        %v2659 = vmul.f32 %v2461, %v2643
        %v2660 = vmul.f32 %v2512, %v2644
        %v2661 = vmul.f32 %v2514, %v2645
        %v2662 = vmul.f32 %v2463, %v2646
        %v2663 = vmul.f32 %v2465, %v2647
        %v2664 = vmul.f32 %v2516, %v2648
        %v2665 = vmul.f32 %v2518, %v2649
        %v2666 = vmul.f32 %v2469, %v2650
        %v2667 = vmul.f32 %v2471, %v2651
        %v2668 = vmul.f32 %v2522, %v2652
        %v2669 = vmul.f32 %v2524, %v2653
        %v2670 = vmul.f32 %v2473, %v2654
        %v2671 = vmul.f32 %v2475, %v2655
        %v2672 = vmul.f32 %v2526, %v2656
        %v2673 = vmul.f32 %v2528, %v2657
        %v2674 = vpack.c.bf16 %v2662, %v2658
        %v2675 = vpack.c.bf16 %v2663, %v2659
        %v2676 = vpack.c.bf16 %v2664, %v2660
        %v2677 = vpack.c.bf16 %v2665, %v2661
        %v2678 = vpack.c.bf16 %v2670, %v2666
        %v2679 = vpack.c.bf16 %v2671, %v2667
        %v2680 = vpack.c.bf16 %v2672, %v2668
        %v2681 = vpack.c.bf16 %v2673, %v2669
        %v2682 = vld [vmem:[%s645] sm:$0xf]
        %v2683 = vld [vmem:[%s645 + $0x4] sm:$0xf]
        %v2684 = vld [vmem:[%s645 + $0x8] sm:$0xf]
        %v2685 = vld [vmem:[%s645 + $0xc] sm:$0xf]
        %v2686 = vld [vmem:[%s645 + $0x10] sm:$0xf]
        %v2687 = vld [vmem:[%s645 + $0x14] sm:$0xf]
        %v2688 = vld [vmem:[%s645 + $0x18] sm:$0xf]
        %v2689 = vld [vmem:[%s645 + $0x1c] sm:$0xf]
        %v2690 = vld [vmem:[%s645 + $0x20] sm:$0xf]
        %v2691 = vld [vmem:[%s645 + $0x24] sm:$0xf]
        %v2692 = vld [vmem:[%s645 + $0x28] sm:$0xf]
        %v2693 = vld [vmem:[%s645 + $0x2c] sm:$0xf]
        %v2694 = vld [vmem:[%s645 + $0x30] sm:$0xf]
        %v2695 = vld [vmem:[%s645 + $0x34] sm:$0xf]
        %v2696 = vld [vmem:[%s645 + $0x38] sm:$0xf]
        %v2697 = vld [vmem:[%s645 + $0x3c] sm:$0xf]
        %v2698 = vld [vmem:[%s645 + $0x40] sm:$0xf]
        %v2699 = vld [vmem:[%s645 + $0x44] sm:$0xf]
        %v2700 = vld [vmem:[%s645 + $0x48] sm:$0xf]
        %v2701 = vld [vmem:[%s645 + $0x4c] sm:$0xf]
        %v2702 = vld [vmem:[%s645 + $0x50] sm:$0xf]
        %v2703 = vld [vmem:[%s645 + $0x54] sm:$0xf]
        %v2704 = vld [vmem:[%s645 + $0x58] sm:$0xf]
        %v2705 = vld [vmem:[%s645 + $0x5c] sm:$0xf]
        %v2706 = vld [vmem:[%s645 + $0x60] sm:$0xf]
        %v2707 = vld [vmem:[%s645 + $0x64] sm:$0xf]
        %v2708 = vld [vmem:[%s645 + $0x68] sm:$0xf]
        %v2709 = vld [vmem:[%s645 + $0x6c] sm:$0xf]
        %v2710 = vld [vmem:[%s645 + $0x70] sm:$0xf]
        %v2711 = vld [vmem:[%s645 + $0x74] sm:$0xf]
        %v2712 = vld [vmem:[%s645 + $0x78] sm:$0xf]
        %v2713 = vld [vmem:[%s645 + $0x7c] sm:$0xf]
        %v2714 = vld [vmem:[%s645 + $0x80] sm:$0xf]
        %v2715 = vld [vmem:[%s645 + $0x84] sm:$0xf]
        %v2716 = vld [vmem:[%s645 + $0x88] sm:$0xf]
        %v2717 = vld [vmem:[%s645 + $0x8c] sm:$0xf]
        %v2718 = vld [vmem:[%s645 + $0x90] sm:$0xf]
        %v2719 = vld [vmem:[%s645 + $0x94] sm:$0xf]
        %v2720 = vld [vmem:[%s645 + $0x98] sm:$0xf]
        %v2721 = vld [vmem:[%s645 + $0x9c] sm:$0xf]
        %v2722 = vld [vmem:[%s645 + $0xa0] sm:$0xf]
        %v2723 = vld [vmem:[%s645 + $0xa4] sm:$0xf]
        %v2724 = vld [vmem:[%s645 + $0xa8] sm:$0xf]
        %v2725 = vld [vmem:[%s645 + $0xac] sm:$0xf]
        %v2726 = vld [vmem:[%s645 + $0xb0] sm:$0xf]
        %v2727 = vld [vmem:[%s645 + $0xb4] sm:$0xf]
        %v2728 = vld [vmem:[%s645 + $0xb8] sm:$0xf]
        %v2729 = vld [vmem:[%s645 + $0xbc] sm:$0xf]
        %v2730 = vld [vmem:[%s645 + $0xc0] sm:$0xf]
        %v2731 = vld [vmem:[%s645 + $0xc4] sm:$0xf]
        %v2732 = vld [vmem:[%s645 + $0xc8] sm:$0xf]
        %v2733 = vld [vmem:[%s645 + $0xcc] sm:$0xf]
        %v2734 = vld [vmem:[%s645 + $0xd0] sm:$0xf]
        %v2735 = vld [vmem:[%s645 + $0xd4] sm:$0xf]
        %v2736 = vld [vmem:[%s645 + $0xd8] sm:$0xf]
        %v2737 = vld [vmem:[%s645 + $0xdc] sm:$0xf]
        %v2738 = vld [vmem:[%s645 + $0xe0] sm:$0xf]
        %v2739 = vld [vmem:[%s645 + $0xe4] sm:$0xf]
        %v2740 = vld [vmem:[%s645 + $0xe8] sm:$0xf]
        %v2741 = vld [vmem:[%s645 + $0xec] sm:$0xf]
        %v2742 = vld [vmem:[%s645 + $0xf0] sm:$0xf]
        %v2743 = vld [vmem:[%s645 + $0xf4] sm:$0xf]
        %v2744 = vld [vmem:[%s645 + $0xf8] sm:$0xf]
        %v2745 = vld [vmem:[%s645 + $0xfc] sm:$0xf]
        %v2746 = vld [vmem:[%s648] sm:$0x1]
        %v2748 = vlaneseq
        %v2749 = vshrl.u32 %v2748, 7
        %v2750 = vsub.s32 0, %v2749
        %v2751 = vrot.slane %v2746, %v2750
        %v2817 = vunpack.c.l.b16 %v2682
        %v2818 = vunpack.c.l.b16 %v2683
        %v2819 = vunpack.c.l.b16 %v2684
        %v2820 = vunpack.c.l.b16 %v2685
        %v2821 = vunpack.c.l.b16 %v2686
        %v2822 = vunpack.c.l.b16 %v2687
        %v2823 = vunpack.c.l.b16 %v2688
        %v2824 = vunpack.c.l.b16 %v2689
        %v2825 = vunpack.c.l.b16 %v2690
        %v2826 = vunpack.c.l.b16 %v2691
        %v2827 = vunpack.c.l.b16 %v2692
        %v2828 = vunpack.c.l.b16 %v2693
        %v2829 = vunpack.c.l.b16 %v2694
        %v2830 = vunpack.c.l.b16 %v2695
        %v2831 = vunpack.c.l.b16 %v2696
        %v2832 = vunpack.c.l.b16 %v2697
        %v2833 = vunpack.c.l.b16 %v2698
        %v2834 = vunpack.c.l.b16 %v2699
        %v2835 = vunpack.c.l.b16 %v2700
        %v2836 = vunpack.c.l.b16 %v2701
        %v2837 = vunpack.c.l.b16 %v2702
        %v2838 = vunpack.c.l.b16 %v2703
        %v2839 = vunpack.c.l.b16 %v2704
        %v2840 = vunpack.c.l.b16 %v2705
        %v2841 = vunpack.c.l.b16 %v2706
        %v2842 = vunpack.c.l.b16 %v2707
        %v2843 = vunpack.c.l.b16 %v2708
        %v2844 = vunpack.c.l.b16 %v2709
        %v2845 = vunpack.c.l.b16 %v2710
        %v2846 = vunpack.c.l.b16 %v2711
        %v2847 = vunpack.c.l.b16 %v2712
        %v2848 = vunpack.c.l.b16 %v2713
        %v2849 = vunpack.c.l.b16 %v2714
        %v2850 = vunpack.c.l.b16 %v2715
        %v2851 = vunpack.c.l.b16 %v2716
        %v2852 = vunpack.c.l.b16 %v2717
        %v2853 = vunpack.c.l.b16 %v2718
        %v2854 = vunpack.c.l.b16 %v2719
        %v2855 = vunpack.c.l.b16 %v2720
        %v2856 = vunpack.c.l.b16 %v2721
        %v2857 = vunpack.c.l.b16 %v2722
        %v2858 = vunpack.c.l.b16 %v2723
        %v2859 = vunpack.c.l.b16 %v2724
        %v2860 = vunpack.c.l.b16 %v2725
        %v2861 = vunpack.c.l.b16 %v2726
        %v2862 = vunpack.c.l.b16 %v2727
        %v2863 = vunpack.c.l.b16 %v2728
        %v2864 = vunpack.c.l.b16 %v2729
        %v2865 = vunpack.c.l.b16 %v2730
        %v2866 = vunpack.c.l.b16 %v2731
        %v2867 = vunpack.c.l.b16 %v2732
        %v2868 = vunpack.c.l.b16 %v2733
        %v2869 = vunpack.c.l.b16 %v2734
        %v2870 = vunpack.c.l.b16 %v2735
        %v2871 = vunpack.c.l.b16 %v2736
        %v2872 = vunpack.c.l.b16 %v2737
        %v2873 = vunpack.c.l.b16 %v2738
        %v2874 = vunpack.c.l.b16 %v2739
        %v2875 = vunpack.c.l.b16 %v2740
        %v2876 = vunpack.c.l.b16 %v2741
        %v2877 = vunpack.c.l.b16 %v2742
        %v2878 = vunpack.c.l.b16 %v2743
        %v2879 = vunpack.c.l.b16 %v2744
        %v2880 = vunpack.c.l.b16 %v2745
        %v2881 = vpack.c.b16 %v2818, %v2817
        %v2882 = vpack.c.b16 %v2820, %v2819
        %v2883 = vpack.c.b16 %v2822, %v2821
        %v2884 = vpack.c.b16 %v2824, %v2823
        %v2885 = vpack.c.b16 %v2826, %v2825
        %v2886 = vpack.c.b16 %v2828, %v2827
        %v2887 = vpack.c.b16 %v2830, %v2829
        %v2888 = vpack.c.b16 %v2832, %v2831
        %v2889 = vpack.c.b16 %v2834, %v2833
        %v2890 = vpack.c.b16 %v2836, %v2835
        %v2891 = vpack.c.b16 %v2838, %v2837
        %v2892 = vpack.c.b16 %v2840, %v2839
        %v2893 = vpack.c.b16 %v2842, %v2841
        %v2894 = vpack.c.b16 %v2844, %v2843
        %v2895 = vpack.c.b16 %v2846, %v2845
        %v2896 = vpack.c.b16 %v2848, %v2847
        %v2897 = vpack.c.b16 %v2850, %v2849
        %v2898 = vpack.c.b16 %v2852, %v2851
        %v2899 = vpack.c.b16 %v2854, %v2853
        %v2900 = vpack.c.b16 %v2856, %v2855
        %v2901 = vpack.c.b16 %v2858, %v2857
        %v2902 = vpack.c.b16 %v2860, %v2859
        %v2903 = vpack.c.b16 %v2862, %v2861
        %v2904 = vpack.c.b16 %v2864, %v2863
        %v2905 = vpack.c.b16 %v2866, %v2865
        %v2906 = vpack.c.b16 %v2868, %v2867
        %v2907 = vpack.c.b16 %v2870, %v2869
        %v2908 = vpack.c.b16 %v2872, %v2871
        %v2909 = vpack.c.b16 %v2874, %v2873
        %v2910 = vpack.c.b16 %v2876, %v2875
        %v2911 = vpack.c.b16 %v2878, %v2877
        %v2912 = vpack.c.b16 %v2880, %v2879
        %2945 = vmatprep.subr.bf16.mxu0 0
        %2946 = vmatpush1.bf16.msra.mxu0 %v2888
        %2947 = vmatprep.subr.bf16.mxu0 0
        %2948 = vmatpush1.bf16.msra.mxu0 %v2887
        %2949 = vmatprep.subr.bf16.mxu0 0
        %2950 = vmatpush1.bf16.msra.mxu0 %v2886
        %2951 = vmatprep.subr.bf16.mxu0 0
        %2952 = vmatpush1.bf16.msra.mxu0 %v2885
        %2953 = vmatprep.subr.bf16.mxu0 0
        %2954 = vmatpush1.bf16.msra.mxu0 %v2884
        %2955 = vmatprep.subr.bf16.mxu0 0
        %2956 = vmatpush1.bf16.msra.mxu0 %v2883
        %2957 = vmatprep.subr.bf16.mxu0 0
        %2958 = vmatpush1.bf16.msra.mxu0 %v2882
        %2959 = vmatprep.subr.bf16.mxu0 0
        %2960 = vmatpush1.bf16.msra.mxu0 %v2881
        %2961 = vmatprep.subr.bf16.mxu0 0
        %2962 = vmatpush2.bf16.msra.mxu0 %v2896
        %2963 = vmatprep.subr.bf16.mxu0 0
        %2964 = vmatpush2.bf16.msra.mxu0 %v2895
        %2965 = vmatprep.subr.bf16.mxu0 0
        %2966 = vmatpush2.bf16.msra.mxu0 %v2894
        %2967 = vmatprep.subr.bf16.mxu0 0
        %2968 = vmatpush2.bf16.msra.mxu0 %v2893
        %2969 = vmatprep.subr.bf16.mxu0 0
        %2970 = vmatpush2.bf16.msra.mxu0 %v2892
        %2971 = vmatprep.subr.bf16.mxu0 0
        %2972 = vmatpush2.bf16.msra.mxu0 %v2891
        %2973 = vmatprep.subr.bf16.mxu0 0
        %2974 = vmatpush2.bf16.msra.mxu0 %v2890
        %2975 = vmatprep.subr.bf16.mxu0 0
        %2976 = vmatpush2.bf16.msra.mxu0 %v2889
        %2977 = vmatprep.mubr.bf16.mxu0 %v2675
        %2978 = vmatmul.mubr.bf16.gmra.mxu0 %v2674
        %v2979 = vpop.f32.mrf.mxu0
        %v2980 = vadd.f32 %v2751, %v2979
        %v2981 = vpop.f32.mrf.mxu0
        %v2982 = vpop.f32.mrf.mxu0
        %v2983 = vadd.f32 %v2751, %v2982
        %v2984 = vpop.f32.mrf.mxu0
        %2985 = vmatprep.mubr.bf16.mxu0 %v2679
        %2986 = vmatmul.mubr.bf16.gmra.mxu0 %v2678
        %v2987 = vpop.f32.mrf.mxu0
        %v2988 = vadd.f32 %v2751, %v2987
        %v2989 = vpop.f32.mrf.mxu0
        %v2990 = vpop.f32.mrf.mxu0
        %v2991 = vadd.f32 %v2751, %v2990
        %v2992 = vpop.f32.mrf.mxu0
        %2993 = vdwg.mxu0
        %2994 = vmatprep.subr.bf16.mxu0 0
        %2995 = vmatpush1.bf16.msra.mxu0 %v2904
        %2996 = vmatprep.subr.bf16.mxu0 0
        %2997 = vmatpush1.bf16.msra.mxu0 %v2903
        %2998 = vmatprep.subr.bf16.mxu0 0
        %2999 = vmatpush1.bf16.msra.mxu0 %v2902
        %3000 = vmatprep.subr.bf16.mxu0 0
        %3001 = vmatpush1.bf16.msra.mxu0 %v2901
        %3002 = vmatprep.subr.bf16.mxu0 0
        %3003 = vmatpush1.bf16.msra.mxu0 %v2900
        %3004 = vmatprep.subr.bf16.mxu0 0
        %3005 = vmatpush1.bf16.msra.mxu0 %v2899
        %3006 = vmatprep.subr.bf16.mxu0 0
        %3007 = vmatpush1.bf16.msra.mxu0 %v2898
        %3008 = vmatprep.subr.bf16.mxu0 0
        %3009 = vmatpush1.bf16.msra.mxu0 %v2897
        %3010 = vmatprep.subr.bf16.mxu0 0
        %3011 = vmatpush2.bf16.msra.mxu0 %v2912
        %3012 = vmatprep.subr.bf16.mxu0 0
        %3013 = vmatpush2.bf16.msra.mxu0 %v2911
        %3014 = vmatprep.subr.bf16.mxu0 0
        %3015 = vmatpush2.bf16.msra.mxu0 %v2910
        %3016 = vmatprep.subr.bf16.mxu0 0
        %3017 = vmatpush2.bf16.msra.mxu0 %v2909
        %3018 = vmatprep.subr.bf16.mxu0 0
        %3019 = vmatpush2.bf16.msra.mxu0 %v2908
        %3020 = vmatprep.subr.bf16.mxu0 0
        %3021 = vmatpush2.bf16.msra.mxu0 %v2907
        %3022 = vmatprep.subr.bf16.mxu0 0
        %3023 = vmatpush2.bf16.msra.mxu0 %v2906
        %3024 = vmatprep.subr.bf16.mxu0 0
        %3025 = vmatpush2.bf16.msra.mxu0 %v2905
        %3026 = vmatprep.mubr.bf16.mxu0 %v2677
        %3027 = vmatmul.mubr.bf16.gmra.mxu0 %v2676
        %v3028 = vpop.f32.mrf.mxu0
        %v3029 = vadd.f32 %v2980, %v3028
        %v3030 = vpop.f32.mrf.mxu0
        %v3031 = vpop.f32.mrf.mxu0
        %v3032 = vadd.f32 %v2983, %v3031
        %v3033 = vpop.f32.mrf.mxu0
        %3034 = vmatprep.mubr.bf16.mxu0 %v2681
        %3035 = vmatmul.mubr.bf16.gmra.mxu0 %v2680
        %v3036 = vpop.f32.mrf.mxu0
        %v3037 = vadd.f32 %v2988, %v3036
        %v3038 = vpop.f32.mrf.mxu0
        %v3039 = vpop.f32.mrf.mxu0
        %v3040 = vadd.f32 %v2991, %v3039
        %v3041 = vpop.f32.mrf.mxu0
        %3042 = vdwg.mxu0
        %v3043 = vadd.f32 %v2138, %v3029
        %v3044 = vadd.f32 %v2139, %v3032
        %v3045 = vadd.f32 %v2140, %v3037
        %v3046 = vadd.f32 %v2141, %v3040
        %3047 = vst [vmem:[#allocation2] sm:$0xff] %v3043
        %3048 = vst [vmem:[#allocation2 + $0x8] sm:$0xff] %v3044
        %3049 = vst [vmem:[#allocation2 + $0x10] sm:$0xff] %v3045
        %3050 = vst [vmem:[#allocation2 + $0x18] sm:$0xff] %v3046
        // Predicated region
        $region77: #{transformer_encoder.1} parent=71 // pred_check
          %p3051 = pneg %p393
        $region78: #{transformer_encoder.1} parent=71 // pred_check_branch
          %3053 = sbr.rel (%p3051) target = $region80
        $region79: #{transformer_encoder.1} parent=71 // pred_region
          %s3054 = smul.u32 4, %s29
          %s3056 = ssub.s32 512, 512
          %3057 = vsyncadd [#allocation3], %s3056
          %s3058 = smul.addr %s3054, 128
          %s3059 = scalar_lea.hbm %s13, %s3058
          %s3060 = sshll.u32 [#allocation2], 4
          %s3061 = int_to_ptr.vmem [resolvable:$true] %s3060
          %3066 = dma.vmem_to_hbm [thread:$0]  %s3061, 512, %s3059, [#allocation3], 128, 128, 8
        $region80: #{transformer_encoder.1} parent=71 // pred_fallthru
          _
        // Predicated region
        $region81: #{transformer_encoder.1} parent=71 // pred_check
          %p3067 = pneg %p393
        $region82: #{transformer_encoder.1} parent=71 // pred_check_branch
          %3069 = sbr.rel (%p3067) target = $region84
        $region83: #{transformer_encoder.1} parent=71 // pred_region
          %3070 = dma.done [#allocation3], 512
        $region84: #{transformer_encoder.1} parent=71 // pred_fallthru
          _
      $region72: #{transformer_encoder.1} parent=5 // pred_fallthru
        _
      %p3071 = scmp.le.s32.totalorder 2, %s20
      // Predicated region
      $region85: #{transformer_encoder.1} parent=5 // pred_check
        %p3072 = pneg %p3071
      $region86: #{transformer_encoder.1} parent=5 // pred_check_branch
        %3074 = sbr.rel (%p3072) target = $region88
      $region87: #{transformer_encoder.1} parent=5 // pred_region
        %s3075 = ssub.s32 %s20, 2
      $region88: #{transformer_encoder.1} parent=5 // pred_fallthru
        _
    $region6: #{transformer_encoder.1} parent=1 // loop_footer
      %s24 = sadd.s32 1, %s20
    $region7: #{transformer_encoder.1} parent=1 // loop_footer_branch
      %19 = sbr.rel target = $region3
    $region8: #{transformer_encoder.1} parent=1 // loop_exit
      _
    %3076 = vsyncpa [#allocation3], 1
    %s3077 = scalar_lea.sflag [#allocation3], 1
    %3078 = vsyncpa %s3077, 1

</llo_original>
